<compile_context>
chip_gen: v6e
topology: v6e:2x2x1
jax: 0.10.0
libtpu: 0.0.40
codegen_flags: <defaults>
</compile_context>

<pallas_src>
import functools

import jax
import jax.numpy as jnp
from jax.experimental import pallas as pl
from jax.experimental.pallas import tpu as pltpu


# --------------------------------------------------------------------------- utils
def _round_up(x, m):
    return ((x + m - 1) // m) * m


def _pad2(a, rows, cols, dtype):
    out = jnp.pad(a, ((0, rows - a.shape[0]), (0, cols - a.shape[1])))
    return out.astype(dtype)


def _vmem_limit_bytes():
    """~75% of physical VMEM (96 MiB on v5e/v6e, 48 MiB on v7x); safe fallback."""
    try:
        cap = pltpu.get_tpu_info().vmem_capacity_bytes
        return min(int(cap * 3 // 4), 100 * 1024 * 1024)
    except Exception:
        return 48 * 1024 * 1024


_SINGLE_BUF_OK = None


def _single_buffering_ok():
    """Probe once whether pipeline_mode=pl.Buffered(1) is supported on this JAX."""
    global _SINGLE_BUF_OK
    if _SINGLE_BUF_OK is None:
        try:
            spec = pl.BlockSpec((8, 128), lambda i: (0, 0),
                                pipeline_mode=pl.Buffered(1))

            def _probe(x_ref, o_ref):
                o_ref[...] = x_ref[...] * 2.0

            out = pl.pallas_call(
                _probe,
                out_shape=jax.ShapeDtypeStruct((16, 128), jnp.float32),
                grid=(2,),
                in_specs=[spec],
                out_specs=pl.BlockSpec((8, 128), lambda i: (i, 0)),
            )(jnp.ones((8, 128), jnp.float32))
            jax.block_until_ready(out)
            _SINGLE_BUF_OK = True
        except Exception:
            _SINGLE_BUF_OK = False
    return _SINGLE_BUF_OK


def _resident_spec(block_shape, index_map):
    """Constant-index_map operand: single-buffer it (no point double-buffering a block
    that never changes across the grid -> halves the resident VMEM footprint)."""
    if _single_buffering_ok():
        return pl.BlockSpec(block_shape, index_map, pipeline_mode=pl.Buffered(1))
    return pl.BlockSpec(block_shape, index_map)


# --------------------------------------------------------------------------- kernels
def _gin_layer_kernel(a_ref, h_ref, w1_ref, b1_ref, w2_ref, b2_ref, *rest,
                      inter_relu, fuse_proj, compute_dtype):
    """One GINConv layer on a TM-row tile of destination nodes.

    a_ref : (TM, Np)  int8   tile of A_hat rows (cast in-kernel; exact small ints)
    h_ref : (Np, Cin) cdt    full previous-layer features (resident, single-buffered)
    w*/b* :                  MLP weights (cdt) / biases (f32), resident
    rest  : [wproj_ref] o_ref -- optional fused projection (reassociated W31), out tile
    """
    if fuse_proj:
        wproj_ref, o_ref = rest
    else:
        (o_ref,) = rest

    # int8 -> compute dtype; VPU cast is free filler under the HBM-bound A stream.
    a = a_ref[...].astype(jnp.float32).astype(compute_dtype)
    # sum aggregation over neighbors + self (A_hat = A + I, eps = 0)
    agg = jnp.dot(a, h_ref[...], preferred_element_type=jnp.float32)
    # MLP: Linear -> ReLU -> Linear (plain_last)
    t = jnp.dot(agg.astype(compute_dtype), w1_ref[...],
                preferred_element_type=jnp.float32) + b1_ref[...]
    t = jnp.maximum(t, 0.0)
    t = jnp.dot(t.astype(compute_dtype), w2_ref[...],
                preferred_element_type=jnp.float32) + b2_ref[...]
    if inter_relu:                       # BasicGNN inter-layer ReLU (dropout = identity)
        t = jnp.maximum(t, 0.0)
    if fuse_proj:                        # reassociated first linear of the next layer
        t = jnp.dot(t.astype(compute_dtype), wproj_ref[...],
                    preferred_element_type=jnp.float32)
    o_ref[...] = t.astype(o_ref.dtype)


def _gin_final_kernel(a_ref, h_ref, b31_ref, w32_ref, b32_ref, p_ref, o_ref, *,
                      compute_dtype):
    """Layer-3 aggregation (+b31, ReLU, W32, b32) fused with a partial global_add_pool.

    Each grid step writes its own (Gp, Op) partial pooled sum -> no sequential
    accumulator, grid axis stays 'parallel' (2-TC sharding on v7x).  The tiny
    pool-reduce + fc head run in XLA afterwards.
    """
    a = a_ref[...].astype(jnp.float32).astype(compute_dtype)
    agg = jnp.dot(a, h_ref[...], preferred_element_type=jnp.float32)
    t = jnp.maximum(agg + b31_ref[...], 0.0)
    h3 = jnp.dot(t.astype(compute_dtype), w32_ref[...],
                 preferred_element_type=jnp.float32) + b32_ref[...]
    o_ref[0] = jnp.dot(p_ref[...], h3.astype(compute_dtype),
                       preferred_element_type=jnp.float32)


def _gin_fused_kernel(a_ref, x_ref,
                      w11_ref, b11_ref, w12_ref, b12_ref,
                      w21_ref, b21_ref, w22_ref, b22_ref,
                      w31_ref, b31_ref, w32_ref, b32_ref,
                      p_ref, wfc_ref, bfc_ref, o_ref, *, compute_dtype):
    """Whole model in one call for small graphs: A resident in VMEM, read once;
    intermediate node features never touch HBM."""
    a = a_ref[...].astype(jnp.float32).astype(compute_dtype)

    def mlp(agg, w1, b1, w2, b2, inter_relu):
        t = jnp.dot(agg.astype(compute_dtype), w1[...],
                    preferred_element_type=jnp.float32) + b1[...]
        t = jnp.maximum(t, 0.0)
        t = jnp.dot(t.astype(compute_dtype), w2[...],
                    preferred_element_type=jnp.float32) + b2[...]
        return jnp.maximum(t, 0.0) if inter_relu else t

    h = jnp.dot(a, x_ref[...], preferred_element_type=jnp.float32)
    h = mlp(h, w11_ref, b11_ref, w12_ref, b12_ref, True)
    h = jnp.dot(a, h.astype(compute_dtype), preferred_element_type=jnp.float32)
    h = mlp(h, w21_ref, b21_ref, w22_ref, b22_ref, True)
    h = jnp.dot(a, h.astype(compute_dtype), preferred_element_type=jnp.float32)
    h = mlp(h, w31_ref, b31_ref, w32_ref, b32_ref, False)          # plain_last
    pooled = jnp.dot(p_ref[...].astype(jnp.float32), h,
                     preferred_element_type=jnp.float32)            # global_add_pool
    o_ref[...] = jnp.dot(pooled, wfc_ref[...],
                         preferred_element_type=jnp.float32) + bfc_ref[...]


# --------------------------------------------------------------------------- call builders
def _gin_layer_call(a, h, w1, b1, w2, b2, wproj, *, inter_relu, tm, vmem_limit, cdt):
    Np = a.shape[0]
    cin = h.shape[1]
    chid = w1.shape[1]
    cmid = w2.shape[1]
    cout = cmid if wproj is None else wproj.shape[1]

    in_specs = [
        pl.BlockSpec((tm, Np), lambda i: (i, 0)),           # int8 A tile (streamed, 2-buf)
        _resident_spec((Np, cin), lambda i: (0, 0)),         # full h (resident)
        _resident_spec((cin, chid), lambda i: (0, 0)),       # W1
        _resident_spec((1, chid), lambda i: (0, 0)),         # b1
        _resident_spec((chid, cmid), lambda i: (0, 0)),      # W2
        _resident_spec((1, cmid), lambda i: (0, 0)),         # b2
    ]
    args = [a, h, w1, b1, w2, b2]
    if wproj is not None:
        in_specs.append(_resident_spec((cmid, cout), lambda i: (0, 0)))
        args.append(wproj)

    kernel = functools.partial(_gin_layer_kernel, inter_relu=inter_relu,
                               fuse_proj=wproj is not None, compute_dtype=cdt)
    return pl.pallas_call(
        kernel,
        out_shape=jax.ShapeDtypeStruct((Np, cout), cdt),
        grid=(Np // tm,),
        in_specs=in_specs,
        out_specs=pl.BlockSpec((tm, cout), lambda i: (i, 0)),
        compiler_params=pltpu.CompilerParams(
            dimension_semantics=("parallel",),
            vmem_limit_bytes=vmem_limit),
    )(*args)


def _gin_final_call(a, hproj, b31, w32, b32, pool, *, tm, vmem_limit, cdt):
    Np = a.shape[0]
    Op = w32.shape[0]
    Gp = pool.shape[0]
    nt = Np // tm

    kernel = functools.partial(_gin_final_kernel, compute_dtype=cdt)
    return pl.pallas_call(
        kernel,
        out_shape=jax.ShapeDtypeStruct((nt, Gp, Op), jnp.float32),
        grid=(nt,),
        in_specs=[
            pl.BlockSpec((tm, Np), lambda i: (i, 0)),        # int8 A tile
            _resident_spec((Np, Op), lambda i: (0, 0)),       # relu(h2) @ W31 (resident)
            _resident_spec((1, Op), lambda i: (0, 0)),        # b31
            _resident_spec((Op, Op), lambda i: (0, 0)),       # W32
            _resident_spec((1, Op), lambda i: (0, 0)),        # b32
            pl.BlockSpec((Gp, tm), lambda i: (0, i)),         # pool-matrix tile (streamed)
        ],
        out_specs=pl.BlockSpec((1, Gp, Op), lambda i: (i, 0, 0)),   # per-tile partial pool
        compiler_params=pltpu.CompilerParams(
            dimension_semantics=("parallel",),
            vmem_limit_bytes=vmem_limit),
    )(a, hproj, b31, w32, b32, pool)


def _gin_fused_call(a, x, weights, pool, wfcp, bfcp, *, vmem_limit, cdt):
    Gp = pool.shape[0]
    Fp = wfcp.shape[1]
    kernel = functools.partial(_gin_fused_kernel, compute_dtype=cdt)
    return pl.pallas_call(
        kernel,
        out_shape=jax.ShapeDtypeStruct((Gp, Fp), jnp.float32),
        compiler_params=pltpu.CompilerParams(vmem_limit_bytes=vmem_limit),
    )(a, x, *weights, pool, wfcp, bfcp)


# --------------------------------------------------------------------------- model wrapper
# A (int8) plus all intermediates fit comfortably resident in VMEM below this node
# count on every generation (including v7x's 64 MiB); larger graphs take the tiled path.
_FUSED_MAX_NODES = 1024


def prepare_gin_inputs(a_hat, x, params, pool_mat, *, tm=256,
                       compute_dtype=jnp.bfloat16):
    """One-time (per graph batch) padding / quantization, hoisted off the steady-state
    forward path.  A_hat entries must be small non-negative integers (<= 127) for the
    int8 storage to be exact -- true for simple graphs with self loops; multigraphs
    with larger edge multiplicities would need a wider dtype.

    tm: row tile for the tiled path. 256 is MXU-aligned on v6e/v7x; use 128 on v5e.
    compute_dtype: bf16 (default, f32 MXU accumulation) or f32 for exact validation.
    """
    assert tm % 128 == 0
    (w11, b11, w12, b12, w21, b21, w22, b22,
     w31, b31, w32, b32, wfc, bfc) = params

    N, Cin = x.shape
    H = w11.shape[1]
    O = w31.shape[1]
    G = pool_mat.shape[0]

    Np = _round_up(N, tm)          # node axis: multiple of the row tile (and of 128)
    Cp = _round_up(Cin, 128)       # feature axes: multiples of 128 lanes
    Hp = _round_up(H, 128)
    Op = _round_up(O, 128)
    Gp = _round_up(G, 16)          # graph axis: full sublane tile even for bf16 pool
    Fp = 128                       # lane-padded fc output width (dense vst)

    cdt, f32 = compute_dtype, jnp.float32

    a_i8 = _pad2(jnp.round(a_hat), Np, Np, jnp.int8)     # exact small integers
    x_p = _pad2(x, Np, Cp, cdt)
    pool_p = _pad2(pool_mat, Gp, Np, cdt)                # 0/1 entries: exact

    weights = (
        _pad2(w11, Cp, Hp, cdt), _pad2(b11, 1, Hp, f32),
        _pad2(w12, Hp, Hp, cdt), _pad2(b12, 1, Hp, f32),
        _pad2(w21, Hp, Hp, cdt), _pad2(b21, 1, Hp, f32),
        _pad2(w22, Hp, Hp, cdt), _pad2(b22, 1, Hp, f32),
        _pad2(w31, Hp, Op, cdt), _pad2(b31, 1, Op, f32),
        _pad2(w32, Op, Op, cdt), _pad2(b32, 1, Op, f32),
    )
    return dict(
        a=a_i8, x=x_p, weights=weights, pool=pool_p,
        wfc=wfc.astype(f32), bfc=bfc.astype(f32),           # fc head for the tiled path
        wfcp=_pad2(wfc, Op, Fp, f32), bfcp=_pad2(bfc, 1, Fp, f32),   # fused-path fc
        n=N, g=G, o=O, tm=tm, n_pad=Np,
    )


def gin_model_forward(prep, *, force_tiled=False):
    """Steady-state forward on pre-padded inputs from prepare_gin_inputs()."""
    vmem_limit = _vmem_limit_bytes()
    Np, G, O, tm = prep["n_pad"], prep["g"], prep["o"], prep["tm"]
    cdt = prep["x"].dtype
    (w11, b11, w12, b12, w21, b21, w22, b22,
     w31, b31, w32, b32) = prep["weights"]

    if not force_tiled and Np <= _FUSED_MAX_NODES:
        out = _gin_fused_call(prep["a"], prep["x"], prep["weights"], prep["pool"],
                              prep["wfcp"], prep["bfcp"],
                              vmem_limit=vmem_limit, cdt=cdt)
        return out[:G, :1]

    # TODO(synk): for very large N (especially v7x's 64 MiB VMEM) add a second
    # "arbitrary" grid axis K-tiling the Np contraction so the full h matrix need not
    # stay resident in VMEM.

    # layer 1 (in -> hidden), BasicGNN inter-layer ReLU fused into the epilogue
    h1 = _gin_layer_call(prep["a"], prep["x"], w11, b11, w12, b12, None,
                         inter_relu=True, tm=tm, vmem_limit=vmem_limit, cdt=cdt)
    # layer 2 (hidden -> hidden) + fused reassociated W31 projection (hidden -> out)
    h2p = _gin_layer_call(prep["a"], h1, w21, b21, w22, b22, w31,
                          inter_relu=True, tm=tm, vmem_limit=vmem_limit, cdt=cdt)
    # layer 3 aggregation (+b31, ReLU, W32, b32) fused with partial global_add_pool
    partial = _gin_final_call(prep["a"], h2p, b31, w32, b32, prep["pool"],
                              tm=tm, vmem_limit=vmem_limit, cdt=cdt)
    pooled = partial.sum(axis=0)                        # (Gp, Op)  tiny XLA reduce
    out = pooled[:G, :O] @ prep["wfc"] + prep["bfc"]    # tiny fc head in XLA
    return out


def gin_model_forward_from_raw(a_hat, x, params, pool_mat, *, tm=256,
                               compute_dtype=jnp.bfloat16):
    """Convenience one-shot wrapper (padding not hoisted; prefer prepare + forward)."""
    prep = prepare_gin_inputs(a_hat, x, params, pool_mat, tm=tm,
                              compute_dtype=compute_dtype)
    return gin_model_forward(prep)


# --------------------------------------------------------------------------- reference / params
def reference_forward(a_hat, x, params, pool_mat):
    (w11, b11, w12, b12, w21, b21, w22, b22,
     w31, b31, w32, b32, wfc, bfc) = params
    h = a_hat @ x
    h = jnp.maximum(h @ w11 + b11, 0.0)
    h = jnp.maximum(h @ w12 + b12, 0.0)
    h = a_hat @ h
    h = jnp.maximum(h @ w21 + b21, 0.0)
    h = jnp.maximum(h @ w22 + b22, 0.0)
    h = a_hat @ h
    h = jnp.maximum(h @ w31 + b31, 0.0)
    h = h @ w32 + b32
    pooled = pool_mat @ h
    return pooled @ wfc + bfc


def make_params(key, in_channels, hidden_channels, out_channels):
    """Deterministic synthetic parameters (PyTorch-default-like uniform init)."""
    def lin(key, fan_in, fan_out):
        k1, k2 = jax.random.split(key)
        bound = 1.0 / jnp.sqrt(fan_in)
        w = jax.random.uniform(k1, (fan_in, fan_out), jnp.float32, -bound, bound)
        b = jax.random.uniform(k2, (1, fan_out), jnp.float32, -bound, bound)
        return w, b

    keys = jax.random.split(key, 7)
    w11, b11 = lin(keys[0], in_channels, hidden_channels)
    w12, b12 = lin(keys[1], hidden_channels, hidden_channels)
    w21, b21 = lin(keys[2], hidden_channels, hidden_channels)
    w22, b22 = lin(keys[3], hidden_channels, hidden_channels)
    w31, b31 = lin(keys[4], hidden_channels, out_channels)
    w32, b32 = lin(keys[5], out_channels, out_channels)
    wfc, bfc = lin(keys[6], out_channels, 1)
    return (w11, b11, w12, b12, w21, b21, w22, b22,
            w31, b31, w32, b32, wfc, bfc)


# --------------------------------------------------------------------------- demo
if __name__ == "__main__":
    def build_batch(key, n_graphs, nodes_per_graph, edges_per_graph, in_channels):
        # Glue (plain JAX): densify the sparse edge_index as A_hat = A + I and the
        # pooling as a one-hot graph-membership matrix.
        n = n_graphs * nodes_per_graph
        e = n_graphs * edges_per_graph
        k_x, k_s, k_d = jax.random.split(key, 3)
        x = jax.random.normal(k_x, (n, in_channels), jnp.float32)
        src_l = jax.random.randint(k_s, (e,), 0, nodes_per_graph)
        dst_l = jax.random.randint(k_d, (e,), 0, nodes_per_graph)
        g_of_e = jnp.repeat(jnp.arange(n_graphs, dtype=jnp.int32), edges_per_graph)
        src = src_l + g_of_e * nodes_per_graph
        dst = dst_l + g_of_e * nodes_per_graph
        A = jnp.zeros((n, n), jnp.float32).at[dst, src].add(1.0)
        a_hat = A + jnp.eye(n, dtype=jnp.float32)                         # eps = 0
        batch = jnp.repeat(jnp.arange(n_graphs, dtype=jnp.int32), nodes_per_graph)
        pool = (batch[None, :] == jnp.arange(n_graphs)[:, None]).astype(jnp.float32)
        return a_hat, x, pool

    def check(out, ref, tol):
        assert out.shape == ref.shape
        assert jnp.all(jnp.isfinite(out))
        scale = jnp.maximum(1.0, jnp.max(jnp.abs(ref)))
        err = jnp.max(jnp.abs(out - ref))
        assert err <= tol * scale, (float(err), float(scale))

    in_channels, hidden_channels, out_channels = 8, 32, 16
    params = make_params(jax.random.PRNGKey(1), in_channels, hidden_channels,
                         out_channels)

    # ---- Case A: tiny batch (2 graphs x 8 nodes) -> fused single-call path.
    a_hat, x, pool = build_batch(jax.random.PRNGKey(0), 2, 8, 20, in_channels)
    ref = reference_forward(a_hat, x, params, pool)

    # exact (f32 compute) validation of the fused path
    prep = prepare_gin_inputs(a_hat, x, params, pool, compute_dtype=jnp.float32)
    out = jax.block_until_ready(gin_model_forward(prep))
    check(out, ref, 1e-3)

    # bf16 fast path
    prep = prepare_gin_inputs(a_hat, x, params, pool)
    out = jax.block_until_ready(gin_model_forward(prep))
    check(out, ref, 1e-1)

    # ---- Case B: 3 graphs x 100 nodes -> forced row-tiled multi-step-grid path.
    a_hat, x, pool = build_batch(jax.random.PRNGKey(2), 3, 100, 300, in_channels)
    ref = reference_forward(a_hat, x, params, pool)

    # exact (f32 compute) validation of the tiled path (tm=128 -> 3 grid steps)
    prep = prepare_gin_inputs(a_hat, x, params, pool, tm=128,
                              compute_dtype=jnp.float32)
    out = jax.block_until_ready(gin_model_forward(prep, force_tiled=True))
    check(out, ref, 1e-3)

    # bf16 fast path
    prep = prepare_gin_inputs(a_hat, x, params, pool, tm=128)
    out = jax.block_until_ready(gin_model_forward(prep, force_tiled=True))
    check(out, ref, 1e-1)

    print("KERNEL_OK")
</pallas_src>

<mosaic_0001>
module attributes {stable_mosaic.version = 11 : i64} {
  func.func @_gin_fused_kernel(%arg0: memref<256x256xi8, #tpu.memory_space<vmem>>, %arg1: memref<256x128xf32, #tpu.memory_space<vmem>>, %arg2: memref<128x128xf32, #tpu.memory_space<vmem>>, %arg3: memref<1x128xf32, #tpu.memory_space<vmem>>, %arg4: memref<128x128xf32, #tpu.memory_space<vmem>>, %arg5: memref<1x128xf32, #tpu.memory_space<vmem>>, %arg6: memref<128x128xf32, #tpu.memory_space<vmem>>, %arg7: memref<1x128xf32, #tpu.memory_space<vmem>>, %arg8: memref<128x128xf32, #tpu.memory_space<vmem>>, %arg9: memref<1x128xf32, #tpu.memory_space<vmem>>, %arg10: memref<128x128xf32, #tpu.memory_space<vmem>>, %arg11: memref<1x128xf32, #tpu.memory_space<vmem>>, %arg12: memref<128x128xf32, #tpu.memory_space<vmem>>, %arg13: memref<1x128xf32, #tpu.memory_space<vmem>>, %arg14: memref<16x256xf32, #tpu.memory_space<vmem>>, %arg15: memref<128x128xf32, #tpu.memory_space<vmem>>, %arg16: memref<1x128xf32, #tpu.memory_space<vmem>>, %arg17: memref<16x128xf32, #tpu.memory_space<vmem>>) attributes {dimension_semantics = [], scalar_prefetch = 0 : i64, scratch_operands = 0 : i64, tpu.core_type = #tpu.core_type<tc>} {
    %c0 = arith.constant 0 : index
    %c0_0 = arith.constant 0 : index
    %0 = vector.load %arg0[%c0, %c0_0] : memref<256x256xi8, #tpu.memory_space<vmem>>, vector<256x256xi8>
    %1 = arith.sitofp %0 : vector<256x256xi8> to vector<256x256xf32>
    %c0_1 = arith.constant 0 : index
    %c0_2 = arith.constant 0 : index
    %2 = vector.load %arg1[%c0_1, %c0_2] : memref<256x128xf32, #tpu.memory_space<vmem>>, vector<256x128xf32>
    %cst = arith.constant dense<0.000000e+00> : vector<256x128xf32>
    %3 = tpu.matmul %1, %2, %cst {dimension_numbers = #tpu.dot_dimension_numbers<[1], [0], [0], [1], [0, 0, 1, 1], [], []>} : vector<256x256xf32>, vector<256x128xf32>, vector<256x128xf32> -> vector<256x128xf32>
    %c0_3 = arith.constant 0 : index
    %c0_4 = arith.constant 0 : index
    %4 = vector.load %arg2[%c0_3, %c0_4] : memref<128x128xf32, #tpu.memory_space<vmem>>, vector<128x128xf32>
    %cst_5 = arith.constant dense<0.000000e+00> : vector<256x128xf32>
    %5 = tpu.matmul %3, %4, %cst_5 {dimension_numbers = #tpu.dot_dimension_numbers<[1], [0], [0], [1], [0, 0, 1, 1], [], []>} : vector<256x128xf32>, vector<128x128xf32>, vector<256x128xf32> -> vector<256x128xf32>
    %c0_6 = arith.constant 0 : index
    %c0_7 = arith.constant 0 : index
    %6 = vector.load %arg3[%c0_6, %c0_7] : memref<1x128xf32, #tpu.memory_space<vmem>>, vector<1x128xf32>
    %7 = vector.broadcast %6 : vector<1x128xf32> to vector<256x128xf32>
    %8 = arith.addf %5, %7 : vector<256x128xf32>
    %cst_8 = arith.constant 0.000000e+00 : f32
    %9 = vector.broadcast %cst_8 : f32 to vector<256x128xf32>
    %10 = arith.maximumf %8, %9 : vector<256x128xf32>
    %c0_9 = arith.constant 0 : index
    %c0_10 = arith.constant 0 : index
    %11 = vector.load %arg4[%c0_9, %c0_10] : memref<128x128xf32, #tpu.memory_space<vmem>>, vector<128x128xf32>
    %cst_11 = arith.constant dense<0.000000e+00> : vector<256x128xf32>
    %12 = tpu.matmul %10, %11, %cst_11 {dimension_numbers = #tpu.dot_dimension_numbers<[1], [0], [0], [1], [0, 0, 1, 1], [], []>} : vector<256x128xf32>, vector<128x128xf32>, vector<256x128xf32> -> vector<256x128xf32>
    %c0_12 = arith.constant 0 : index
    %c0_13 = arith.constant 0 : index
    %13 = vector.load %arg5[%c0_12, %c0_13] : memref<1x128xf32, #tpu.memory_space<vmem>>, vector<1x128xf32>
    %14 = vector.broadcast %13 : vector<1x128xf32> to vector<256x128xf32>
    %15 = arith.addf %12, %14 : vector<256x128xf32>
    %cst_14 = arith.constant 0.000000e+00 : f32
    %16 = vector.broadcast %cst_14 : f32 to vector<256x128xf32>
    %17 = arith.maximumf %15, %16 : vector<256x128xf32>
    %cst_15 = arith.constant dense<0.000000e+00> : vector<256x128xf32>
    %18 = tpu.matmul %1, %17, %cst_15 {dimension_numbers = #tpu.dot_dimension_numbers<[1], [0], [0], [1], [0, 0, 1, 1], [], []>} : vector<256x256xf32>, vector<256x128xf32>, vector<256x128xf32> -> vector<256x128xf32>
    %c0_16 = arith.constant 0 : index
    %c0_17 = arith.constant 0 : index
    %19 = vector.load %arg6[%c0_16, %c0_17] : memref<128x128xf32, #tpu.memory_space<vmem>>, vector<128x128xf32>
    %cst_18 = arith.constant dense<0.000000e+00> : vector<256x128xf32>
    %20 = tpu.matmul %18, %19, %cst_18 {dimension_numbers = #tpu.dot_dimension_numbers<[1], [0], [0], [1], [0, 0, 1, 1], [], []>} : vector<256x128xf32>, vector<128x128xf32>, vector<256x128xf32> -> vector<256x128xf32>
    %c0_19 = arith.constant 0 : index
    %c0_20 = arith.constant 0 : index
    %21 = vector.load %arg7[%c0_19, %c0_20] : memref<1x128xf32, #tpu.memory_space<vmem>>, vector<1x128xf32>
    %22 = vector.broadcast %21 : vector<1x128xf32> to vector<256x128xf32>
    %23 = arith.addf %20, %22 : vector<256x128xf32>
    %cst_21 = arith.constant 0.000000e+00 : f32
    %24 = vector.broadcast %cst_21 : f32 to vector<256x128xf32>
    %25 = arith.maximumf %23, %24 : vector<256x128xf32>
    %c0_22 = arith.constant 0 : index
    %c0_23 = arith.constant 0 : index
    %26 = vector.load %arg8[%c0_22, %c0_23] : memref<128x128xf32, #tpu.memory_space<vmem>>, vector<128x128xf32>
    %cst_24 = arith.constant dense<0.000000e+00> : vector<256x128xf32>
    %27 = tpu.matmul %25, %26, %cst_24 {dimension_numbers = #tpu.dot_dimension_numbers<[1], [0], [0], [1], [0, 0, 1, 1], [], []>} : vector<256x128xf32>, vector<128x128xf32>, vector<256x128xf32> -> vector<256x128xf32>
    %c0_25 = arith.constant 0 : index
    %c0_26 = arith.constant 0 : index
    %28 = vector.load %arg9[%c0_25, %c0_26] : memref<1x128xf32, #tpu.memory_space<vmem>>, vector<1x128xf32>
    %29 = vector.broadcast %28 : vector<1x128xf32> to vector<256x128xf32>
    %30 = arith.addf %27, %29 : vector<256x128xf32>
    %cst_27 = arith.constant 0.000000e+00 : f32
    %31 = vector.broadcast %cst_27 : f32 to vector<256x128xf32>
    %32 = arith.maximumf %30, %31 : vector<256x128xf32>
    %cst_28 = arith.constant dense<0.000000e+00> : vector<256x128xf32>
    %33 = tpu.matmul %1, %32, %cst_28 {dimension_numbers = #tpu.dot_dimension_numbers<[1], [0], [0], [1], [0, 0, 1, 1], [], []>} : vector<256x256xf32>, vector<256x128xf32>, vector<256x128xf32> -> vector<256x128xf32>
    %c0_29 = arith.constant 0 : index
    %c0_30 = arith.constant 0 : index
    %34 = vector.load %arg10[%c0_29, %c0_30] : memref<128x128xf32, #tpu.memory_space<vmem>>, vector<128x128xf32>
    %cst_31 = arith.constant dense<0.000000e+00> : vector<256x128xf32>
    %35 = tpu.matmul %33, %34, %cst_31 {dimension_numbers = #tpu.dot_dimension_numbers<[1], [0], [0], [1], [0, 0, 1, 1], [], []>} : vector<256x128xf32>, vector<128x128xf32>, vector<256x128xf32> -> vector<256x128xf32>
    %c0_32 = arith.constant 0 : index
    %c0_33 = arith.constant 0 : index
    %36 = vector.load %arg11[%c0_32, %c0_33] : memref<1x128xf32, #tpu.memory_space<vmem>>, vector<1x128xf32>
    %37 = vector.broadcast %36 : vector<1x128xf32> to vector<256x128xf32>
    %38 = arith.addf %35, %37 : vector<256x128xf32>
    %cst_34 = arith.constant 0.000000e+00 : f32
    %39 = vector.broadcast %cst_34 : f32 to vector<256x128xf32>
    %40 = arith.maximumf %38, %39 : vector<256x128xf32>
    %c0_35 = arith.constant 0 : index
    %c0_36 = arith.constant 0 : index
    %41 = vector.load %arg12[%c0_35, %c0_36] : memref<128x128xf32, #tpu.memory_space<vmem>>, vector<128x128xf32>
    %cst_37 = arith.constant dense<0.000000e+00> : vector<256x128xf32>
    %42 = tpu.matmul %40, %41, %cst_37 {dimension_numbers = #tpu.dot_dimension_numbers<[1], [0], [0], [1], [0, 0, 1, 1], [], []>} : vector<256x128xf32>, vector<128x128xf32>, vector<256x128xf32> -> vector<256x128xf32>
    %c0_38 = arith.constant 0 : index
    %c0_39 = arith.constant 0 : index
    %43 = vector.load %arg13[%c0_38, %c0_39] : memref<1x128xf32, #tpu.memory_space<vmem>>, vector<1x128xf32>
    %44 = vector.broadcast %43 : vector<1x128xf32> to vector<256x128xf32>
    %45 = arith.addf %42, %44 : vector<256x128xf32>
    %c0_40 = arith.constant 0 : index
    %c0_41 = arith.constant 0 : index
    %46 = vector.load %arg14[%c0_40, %c0_41] : memref<16x256xf32, #tpu.memory_space<vmem>>, vector<16x256xf32>
    %cst_42 = arith.constant dense<0.000000e+00> : vector<16x128xf32>
    %47 = tpu.matmul %46, %45, %cst_42 {dimension_numbers = #tpu.dot_dimension_numbers<[1], [0], [0], [1], [0, 0, 1, 1], [], []>} : vector<16x256xf32>, vector<256x128xf32>, vector<16x128xf32> -> vector<16x128xf32>
    %c0_43 = arith.constant 0 : index
    %c0_44 = arith.constant 0 : index
    %48 = vector.load %arg15[%c0_43, %c0_44] : memref<128x128xf32, #tpu.memory_space<vmem>>, vector<128x128xf32>
    %cst_45 = arith.constant dense<0.000000e+00> : vector<16x128xf32>
    %49 = tpu.matmul %47, %48, %cst_45 {dimension_numbers = #tpu.dot_dimension_numbers<[1], [0], [0], [1], [0, 0, 1, 1], [], []>} : vector<16x128xf32>, vector<128x128xf32>, vector<16x128xf32> -> vector<16x128xf32>
    %c0_46 = arith.constant 0 : index
    %c0_47 = arith.constant 0 : index
    %50 = vector.load %arg16[%c0_46, %c0_47] : memref<1x128xf32, #tpu.memory_space<vmem>>, vector<1x128xf32>
    %51 = vector.broadcast %50 : vector<1x128xf32> to vector<16x128xf32>
    %52 = arith.addf %49, %51 : vector<16x128xf32>
    %c0_48 = arith.constant 0 : index
    %c0_49 = arith.constant 0 : index
    %53 = vector.load %arg17[%c0_48, %c0_49] : memref<16x128xf32, #tpu.memory_space<vmem>>, vector<16x128xf32>
    tpu.vector_store %arg17[%c0_48, %c0_49], %52 {strides = array<i32>} : memref<16x128xf32, #tpu.memory_space<vmem>>, vector<16x128xf32>,
    return
  }
}

</mosaic_0001>

<llo_original>
// kernel: tpu_custom_call.1
$region0: #{tpu_custom_call.1}
  #allocation0 [shape = 'u32[]', space=smem, size = 0x4, offset = 0x4, fixed_abs, tag = 'smem constant byte address 0x4 - core index']
  #allocation1 [shape = 'u32[144,128]{1,0:T(1,128)}', space=vmem, size = 0x12000, scoped, tag = 'internal scratch']
  %s0 = inlined_call_operand.hbm [shape: s8[256,256], index: 0, kind: input, shape index: {}]
  %s1 = inlined_call_operand.hbm [shape: f32[256,128], index: 1, kind: input, shape index: {}]
  %s2 = inlined_call_operand.hbm [shape: f32[128,128], index: 2, kind: input, shape index: {}]
  %s3 = inlined_call_operand.vmem [shape: f32[1,128], index: 3, kind: input, shape index: {}]
  %s4 = inlined_call_operand.hbm [shape: f32[128,128], index: 4, kind: input, shape index: {}]
  %s5 = inlined_call_operand.vmem [shape: f32[1,128], index: 5, kind: input, shape index: {}]
  %s6 = inlined_call_operand.hbm [shape: f32[128,128], index: 6, kind: input, shape index: {}]
  %s7 = inlined_call_operand.vmem [shape: f32[1,128], index: 7, kind: input, shape index: {}]
  %s8 = inlined_call_operand.hbm [shape: f32[128,128], index: 8, kind: input, shape index: {}]
  %s9 = inlined_call_operand.vmem [shape: f32[1,128], index: 9, kind: input, shape index: {}]
  %s10 = inlined_call_operand.hbm [shape: f32[128,128], index: 10, kind: input, shape index: {}]
  %s11 = inlined_call_operand.vmem [shape: f32[1,128], index: 11, kind: input, shape index: {}]
  %s12 = inlined_call_operand.hbm [shape: f32[128,128], index: 12, kind: input, shape index: {}]
  %s13 = inlined_call_operand.vmem [shape: f32[1,128], index: 13, kind: input, shape index: {}]
  %s14 = inlined_call_operand.hbm [shape: f32[16,256], index: 14, kind: input, shape index: {}]
  %s15 = inlined_call_operand.hbm [shape: f32[128,128], index: 15, kind: input, shape index: {}]
  %s16 = inlined_call_operand.vmem [shape: f32[1,128], index: 16, kind: input, shape index: {}]
  %s17 = inlined_call_operand.hbm [shape: f32[16,128], index: 17, kind: output, shape index: {}]
  %s18 = sld [smem:[#allocation0]]
  $region118: #{tpu_custom_call.1} parent=0
    _
  %s20 = ssub.s32 1, %s18
  %s21 = scalar_select 0, %s20, %s18
  $region1: #{tpu_custom_call.1} parent=0
    #allocation2 [shape = 'u8[65536]{0}', space=vmem, size = 0x10000, scoped, tag = 'input window, operand 0, single buffered']
    #allocation3 [shape = 's32[1]{0}', space=sflag, size = 0x4, scoped, tag = 'scoped memory for tpu_custom_call.1']
    #allocation4 [shape = 's32[1]{0}', space=sflag, size = 0x4, scoped, tag = 'scoped memory for tpu_custom_call.1']
    #allocation5 [shape = 'u8[131072]{0}', space=vmem, size = 0x20000, scoped, tag = 'input window, operand 1, single buffered']
    #allocation6 [shape = 's32[1]{0}', space=sflag, size = 0x4, scoped, tag = 'scoped memory for tpu_custom_call.1']
    #allocation7 [shape = 'u8[65536]{0}', space=vmem, size = 0x10000, scoped, tag = 'input window, operand 2, single buffered']
    #allocation8 [shape = 'u8[65536]{0}', space=vmem, size = 0x10000, scoped, tag = 'input window, operand 4, single buffered']
    #allocation9 [shape = 's32[1]{0}', space=sflag, size = 0x4, scoped, tag = 'scoped memory for tpu_custom_call.1']
    #allocation10 [shape = 'u8[65536]{0}', space=vmem, size = 0x10000, scoped, tag = 'input window, operand 6, single buffered']
    #allocation11 [shape = 'u8[65536]{0}', space=vmem, size = 0x10000, scoped, tag = 'input window, operand 8, single buffered']
    #allocation12 [shape = 's32[1]{0}', space=sflag, size = 0x4, scoped, tag = 'scoped memory for tpu_custom_call.1']
    #allocation13 [shape = 'u8[65536]{0}', space=vmem, size = 0x10000, scoped, tag = 'input window, operand 10, single buffered']
    #allocation14 [shape = 'u8[65536]{0}', space=vmem, size = 0x10000, scoped, tag = 'input window, operand 12, single buffered']
    #allocation15 [shape = 's32[1]{0}', space=sflag, size = 0x4, scoped, tag = 'scoped memory for tpu_custom_call.1']
    #allocation16 [shape = 'u8[16384]{0}', space=vmem, size = 0x4000, scoped, tag = 'input window, operand 14, single buffered']
    #allocation17 [shape = 'u8[65536]{0}', space=vmem, size = 0x10000, scoped, tag = 'input window, operand 15, single buffered']
    #allocation18 [shape = 's32[1]{0}', space=sflag, size = 0x4, scoped, tag = 'scoped memory for tpu_custom_call.1']
    #allocation19 [shape = 'u8[8192]{0}', space=vmem, size = 0x2000, scoped, tag = 'output window, operand 0, single buffered']
    %22 = vsyncpa [#allocation3], 0
    %23 = vsyncpa [#allocation6], 0
    %24 = vsyncpa [#allocation9], 0
    %25 = vsyncpa [#allocation12], 0
    %26 = vsyncpa [#allocation15], 0
    %27 = vsyncpa [#allocation18], 0
    %28 = vsyncpa [#allocation4], 0
    // Predicated region
    $region2: #{tpu_custom_call.1} parent=1 // pred_check
      _
    $region3: #{tpu_custom_call.1} parent=1 // pred_check_branch
      %30 = sbr.rel (0) target = $region5
    $region4: #{tpu_custom_call.1} parent=1 // pred_region
      %s32 = ssub.s32 2048, 2048
      %33 = vsyncadd [#allocation3], %s32
      %s34 = sshll.u32 [#allocation2], 4
      %s35 = int_to_ptr.vmem [resolvable:$true] %s34
      %40 = dma.hbm_to_vmem [thread:$0]  %s0, 2048, %s35, [#allocation3], 256, 256, 16
    $region5: #{tpu_custom_call.1} parent=1 // pred_fallthru
      _
    // Predicated region
    $region6: #{tpu_custom_call.1} parent=1 // pred_check
      _
    $region7: #{tpu_custom_call.1} parent=1 // pred_check_branch
      %42 = sbr.rel (0) target = $region9
    $region8: #{tpu_custom_call.1} parent=1 // pred_region
      %s44 = ssub.s32 4096, 4096
      %45 = vsyncadd [#allocation6], %s44
      %s46 = sshll.u32 [#allocation5], 4
      %s47 = int_to_ptr.vmem [resolvable:$true] %s46
      %52 = dma.hbm_to_vmem [thread:$0]  %s1, 4096, %s47, [#allocation6], 128, 128, 8
    $region9: #{tpu_custom_call.1} parent=1 // pred_fallthru
      _
    // Predicated region
    $region10: #{tpu_custom_call.1} parent=1 // pred_check
      _
    $region11: #{tpu_custom_call.1} parent=1 // pred_check_branch
      %54 = sbr.rel (0) target = $region13
    $region12: #{tpu_custom_call.1} parent=1 // pred_region
      %s56 = ssub.s32 2048, 2048
      %57 = vsyncadd [#allocation6], %s56
      %s58 = sshll.u32 [#allocation7], 4
      %s59 = int_to_ptr.vmem [resolvable:$true] %s58
      %64 = dma.hbm_to_vmem [thread:$0]  %s2, 2048, %s59, [#allocation6], 128, 128, 8
    $region13: #{tpu_custom_call.1} parent=1 // pred_fallthru
      _
    // Predicated region
    $region14: #{tpu_custom_call.1} parent=1 // pred_check
      _
    $region15: #{tpu_custom_call.1} parent=1 // pred_check_branch
      %66 = sbr.rel (0) target = $region17
    $region16: #{tpu_custom_call.1} parent=1 // pred_region
      _
    $region17: #{tpu_custom_call.1} parent=1 // pred_fallthru
      _
    // Predicated region
    $region18: #{tpu_custom_call.1} parent=1 // pred_check
      _
    $region19: #{tpu_custom_call.1} parent=1 // pred_check_branch
      %68 = sbr.rel (0) target = $region21
    $region20: #{tpu_custom_call.1} parent=1 // pred_region
      %s70 = ssub.s32 2048, 2048
      %71 = vsyncadd [#allocation9], %s70
      %s72 = sshll.u32 [#allocation8], 4
      %s73 = int_to_ptr.vmem [resolvable:$true] %s72
      %78 = dma.hbm_to_vmem [thread:$0]  %s4, 2048, %s73, [#allocation9], 128, 128, 8
    $region21: #{tpu_custom_call.1} parent=1 // pred_fallthru
      _
    // Predicated region
    $region22: #{tpu_custom_call.1} parent=1 // pred_check
      _
    $region23: #{tpu_custom_call.1} parent=1 // pred_check_branch
      %80 = sbr.rel (0) target = $region25
    $region24: #{tpu_custom_call.1} parent=1 // pred_region
      _
    $region25: #{tpu_custom_call.1} parent=1 // pred_fallthru
      _
    // Predicated region
    $region26: #{tpu_custom_call.1} parent=1 // pred_check
      _
    $region27: #{tpu_custom_call.1} parent=1 // pred_check_branch
      %82 = sbr.rel (0) target = $region29
    $region28: #{tpu_custom_call.1} parent=1 // pred_region
      %s84 = ssub.s32 2048, 2048
      %85 = vsyncadd [#allocation9], %s84
      %s86 = sshll.u32 [#allocation10], 4
      %s87 = int_to_ptr.vmem [resolvable:$true] %s86
      %92 = dma.hbm_to_vmem [thread:$0]  %s6, 2048, %s87, [#allocation9], 128, 128, 8
    $region29: #{tpu_custom_call.1} parent=1 // pred_fallthru
      _
    // Predicated region
    $region30: #{tpu_custom_call.1} parent=1 // pred_check
      _
    $region31: #{tpu_custom_call.1} parent=1 // pred_check_branch
      %94 = sbr.rel (0) target = $region33
    $region32: #{tpu_custom_call.1} parent=1 // pred_region
      _
    $region33: #{tpu_custom_call.1} parent=1 // pred_fallthru
      _
    // Predicated region
    $region34: #{tpu_custom_call.1} parent=1 // pred_check
      _
    $region35: #{tpu_custom_call.1} parent=1 // pred_check_branch
      %96 = sbr.rel (0) target = $region37
    $region36: #{tpu_custom_call.1} parent=1 // pred_region
      %s98 = ssub.s32 2048, 2048
      %99 = vsyncadd [#allocation12], %s98
      %s100 = sshll.u32 [#allocation11], 4
      %s101 = int_to_ptr.vmem [resolvable:$true] %s100
      %106 = dma.hbm_to_vmem [thread:$0]  %s8, 2048, %s101, [#allocation12], 128, 128, 8
    $region37: #{tpu_custom_call.1} parent=1 // pred_fallthru
      _
    // Predicated region
    $region38: #{tpu_custom_call.1} parent=1 // pred_check
      _
    $region39: #{tpu_custom_call.1} parent=1 // pred_check_branch
      %108 = sbr.rel (0) target = $region41
    $region40: #{tpu_custom_call.1} parent=1 // pred_region
      _
    $region41: #{tpu_custom_call.1} parent=1 // pred_fallthru
      _
    // Predicated region
    $region42: #{tpu_custom_call.1} parent=1 // pred_check
      _
    $region43: #{tpu_custom_call.1} parent=1 // pred_check_branch
      %110 = sbr.rel (0) target = $region45
    $region44: #{tpu_custom_call.1} parent=1 // pred_region
      %s112 = ssub.s32 2048, 2048
      %113 = vsyncadd [#allocation12], %s112
      %s114 = sshll.u32 [#allocation13], 4
      %s115 = int_to_ptr.vmem [resolvable:$true] %s114
      %120 = dma.hbm_to_vmem [thread:$0]  %s10, 2048, %s115, [#allocation12], 128, 128, 8
    $region45: #{tpu_custom_call.1} parent=1 // pred_fallthru
      _
    // Predicated region
    $region46: #{tpu_custom_call.1} parent=1 // pred_check
      _
    $region47: #{tpu_custom_call.1} parent=1 // pred_check_branch
      %122 = sbr.rel (0) target = $region49
    $region48: #{tpu_custom_call.1} parent=1 // pred_region
      _
    $region49: #{tpu_custom_call.1} parent=1 // pred_fallthru
      _
    // Predicated region
    $region50: #{tpu_custom_call.1} parent=1 // pred_check
      _
    $region51: #{tpu_custom_call.1} parent=1 // pred_check_branch
      %124 = sbr.rel (0) target = $region53
    $region52: #{tpu_custom_call.1} parent=1 // pred_region
      %s126 = ssub.s32 2048, 2048
      %127 = vsyncadd [#allocation15], %s126
      %s128 = sshll.u32 [#allocation14], 4
      %s129 = int_to_ptr.vmem [resolvable:$true] %s128
      %134 = dma.hbm_to_vmem [thread:$0]  %s12, 2048, %s129, [#allocation15], 128, 128, 8
    $region53: #{tpu_custom_call.1} parent=1 // pred_fallthru
      _
    // Predicated region
    $region54: #{tpu_custom_call.1} parent=1 // pred_check
      _
    $region55: #{tpu_custom_call.1} parent=1 // pred_check_branch
      %136 = sbr.rel (0) target = $region57
    $region56: #{tpu_custom_call.1} parent=1 // pred_region
      _
    $region57: #{tpu_custom_call.1} parent=1 // pred_fallthru
      _
    // Predicated region
    $region58: #{tpu_custom_call.1} parent=1 // pred_check
      _
    $region59: #{tpu_custom_call.1} parent=1 // pred_check_branch
      %138 = sbr.rel (0) target = $region61
    $region60: #{tpu_custom_call.1} parent=1 // pred_region
      %s140 = ssub.s32 512, 512
      %141 = vsyncadd [#allocation15], %s140
      %s142 = sshll.u32 [#allocation16], 4
      %s143 = int_to_ptr.vmem [resolvable:$true] %s142
      %148 = dma.hbm_to_vmem [thread:$0]  %s14, 512, %s143, [#allocation15], 256, 256, 16
    $region61: #{tpu_custom_call.1} parent=1 // pred_fallthru
      _
    // Predicated region
    $region62: #{tpu_custom_call.1} parent=1 // pred_check
      _
    $region63: #{tpu_custom_call.1} parent=1 // pred_check_branch
      %150 = sbr.rel (0) target = $region65
    $region64: #{tpu_custom_call.1} parent=1 // pred_region
      %s152 = ssub.s32 2048, 2048
      %153 = vsyncadd [#allocation18], %s152
      %s154 = sshll.u32 [#allocation17], 4
      %s155 = int_to_ptr.vmem [resolvable:$true] %s154
      %160 = dma.hbm_to_vmem [thread:$0]  %s15, 2048, %s155, [#allocation18], 128, 128, 8
    $region65: #{tpu_custom_call.1} parent=1 // pred_fallthru
      _
    // Predicated region
    $region66: #{tpu_custom_call.1} parent=1 // pred_check
      _
    $region67: #{tpu_custom_call.1} parent=1 // pred_check_branch
      %162 = sbr.rel (0) target = $region69
    $region68: #{tpu_custom_call.1} parent=1 // pred_region
      _
    $region69: #{tpu_custom_call.1} parent=1 // pred_fallthru
      _
    // Predicated region
    $region70: #{tpu_custom_call.1} parent=1 // pred_check
      _
    $region71: #{tpu_custom_call.1} parent=1 // pred_check_branch
      %164 = sbr.rel (0) target = $region73
    $region72: #{tpu_custom_call.1} parent=1 // pred_region
      %165 = dma.done [#allocation3], 2048
    $region73: #{tpu_custom_call.1} parent=1 // pred_fallthru
      _
    // Predicated region
    $region74: #{tpu_custom_call.1} parent=1 // pred_check
      _
    $region75: #{tpu_custom_call.1} parent=1 // pred_check_branch
      %167 = sbr.rel (0) target = $region77
    $region76: #{tpu_custom_call.1} parent=1 // pred_region
      %168 = dma.done [#allocation6], 4096
    $region77: #{tpu_custom_call.1} parent=1 // pred_fallthru
      _
    // Predicated region
    $region78: #{tpu_custom_call.1} parent=1 // pred_check
      _
    $region79: #{tpu_custom_call.1} parent=1 // pred_check_branch
      %170 = sbr.rel (0) target = $region81
    $region80: #{tpu_custom_call.1} parent=1 // pred_region
      %171 = dma.done [#allocation6], 2048
    $region81: #{tpu_custom_call.1} parent=1 // pred_fallthru
      _
    // Predicated region
    $region82: #{tpu_custom_call.1} parent=1 // pred_check
      _
    $region83: #{tpu_custom_call.1} parent=1 // pred_check_branch
      %173 = sbr.rel (0) target = $region85
    $region84: #{tpu_custom_call.1} parent=1 // pred_region
      %174 = dma.done [#allocation9], 2048
    $region85: #{tpu_custom_call.1} parent=1 // pred_fallthru
      _
    // Predicated region
    $region86: #{tpu_custom_call.1} parent=1 // pred_check
      _
    $region87: #{tpu_custom_call.1} parent=1 // pred_check_branch
      %176 = sbr.rel (0) target = $region89
    $region88: #{tpu_custom_call.1} parent=1 // pred_region
      %177 = dma.done [#allocation9], 2048
    $region89: #{tpu_custom_call.1} parent=1 // pred_fallthru
      _
    // Predicated region
    $region90: #{tpu_custom_call.1} parent=1 // pred_check
      _
    $region91: #{tpu_custom_call.1} parent=1 // pred_check_branch
      %179 = sbr.rel (0) target = $region93
    $region92: #{tpu_custom_call.1} parent=1 // pred_region
      %180 = dma.done [#allocation12], 2048
    $region93: #{tpu_custom_call.1} parent=1 // pred_fallthru
      _
    // Predicated region
    $region94: #{tpu_custom_call.1} parent=1 // pred_check
      _
    $region95: #{tpu_custom_call.1} parent=1 // pred_check_branch
      %182 = sbr.rel (0) target = $region97
    $region96: #{tpu_custom_call.1} parent=1 // pred_region
      %183 = dma.done [#allocation12], 2048
    $region97: #{tpu_custom_call.1} parent=1 // pred_fallthru
      _
    // Predicated region
    $region98: #{tpu_custom_call.1} parent=1 // pred_check
      _
    $region99: #{tpu_custom_call.1} parent=1 // pred_check_branch
      %185 = sbr.rel (0) target = $region101
    $region100: #{tpu_custom_call.1} parent=1 // pred_region
      %186 = dma.done [#allocation15], 2048
    $region101: #{tpu_custom_call.1} parent=1 // pred_fallthru
      _
    // Predicated region
    $region102: #{tpu_custom_call.1} parent=1 // pred_check
      _
    $region103: #{tpu_custom_call.1} parent=1 // pred_check_branch
      %188 = sbr.rel (0) target = $region105
    $region104: #{tpu_custom_call.1} parent=1 // pred_region
      %189 = dma.done [#allocation15], 512
    $region105: #{tpu_custom_call.1} parent=1 // pred_fallthru
      _
    // Predicated region
    $region106: #{tpu_custom_call.1} parent=1 // pred_check
      _
    $region107: #{tpu_custom_call.1} parent=1 // pred_check_branch
      %191 = sbr.rel (0) target = $region109
    $region108: #{tpu_custom_call.1} parent=1 // pred_region
      %192 = dma.done [#allocation18], 2048
    $region109: #{tpu_custom_call.1} parent=1 // pred_fallthru
      _
    %v193 = vld [vmem:[#allocation2] sm:$0xff]
    %v194 = vld [vmem:[#allocation2 + $0x8] sm:$0xff]
    %v195 = vld [vmem:[#allocation2 + $0x10] sm:$0xff]
    %v196 = vld [vmem:[#allocation2 + $0x18] sm:$0xff]
    %v197 = vld [vmem:[#allocation2 + $0x20] sm:$0xff]
    %v198 = vld [vmem:[#allocation2 + $0x28] sm:$0xff]
    %v199 = vld [vmem:[#allocation2 + $0x30] sm:$0xff]
    %v200 = vld [vmem:[#allocation2 + $0x38] sm:$0xff]
    %v201 = vld [vmem:[#allocation2 + $0x40] sm:$0xff]
    %v202 = vld [vmem:[#allocation2 + $0x48] sm:$0xff]
    %v203 = vld [vmem:[#allocation2 + $0x50] sm:$0xff]
    %v204 = vld [vmem:[#allocation2 + $0x58] sm:$0xff]
    %v205 = vld [vmem:[#allocation2 + $0x60] sm:$0xff]
    %v206 = vld [vmem:[#allocation2 + $0x68] sm:$0xff]
    %v207 = vld [vmem:[#allocation2 + $0x70] sm:$0xff]
    %v208 = vld [vmem:[#allocation2 + $0x78] sm:$0xff]
    %v209 = vunpack.c.0.s8 %v193
    %v210 = vunpack.c.0.s8 %v194
    %v211 = vunpack.c.1.s8 %v193
    %v212 = vunpack.c.1.s8 %v194
    %v213 = vunpack.c.2.s8 %v193
    %v214 = vunpack.c.2.s8 %v194
    %v215 = vunpack.c.3.s8 %v193
    %v216 = vunpack.c.3.s8 %v194
    %v217 = vunpack.c.0.s8 %v195
    %v218 = vunpack.c.0.s8 %v196
    %v219 = vunpack.c.1.s8 %v195
    %v220 = vunpack.c.1.s8 %v196
    %v221 = vunpack.c.2.s8 %v195
    %v222 = vunpack.c.2.s8 %v196
    %v223 = vunpack.c.3.s8 %v195
    %v224 = vunpack.c.3.s8 %v196
    %v225 = vunpack.c.0.s8 %v197
    %v226 = vunpack.c.0.s8 %v198
    %v227 = vunpack.c.1.s8 %v197
    %v228 = vunpack.c.1.s8 %v198
    %v229 = vunpack.c.2.s8 %v197
    %v230 = vunpack.c.2.s8 %v198
    %v231 = vunpack.c.3.s8 %v197
    %v232 = vunpack.c.3.s8 %v198
    %v233 = vunpack.c.0.s8 %v199
    %v234 = vunpack.c.0.s8 %v200
    %v235 = vunpack.c.1.s8 %v199
    %v236 = vunpack.c.1.s8 %v200
    %v237 = vunpack.c.2.s8 %v199
    %v238 = vunpack.c.2.s8 %v200
    %v239 = vunpack.c.3.s8 %v199
    %v240 = vunpack.c.3.s8 %v200
    %v241 = vunpack.c.0.s8 %v201
    %v242 = vunpack.c.0.s8 %v202
    %v243 = vunpack.c.1.s8 %v201
    %v244 = vunpack.c.1.s8 %v202
    %v245 = vunpack.c.2.s8 %v201
    %v246 = vunpack.c.2.s8 %v202
    %v247 = vunpack.c.3.s8 %v201
    %v248 = vunpack.c.3.s8 %v202
    %v249 = vunpack.c.0.s8 %v203
    %v250 = vunpack.c.0.s8 %v204
    %v251 = vunpack.c.1.s8 %v203
    %v252 = vunpack.c.1.s8 %v204
    %v253 = vunpack.c.2.s8 %v203
    %v254 = vunpack.c.2.s8 %v204
    %v255 = vunpack.c.3.s8 %v203
    %v256 = vunpack.c.3.s8 %v204
    %v257 = vunpack.c.0.s8 %v205
    %v258 = vunpack.c.0.s8 %v206
    %v259 = vunpack.c.1.s8 %v205
    %v260 = vunpack.c.1.s8 %v206
    %v261 = vunpack.c.2.s8 %v205
    %v262 = vunpack.c.2.s8 %v206
    %v263 = vunpack.c.3.s8 %v205
    %v264 = vunpack.c.3.s8 %v206
    %v265 = vunpack.c.0.s8 %v207
    %v266 = vunpack.c.0.s8 %v208
    %v267 = vunpack.c.1.s8 %v207
    %v268 = vunpack.c.1.s8 %v208
    %v269 = vunpack.c.2.s8 %v207
    %v270 = vunpack.c.2.s8 %v208
    %v271 = vunpack.c.3.s8 %v207
    %v272 = vunpack.c.3.s8 %v208
    %v273 = vcvt.s32.f32 %v209
    %v274 = vcvt.s32.f32 %v210
    %v275 = vcvt.s32.f32 %v211
    %v276 = vcvt.s32.f32 %v212
    %v277 = vcvt.s32.f32 %v213
    %v278 = vcvt.s32.f32 %v214
    %v279 = vcvt.s32.f32 %v215
    %v280 = vcvt.s32.f32 %v216
    %v281 = vcvt.s32.f32 %v217
    %v282 = vcvt.s32.f32 %v218
    %v283 = vcvt.s32.f32 %v219
    %v284 = vcvt.s32.f32 %v220
    %v285 = vcvt.s32.f32 %v221
    %v286 = vcvt.s32.f32 %v222
    %v287 = vcvt.s32.f32 %v223
    %v288 = vcvt.s32.f32 %v224
    %v289 = vcvt.s32.f32 %v225
    %v290 = vcvt.s32.f32 %v226
    %v291 = vcvt.s32.f32 %v227
    %v292 = vcvt.s32.f32 %v228
    %v293 = vcvt.s32.f32 %v229
    %v294 = vcvt.s32.f32 %v230
    %v295 = vcvt.s32.f32 %v231
    %v296 = vcvt.s32.f32 %v232
    %v297 = vcvt.s32.f32 %v233
    %v298 = vcvt.s32.f32 %v234
    %v299 = vcvt.s32.f32 %v235
    %v300 = vcvt.s32.f32 %v236
    %v301 = vcvt.s32.f32 %v237
    %v302 = vcvt.s32.f32 %v238
    %v303 = vcvt.s32.f32 %v239
    %v304 = vcvt.s32.f32 %v240
    %v305 = vcvt.s32.f32 %v241
    %v306 = vcvt.s32.f32 %v242
    %v307 = vcvt.s32.f32 %v243
    %v308 = vcvt.s32.f32 %v244
    %v309 = vcvt.s32.f32 %v245
    %v310 = vcvt.s32.f32 %v246
    %v311 = vcvt.s32.f32 %v247
    %v312 = vcvt.s32.f32 %v248
    %v313 = vcvt.s32.f32 %v249
    %v314 = vcvt.s32.f32 %v250
    %v315 = vcvt.s32.f32 %v251
    %v316 = vcvt.s32.f32 %v252
    %v317 = vcvt.s32.f32 %v253
    %v318 = vcvt.s32.f32 %v254
    %v319 = vcvt.s32.f32 %v255
    %v320 = vcvt.s32.f32 %v256
    %v321 = vcvt.s32.f32 %v257
    %v322 = vcvt.s32.f32 %v258
    %v323 = vcvt.s32.f32 %v259
    %v324 = vcvt.s32.f32 %v260
    %v325 = vcvt.s32.f32 %v261
    %v326 = vcvt.s32.f32 %v262
    %v327 = vcvt.s32.f32 %v263
    %v328 = vcvt.s32.f32 %v264
    %v329 = vcvt.s32.f32 %v265
    %v330 = vcvt.s32.f32 %v266
    %v331 = vcvt.s32.f32 %v267
    %v332 = vcvt.s32.f32 %v268
    %v333 = vcvt.s32.f32 %v269
    %v334 = vcvt.s32.f32 %v270
    %v335 = vcvt.s32.f32 %v271
    %v336 = vcvt.s32.f32 %v272
    %v337 = vld [vmem:[#allocation5] sm:$0xff]
    %v338 = vld [vmem:[#allocation5 + $0x8] sm:$0xff]
    %v339 = vld [vmem:[#allocation5 + $0x10] sm:$0xff]
    %v340 = vld [vmem:[#allocation5 + $0x18] sm:$0xff]
    %v341 = vld [vmem:[#allocation5 + $0x20] sm:$0xff]
    %v342 = vld [vmem:[#allocation5 + $0x28] sm:$0xff]
    %v343 = vld [vmem:[#allocation5 + $0x30] sm:$0xff]
    %v344 = vld [vmem:[#allocation5 + $0x38] sm:$0xff]
    %v345 = vld [vmem:[#allocation5 + $0x40] sm:$0xff]
    %v346 = vld [vmem:[#allocation5 + $0x48] sm:$0xff]
    %v347 = vld [vmem:[#allocation5 + $0x50] sm:$0xff]
    %v348 = vld [vmem:[#allocation5 + $0x58] sm:$0xff]
    %v349 = vld [vmem:[#allocation5 + $0x60] sm:$0xff]
    %v350 = vld [vmem:[#allocation5 + $0x68] sm:$0xff]
    %v351 = vld [vmem:[#allocation5 + $0x70] sm:$0xff]
    %v352 = vld [vmem:[#allocation5 + $0x78] sm:$0xff]
    %v353 = vld [vmem:[#allocation5 + $0x80] sm:$0xff]
    %v354 = vld [vmem:[#allocation5 + $0x88] sm:$0xff]
    %v355 = vld [vmem:[#allocation5 + $0x90] sm:$0xff]
    %v356 = vld [vmem:[#allocation5 + $0x98] sm:$0xff]
    %v357 = vld [vmem:[#allocation5 + $0xa0] sm:$0xff]
    %v358 = vld [vmem:[#allocation5 + $0xa8] sm:$0xff]
    %v359 = vld [vmem:[#allocation5 + $0xb0] sm:$0xff]
    %v360 = vld [vmem:[#allocation5 + $0xb8] sm:$0xff]
    %v361 = vld [vmem:[#allocation5 + $0xc0] sm:$0xff]
    %v362 = vld [vmem:[#allocation5 + $0xc8] sm:$0xff]
    %v363 = vld [vmem:[#allocation5 + $0xd0] sm:$0xff]
    %v364 = vld [vmem:[#allocation5 + $0xd8] sm:$0xff]
    %v365 = vld [vmem:[#allocation5 + $0xe0] sm:$0xff]
    %v366 = vld [vmem:[#allocation5 + $0xe8] sm:$0xff]
    %v367 = vld [vmem:[#allocation5 + $0xf0] sm:$0xff]
    %v368 = vld [vmem:[#allocation5 + $0xf8] sm:$0xff]
    %369 = vmatprep.subr.mxu0 0.0
    %370 = vmatpush1.msra.mxu0 %v352
    %371 = vmatprep.subr.mxu0 0.0
    %372 = vmatpush1.msra.mxu0 %v351
    %373 = vmatprep.subr.mxu0 0.0
    %374 = vmatpush1.msra.mxu0 %v350
    %375 = vmatprep.subr.mxu0 0.0
    %376 = vmatpush1.msra.mxu0 %v349
    %377 = vmatprep.subr.mxu0 0.0
    %378 = vmatpush1.msra.mxu0 %v348
    %379 = vmatprep.subr.mxu0 0.0
    %380 = vmatpush1.msra.mxu0 %v347
    %381 = vmatprep.subr.mxu0 0.0
    %382 = vmatpush1.msra.mxu0 %v346
    %383 = vmatprep.subr.mxu0 0.0
    %384 = vmatpush1.msra.mxu0 %v345
    %385 = vmatprep.subr.mxu0 0.0
    %386 = vmatpush1.msra.mxu0 %v344
    %387 = vmatprep.subr.mxu0 0.0
    %388 = vmatpush1.msra.mxu0 %v343
    %389 = vmatprep.subr.mxu0 0.0
    %390 = vmatpush1.msra.mxu0 %v342
    %391 = vmatprep.subr.mxu0 0.0
    %392 = vmatpush1.msra.mxu0 %v341
    %393 = vmatprep.subr.mxu0 0.0
    %394 = vmatpush1.msra.mxu0 %v340
    %395 = vmatprep.subr.mxu0 0.0
    %396 = vmatpush1.msra.mxu0 %v339
    %397 = vmatprep.subr.mxu0 0.0
    %398 = vmatpush1.msra.mxu0 %v338
    %399 = vmatprep.subr.mxu0 0.0
    %400 = vmatpush1.msra.mxu0 %v337
    %401 = vmatprep.subr.mxu0 0.0
    %402 = vmatpush2.msra.mxu0 %v368
    %403 = vmatprep.subr.mxu0 0.0
    %404 = vmatpush2.msra.mxu0 %v367
    %405 = vmatprep.subr.mxu0 0.0
    %406 = vmatpush2.msra.mxu0 %v366
    %407 = vmatprep.subr.mxu0 0.0
    %408 = vmatpush2.msra.mxu0 %v365
    %409 = vmatprep.subr.mxu0 0.0
    %410 = vmatpush2.msra.mxu0 %v364
    %411 = vmatprep.subr.mxu0 0.0
    %412 = vmatpush2.msra.mxu0 %v363
    %413 = vmatprep.subr.mxu0 0.0
    %414 = vmatpush2.msra.mxu0 %v362
    %415 = vmatprep.subr.mxu0 0.0
    %416 = vmatpush2.msra.mxu0 %v361
    %417 = vmatprep.subr.mxu0 0.0
    %418 = vmatpush2.msra.mxu0 %v360
    %419 = vmatprep.subr.mxu0 0.0
    %420 = vmatpush2.msra.mxu0 %v359
    %421 = vmatprep.subr.mxu0 0.0
    %422 = vmatpush2.msra.mxu0 %v358
    %423 = vmatprep.subr.mxu0 0.0
    %424 = vmatpush2.msra.mxu0 %v357
    %425 = vmatprep.subr.mxu0 0.0
    %426 = vmatpush2.msra.mxu0 %v356
    %427 = vmatprep.subr.mxu0 0.0
    %428 = vmatpush2.msra.mxu0 %v355
    %429 = vmatprep.subr.mxu0 0.0
    %430 = vmatpush2.msra.mxu0 %v354
    %431 = vmatprep.subr.mxu0 0.0
    %432 = vmatpush2.msra.mxu0 %v353
    %433 = vmatprep.mubr.f32.mxu0 %v274
    %434 = vmatmul.mubr.f32.gmra.mxu0 %v273
    %v435 = vpop.f32.mrf.mxu0
    %v436 = vadd.f32 0.0, %v435
    %v437 = vpop.f32.mrf.mxu0
    %438 = vmatprep.mubr.f32.mxu0 %v276
    %439 = vmatmul.mubr.f32.gmra.mxu0 %v275
    %v440 = vpop.f32.mrf.mxu0
    %v441 = vadd.f32 0.0, %v440
    %v442 = vpop.f32.mrf.mxu0
    %443 = vmatprep.mubr.f32.mxu0 %v278
    %444 = vmatmul.mubr.f32.gmra.mxu0 %v277
    %v445 = vpop.f32.mrf.mxu0
    %v446 = vadd.f32 0.0, %v445
    %v447 = vpop.f32.mrf.mxu0
    %448 = vmatprep.mubr.f32.mxu0 %v280
    %449 = vmatmul.mubr.f32.gmra.mxu0 %v279
    %v450 = vpop.f32.mrf.mxu0
    %v451 = vadd.f32 0.0, %v450
    %v452 = vpop.f32.mrf.mxu0
    %453 = vmatprep.mubr.f32.mxu0 %v282
    %454 = vmatmul.mubr.f32.gmra.mxu0 %v281
    %v455 = vpop.f32.mrf.mxu0
    %v456 = vadd.f32 0.0, %v455
    %v457 = vpop.f32.mrf.mxu0
    %458 = vmatprep.mubr.f32.mxu0 %v284
    %459 = vmatmul.mubr.f32.gmra.mxu0 %v283
    %v460 = vpop.f32.mrf.mxu0
    %v461 = vadd.f32 0.0, %v460
    %v462 = vpop.f32.mrf.mxu0
    %463 = vmatprep.mubr.f32.mxu0 %v286
    %464 = vmatmul.mubr.f32.gmra.mxu0 %v285
    %v465 = vpop.f32.mrf.mxu0
    %v466 = vadd.f32 0.0, %v465
    %v467 = vpop.f32.mrf.mxu0
    %468 = vmatprep.mubr.f32.mxu0 %v288
    %469 = vmatmul.mubr.f32.gmra.mxu0 %v287
    %v470 = vpop.f32.mrf.mxu0
    %v471 = vadd.f32 0.0, %v470
    %v472 = vpop.f32.mrf.mxu0
    %473 = vmatprep.mubr.f32.mxu0 %v290
    %474 = vmatmul.mubr.f32.gmra.mxu0 %v289
    %v475 = vpop.f32.mrf.mxu0
    %v476 = vadd.f32 0.0, %v475
    %v477 = vpop.f32.mrf.mxu0
    %478 = vmatprep.mubr.f32.mxu0 %v292
    %479 = vmatmul.mubr.f32.gmra.mxu0 %v291
    %v480 = vpop.f32.mrf.mxu0
    %v481 = vadd.f32 0.0, %v480
    %v482 = vpop.f32.mrf.mxu0
    %483 = vmatprep.mubr.f32.mxu0 %v294
    %484 = vmatmul.mubr.f32.gmra.mxu0 %v293
    %v485 = vpop.f32.mrf.mxu0
    %v486 = vadd.f32 0.0, %v485
    %v487 = vpop.f32.mrf.mxu0
    %488 = vmatprep.mubr.f32.mxu0 %v296
    %489 = vmatmul.mubr.f32.gmra.mxu0 %v295
    %v490 = vpop.f32.mrf.mxu0
    %v491 = vadd.f32 0.0, %v490
    %v492 = vpop.f32.mrf.mxu0
    %493 = vmatprep.mubr.f32.mxu0 %v298
    %494 = vmatmul.mubr.f32.gmra.mxu0 %v297
    %v495 = vpop.f32.mrf.mxu0
    %v496 = vadd.f32 0.0, %v495
    %v497 = vpop.f32.mrf.mxu0
    %498 = vmatprep.mubr.f32.mxu0 %v300
    %499 = vmatmul.mubr.f32.gmra.mxu0 %v299
    %v500 = vpop.f32.mrf.mxu0
    %v501 = vadd.f32 0.0, %v500
    %v502 = vpop.f32.mrf.mxu0
    %503 = vmatprep.mubr.f32.mxu0 %v302
    %504 = vmatmul.mubr.f32.gmra.mxu0 %v301
    %v505 = vpop.f32.mrf.mxu0
    %v506 = vadd.f32 0.0, %v505
    %v507 = vpop.f32.mrf.mxu0
    %508 = vmatprep.mubr.f32.mxu0 %v304
    %509 = vmatmul.mubr.f32.gmra.mxu0 %v303
    %v510 = vpop.f32.mrf.mxu0
    %v511 = vadd.f32 0.0, %v510
    %v512 = vpop.f32.mrf.mxu0
    %513 = vmatprep.mubr.f32.mxu0 %v306
    %514 = vmatmul.mubr.f32.gmra.mxu0 %v305
    %v515 = vpop.f32.mrf.mxu0
    %v516 = vadd.f32 0.0, %v515
    %v517 = vpop.f32.mrf.mxu0
    %518 = vmatprep.mubr.f32.mxu0 %v308
    %519 = vmatmul.mubr.f32.gmra.mxu0 %v307
    %v520 = vpop.f32.mrf.mxu0
    %v521 = vadd.f32 0.0, %v520
    %v522 = vpop.f32.mrf.mxu0
    %523 = vmatprep.mubr.f32.mxu0 %v310
    %524 = vmatmul.mubr.f32.gmra.mxu0 %v309
    %v525 = vpop.f32.mrf.mxu0
    %v526 = vadd.f32 0.0, %v525
    %v527 = vpop.f32.mrf.mxu0
    %528 = vmatprep.mubr.f32.mxu0 %v312
    %529 = vmatmul.mubr.f32.gmra.mxu0 %v311
    %v530 = vpop.f32.mrf.mxu0
    %v531 = vadd.f32 0.0, %v530
    %v532 = vpop.f32.mrf.mxu0
    %533 = vmatprep.mubr.f32.mxu0 %v314
    %534 = vmatmul.mubr.f32.gmra.mxu0 %v313
    %v535 = vpop.f32.mrf.mxu0
    %v536 = vadd.f32 0.0, %v535
    %v537 = vpop.f32.mrf.mxu0
    %538 = vmatprep.mubr.f32.mxu0 %v316
    %539 = vmatmul.mubr.f32.gmra.mxu0 %v315
    %v540 = vpop.f32.mrf.mxu0
    %v541 = vadd.f32 0.0, %v540
    %v542 = vpop.f32.mrf.mxu0
    %543 = vmatprep.mubr.f32.mxu0 %v318
    %544 = vmatmul.mubr.f32.gmra.mxu0 %v317
    %v545 = vpop.f32.mrf.mxu0
    %v546 = vadd.f32 0.0, %v545
    %v547 = vpop.f32.mrf.mxu0
    %548 = vmatprep.mubr.f32.mxu0 %v320
    %549 = vmatmul.mubr.f32.gmra.mxu0 %v319
    %v550 = vpop.f32.mrf.mxu0
    %v551 = vadd.f32 0.0, %v550
    %v552 = vpop.f32.mrf.mxu0
    %553 = vmatprep.mubr.f32.mxu0 %v322
    %554 = vmatmul.mubr.f32.gmra.mxu0 %v321
    %v555 = vpop.f32.mrf.mxu0
    %v556 = vadd.f32 0.0, %v555
    %v557 = vpop.f32.mrf.mxu0
    %558 = vmatprep.mubr.f32.mxu0 %v324
    %559 = vmatmul.mubr.f32.gmra.mxu0 %v323
    %v560 = vpop.f32.mrf.mxu0
    %v561 = vadd.f32 0.0, %v560
    %v562 = vpop.f32.mrf.mxu0
    %563 = vmatprep.mubr.f32.mxu0 %v326
    %564 = vmatmul.mubr.f32.gmra.mxu0 %v325
    %v565 = vpop.f32.mrf.mxu0
    %v566 = vadd.f32 0.0, %v565
    %v567 = vpop.f32.mrf.mxu0
    %568 = vmatprep.mubr.f32.mxu0 %v328
    %569 = vmatmul.mubr.f32.gmra.mxu0 %v327
    %v570 = vpop.f32.mrf.mxu0
    %v571 = vadd.f32 0.0, %v570
    %v572 = vpop.f32.mrf.mxu0
    %573 = vmatprep.mubr.f32.mxu0 %v330
    %574 = vmatmul.mubr.f32.gmra.mxu0 %v329
    %v575 = vpop.f32.mrf.mxu0
    %v576 = vadd.f32 0.0, %v575
    %v577 = vpop.f32.mrf.mxu0
    %578 = vmatprep.mubr.f32.mxu0 %v332
    %579 = vmatmul.mubr.f32.gmra.mxu0 %v331
    %v580 = vpop.f32.mrf.mxu0
    %v581 = vadd.f32 0.0, %v580
    %v582 = vpop.f32.mrf.mxu0
    %583 = vmatprep.mubr.f32.mxu0 %v334
    %584 = vmatmul.mubr.f32.gmra.mxu0 %v333
    %v585 = vpop.f32.mrf.mxu0
    %v586 = vadd.f32 0.0, %v585
    %v587 = vpop.f32.mrf.mxu0
    %588 = vmatprep.mubr.f32.mxu0 %v336
    %589 = vmatmul.mubr.f32.gmra.mxu0 %v335
    %v590 = vpop.f32.mrf.mxu0
    %v591 = vadd.f32 0.0, %v590
    %v592 = vpop.f32.mrf.mxu0
    %593 = vdwg.mxu0
    %v594 = vld [vmem:[#allocation7] sm:$0xff]
    %v595 = vld [vmem:[#allocation7 + $0x8] sm:$0xff]
    %v596 = vld [vmem:[#allocation7 + $0x10] sm:$0xff]
    %v597 = vld [vmem:[#allocation7 + $0x18] sm:$0xff]
    %v598 = vld [vmem:[#allocation7 + $0x20] sm:$0xff]
    %v599 = vld [vmem:[#allocation7 + $0x28] sm:$0xff]
    %v600 = vld [vmem:[#allocation7 + $0x30] sm:$0xff]
    %v601 = vld [vmem:[#allocation7 + $0x38] sm:$0xff]
    %v602 = vld [vmem:[#allocation7 + $0x40] sm:$0xff]
    %v603 = vld [vmem:[#allocation7 + $0x48] sm:$0xff]
    %v604 = vld [vmem:[#allocation7 + $0x50] sm:$0xff]
    %v605 = vld [vmem:[#allocation7 + $0x58] sm:$0xff]
    %v606 = vld [vmem:[#allocation7 + $0x60] sm:$0xff]
    %v607 = vld [vmem:[#allocation7 + $0x68] sm:$0xff]
    %v608 = vld [vmem:[#allocation7 + $0x70] sm:$0xff]
    %v609 = vld [vmem:[#allocation7 + $0x78] sm:$0xff]
    %v610 = vld [vmem:[%s3] sm:$0x1]
    %v612 = vlaneseq
    %v613 = vshrl.u32 %v612, 7
    %v614 = vsub.s32 0, %v613
    %v615 = vrot.slane %v610, %v614
    %617 = vmatprep.subr.mxu0 0.0
    %618 = vmatpush1.msra.mxu0 %v609
    %619 = vmatprep.subr.mxu0 0.0
    %620 = vmatpush1.msra.mxu0 %v608
    %621 = vmatprep.subr.mxu0 0.0
    %622 = vmatpush1.msra.mxu0 %v607
    %623 = vmatprep.subr.mxu0 0.0
    %624 = vmatpush1.msra.mxu0 %v606
    %625 = vmatprep.subr.mxu0 0.0
    %626 = vmatpush1.msra.mxu0 %v605
    %627 = vmatprep.subr.mxu0 0.0
    %628 = vmatpush1.msra.mxu0 %v604
    %629 = vmatprep.subr.mxu0 0.0
    %630 = vmatpush1.msra.mxu0 %v603
    %631 = vmatprep.subr.mxu0 0.0
    %632 = vmatpush1.msra.mxu0 %v602
    %633 = vmatprep.subr.mxu0 0.0
    %634 = vmatpush1.msra.mxu0 %v601
    %635 = vmatprep.subr.mxu0 0.0
    %636 = vmatpush1.msra.mxu0 %v600
    %637 = vmatprep.subr.mxu0 0.0
    %638 = vmatpush1.msra.mxu0 %v599
    %639 = vmatprep.subr.mxu0 0.0
    %640 = vmatpush1.msra.mxu0 %v598
    %641 = vmatprep.subr.mxu0 0.0
    %642 = vmatpush1.msra.mxu0 %v597
    %643 = vmatprep.subr.mxu0 0.0
    %644 = vmatpush1.msra.mxu0 %v596
    %645 = vmatprep.subr.mxu0 0.0
    %646 = vmatpush1.msra.mxu0 %v595
    %647 = vmatprep.subr.mxu0 0.0
    %648 = vmatpush1.msra.mxu0 %v594
    %649 = vmatprep.subr.mxu0 0.0
    %650 = vmatpush2.msra.mxu0 0.0
    %651 = vmatprep.subr.mxu0 0.0
    %652 = vmatpush2.msra.mxu0 0.0
    %653 = vmatprep.subr.mxu0 0.0
    %654 = vmatpush2.msra.mxu0 0.0
    %655 = vmatprep.subr.mxu0 0.0
    %656 = vmatpush2.msra.mxu0 0.0
    %657 = vmatprep.subr.mxu0 0.0
    %658 = vmatpush2.msra.mxu0 0.0
    %659 = vmatprep.subr.mxu0 0.0
    %660 = vmatpush2.msra.mxu0 0.0
    %661 = vmatprep.subr.mxu0 0.0
    %662 = vmatpush2.msra.mxu0 0.0
    %663 = vmatprep.subr.mxu0 0.0
    %664 = vmatpush2.msra.mxu0 0.0
    %665 = vmatprep.subr.mxu0 0.0
    %666 = vmatpush2.msra.mxu0 0.0
    %667 = vmatprep.subr.mxu0 0.0
    %668 = vmatpush2.msra.mxu0 0.0
    %669 = vmatprep.subr.mxu0 0.0
    %670 = vmatpush2.msra.mxu0 0.0
    %671 = vmatprep.subr.mxu0 0.0
    %672 = vmatpush2.msra.mxu0 0.0
    %673 = vmatprep.subr.mxu0 0.0
    %674 = vmatpush2.msra.mxu0 0.0
    %675 = vmatprep.subr.mxu0 0.0
    %676 = vmatpush2.msra.mxu0 0.0
    %677 = vmatprep.subr.mxu0 0.0
    %678 = vmatpush2.msra.mxu0 0.0
    %679 = vmatprep.subr.mxu0 0.0
    %680 = vmatpush2.msra.mxu0 0.0
    %681 = vmatprep.mubr.f32.mxu0 0.0
    %682 = vmatmul.mubr.f32.gmra.mxu0 %v436
    %v683 = vpop.f32.mrf.mxu0
    %v684 = vadd.f32 %v615, %v683
    %v685 = vpop.f32.mrf.mxu0
    %686 = vmatprep.mubr.f32.mxu0 0.0
    %687 = vmatmul.mubr.f32.gmra.mxu0 %v441
    %v688 = vpop.f32.mrf.mxu0
    %v689 = vadd.f32 %v615, %v688
    %v690 = vpop.f32.mrf.mxu0
    %691 = vmatprep.mubr.f32.mxu0 0.0
    %692 = vmatmul.mubr.f32.gmra.mxu0 %v446
    %v693 = vpop.f32.mrf.mxu0
    %v694 = vadd.f32 %v615, %v693
    %v695 = vpop.f32.mrf.mxu0
    %696 = vmatprep.mubr.f32.mxu0 0.0
    %697 = vmatmul.mubr.f32.gmra.mxu0 %v451
    %v698 = vpop.f32.mrf.mxu0
    %v699 = vadd.f32 %v615, %v698
    %v700 = vpop.f32.mrf.mxu0
    %701 = vmatprep.mubr.f32.mxu0 0.0
    %702 = vmatmul.mubr.f32.gmra.mxu0 %v456
    %v703 = vpop.f32.mrf.mxu0
    %v704 = vadd.f32 %v615, %v703
    %v705 = vpop.f32.mrf.mxu0
    %706 = vmatprep.mubr.f32.mxu0 0.0
    %707 = vmatmul.mubr.f32.gmra.mxu0 %v461
    %v708 = vpop.f32.mrf.mxu0
    %v709 = vadd.f32 %v615, %v708
    %v710 = vpop.f32.mrf.mxu0
    %711 = vmatprep.mubr.f32.mxu0 0.0
    %712 = vmatmul.mubr.f32.gmra.mxu0 %v466
    %v713 = vpop.f32.mrf.mxu0
    %v714 = vadd.f32 %v615, %v713
    %v715 = vpop.f32.mrf.mxu0
    %716 = vmatprep.mubr.f32.mxu0 0.0
    %717 = vmatmul.mubr.f32.gmra.mxu0 %v471
    %v718 = vpop.f32.mrf.mxu0
    %v719 = vadd.f32 %v615, %v718
    %v720 = vpop.f32.mrf.mxu0
    %721 = vmatprep.mubr.f32.mxu0 0.0
    %722 = vmatmul.mubr.f32.gmra.mxu0 %v476
    %v723 = vpop.f32.mrf.mxu0
    %v724 = vadd.f32 %v615, %v723
    %v725 = vpop.f32.mrf.mxu0
    %726 = vmatprep.mubr.f32.mxu0 0.0
    %727 = vmatmul.mubr.f32.gmra.mxu0 %v481
    %v728 = vpop.f32.mrf.mxu0
    %v729 = vadd.f32 %v615, %v728
    %v730 = vpop.f32.mrf.mxu0
    %731 = vmatprep.mubr.f32.mxu0 0.0
    %732 = vmatmul.mubr.f32.gmra.mxu0 %v486
    %v733 = vpop.f32.mrf.mxu0
    %v734 = vadd.f32 %v615, %v733
    %v735 = vpop.f32.mrf.mxu0
    %736 = vmatprep.mubr.f32.mxu0 0.0
    %737 = vmatmul.mubr.f32.gmra.mxu0 %v491
    %v738 = vpop.f32.mrf.mxu0
    %v739 = vadd.f32 %v615, %v738
    %v740 = vpop.f32.mrf.mxu0
    %741 = vmatprep.mubr.f32.mxu0 0.0
    %742 = vmatmul.mubr.f32.gmra.mxu0 %v496
    %v743 = vpop.f32.mrf.mxu0
    %v744 = vadd.f32 %v615, %v743
    %v745 = vpop.f32.mrf.mxu0
    %746 = vmatprep.mubr.f32.mxu0 0.0
    %747 = vmatmul.mubr.f32.gmra.mxu0 %v501
    %v748 = vpop.f32.mrf.mxu0
    %v749 = vadd.f32 %v615, %v748
    %v750 = vpop.f32.mrf.mxu0
    %751 = vmatprep.mubr.f32.mxu0 0.0
    %752 = vmatmul.mubr.f32.gmra.mxu0 %v506
    %v753 = vpop.f32.mrf.mxu0
    %v754 = vadd.f32 %v615, %v753
    %v755 = vpop.f32.mrf.mxu0
    %756 = vmatprep.mubr.f32.mxu0 0.0
    %757 = vmatmul.mubr.f32.gmra.mxu0 %v511
    %v758 = vpop.f32.mrf.mxu0
    %v759 = vadd.f32 %v615, %v758
    %v760 = vpop.f32.mrf.mxu0
    %761 = vmatprep.mubr.f32.mxu0 0.0
    %762 = vmatmul.mubr.f32.gmra.mxu0 %v516
    %v763 = vpop.f32.mrf.mxu0
    %v764 = vadd.f32 %v615, %v763
    %v765 = vpop.f32.mrf.mxu0
    %766 = vmatprep.mubr.f32.mxu0 0.0
    %767 = vmatmul.mubr.f32.gmra.mxu0 %v521
    %v768 = vpop.f32.mrf.mxu0
    %v769 = vadd.f32 %v615, %v768
    %v770 = vpop.f32.mrf.mxu0
    %771 = vmatprep.mubr.f32.mxu0 0.0
    %772 = vmatmul.mubr.f32.gmra.mxu0 %v526
    %v773 = vpop.f32.mrf.mxu0
    %v774 = vadd.f32 %v615, %v773
    %v775 = vpop.f32.mrf.mxu0
    %776 = vmatprep.mubr.f32.mxu0 0.0
    %777 = vmatmul.mubr.f32.gmra.mxu0 %v531
    %v778 = vpop.f32.mrf.mxu0
    %v779 = vadd.f32 %v615, %v778
    %v780 = vpop.f32.mrf.mxu0
    %781 = vmatprep.mubr.f32.mxu0 0.0
    %782 = vmatmul.mubr.f32.gmra.mxu0 %v536
    %v783 = vpop.f32.mrf.mxu0
    %v784 = vadd.f32 %v615, %v783
    %v785 = vpop.f32.mrf.mxu0
    %786 = vmatprep.mubr.f32.mxu0 0.0
    %787 = vmatmul.mubr.f32.gmra.mxu0 %v541
    %v788 = vpop.f32.mrf.mxu0
    %v789 = vadd.f32 %v615, %v788
    %v790 = vpop.f32.mrf.mxu0
    %791 = vmatprep.mubr.f32.mxu0 0.0
    %792 = vmatmul.mubr.f32.gmra.mxu0 %v546
    %v793 = vpop.f32.mrf.mxu0
    %v794 = vadd.f32 %v615, %v793
    %v795 = vpop.f32.mrf.mxu0
    %796 = vmatprep.mubr.f32.mxu0 0.0
    %797 = vmatmul.mubr.f32.gmra.mxu0 %v551
    %v798 = vpop.f32.mrf.mxu0
    %v799 = vadd.f32 %v615, %v798
    %v800 = vpop.f32.mrf.mxu0
    %801 = vmatprep.mubr.f32.mxu0 0.0
    %802 = vmatmul.mubr.f32.gmra.mxu0 %v556
    %v803 = vpop.f32.mrf.mxu0
    %v804 = vadd.f32 %v615, %v803
    %v805 = vpop.f32.mrf.mxu0
    %806 = vmatprep.mubr.f32.mxu0 0.0
    %807 = vmatmul.mubr.f32.gmra.mxu0 %v561
    %v808 = vpop.f32.mrf.mxu0
    %v809 = vadd.f32 %v615, %v808
    %v810 = vpop.f32.mrf.mxu0
    %811 = vmatprep.mubr.f32.mxu0 0.0
    %812 = vmatmul.mubr.f32.gmra.mxu0 %v566
    %v813 = vpop.f32.mrf.mxu0
    %v814 = vadd.f32 %v615, %v813
    %v815 = vpop.f32.mrf.mxu0
    %816 = vmatprep.mubr.f32.mxu0 0.0
    %817 = vmatmul.mubr.f32.gmra.mxu0 %v571
    %v818 = vpop.f32.mrf.mxu0
    %v819 = vadd.f32 %v615, %v818
    %v820 = vpop.f32.mrf.mxu0
    %821 = vmatprep.mubr.f32.mxu0 0.0
    %822 = vmatmul.mubr.f32.gmra.mxu0 %v576
    %v823 = vpop.f32.mrf.mxu0
    %v824 = vadd.f32 %v615, %v823
    %v825 = vpop.f32.mrf.mxu0
    %826 = vmatprep.mubr.f32.mxu0 0.0
    %827 = vmatmul.mubr.f32.gmra.mxu0 %v581
    %v828 = vpop.f32.mrf.mxu0
    %v829 = vadd.f32 %v615, %v828
    %v830 = vpop.f32.mrf.mxu0
    %831 = vmatprep.mubr.f32.mxu0 0.0
    %832 = vmatmul.mubr.f32.gmra.mxu0 %v586
    %v833 = vpop.f32.mrf.mxu0
    %v834 = vadd.f32 %v615, %v833
    %v835 = vpop.f32.mrf.mxu0
    %836 = vmatprep.mubr.f32.mxu0 0.0
    %837 = vmatmul.mubr.f32.gmra.mxu0 %v591
    %v838 = vpop.f32.mrf.mxu0
    %v839 = vadd.f32 %v615, %v838
    %v840 = vpop.f32.mrf.mxu0
    %841 = vdwg.mxu0
    %v842 = vmax.f32 %v684, 0.0
    %v843 = vmax.f32 %v689, 0.0
    %v844 = vmax.f32 %v694, 0.0
    %v845 = vmax.f32 %v699, 0.0
    %v846 = vmax.f32 %v704, 0.0
    %v847 = vmax.f32 %v709, 0.0
    %v848 = vmax.f32 %v714, 0.0
    %v849 = vmax.f32 %v719, 0.0
    %v850 = vmax.f32 %v724, 0.0
    %v851 = vmax.f32 %v729, 0.0
    %v852 = vmax.f32 %v734, 0.0
    %v853 = vmax.f32 %v739, 0.0
    %v854 = vmax.f32 %v744, 0.0
    %v855 = vmax.f32 %v749, 0.0
    %v856 = vmax.f32 %v754, 0.0
    %v857 = vmax.f32 %v759, 0.0
    %v858 = vmax.f32 %v764, 0.0
    %v859 = vmax.f32 %v769, 0.0
    %v860 = vmax.f32 %v774, 0.0
    %v861 = vmax.f32 %v779, 0.0
    %v862 = vmax.f32 %v784, 0.0
    %v863 = vmax.f32 %v789, 0.0
    %v864 = vmax.f32 %v794, 0.0
    %v865 = vmax.f32 %v799, 0.0
    %v866 = vmax.f32 %v804, 0.0
    %v867 = vmax.f32 %v809, 0.0
    %v868 = vmax.f32 %v814, 0.0
    %v869 = vmax.f32 %v819, 0.0
    %v870 = vmax.f32 %v824, 0.0
    %v871 = vmax.f32 %v829, 0.0
    %v872 = vmax.f32 %v834, 0.0
    %v873 = vmax.f32 %v839, 0.0
    %v874 = vld [vmem:[#allocation8] sm:$0xff]
    %v875 = vld [vmem:[#allocation8 + $0x8] sm:$0xff]
    %v876 = vld [vmem:[#allocation8 + $0x10] sm:$0xff]
    %v877 = vld [vmem:[#allocation8 + $0x18] sm:$0xff]
    %v878 = vld [vmem:[#allocation8 + $0x20] sm:$0xff]
    %v879 = vld [vmem:[#allocation8 + $0x28] sm:$0xff]
    %v880 = vld [vmem:[#allocation8 + $0x30] sm:$0xff]
    %v881 = vld [vmem:[#allocation8 + $0x38] sm:$0xff]
    %v882 = vld [vmem:[#allocation8 + $0x40] sm:$0xff]
    %v883 = vld [vmem:[#allocation8 + $0x48] sm:$0xff]
    %v884 = vld [vmem:[#allocation8 + $0x50] sm:$0xff]
    %v885 = vld [vmem:[#allocation8 + $0x58] sm:$0xff]
    %v886 = vld [vmem:[#allocation8 + $0x60] sm:$0xff]
    %v887 = vld [vmem:[#allocation8 + $0x68] sm:$0xff]
    %v888 = vld [vmem:[#allocation8 + $0x70] sm:$0xff]
    %v889 = vld [vmem:[#allocation8 + $0x78] sm:$0xff]
    %v890 = vld [vmem:[%s5] sm:$0x1]
    %v892 = vlaneseq
    %v893 = vshrl.u32 %v892, 7
    %v894 = vsub.s32 0, %v893
    %v895 = vrot.slane %v890, %v894
    %897 = vmatprep.subr.mxu0 0.0
    %898 = vmatpush1.msra.mxu0 %v889
    %899 = vmatprep.subr.mxu0 0.0
    %900 = vmatpush1.msra.mxu0 %v888
    %901 = vmatprep.subr.mxu0 0.0
    %902 = vmatpush1.msra.mxu0 %v887
    %903 = vmatprep.subr.mxu0 0.0
    %904 = vmatpush1.msra.mxu0 %v886
    %905 = vmatprep.subr.mxu0 0.0
    %906 = vmatpush1.msra.mxu0 %v885
    %907 = vmatprep.subr.mxu0 0.0
    %908 = vmatpush1.msra.mxu0 %v884
    %909 = vmatprep.subr.mxu0 0.0
    %910 = vmatpush1.msra.mxu0 %v883
    %911 = vmatprep.subr.mxu0 0.0
    %912 = vmatpush1.msra.mxu0 %v882
    %913 = vmatprep.subr.mxu0 0.0
    %914 = vmatpush1.msra.mxu0 %v881
    %915 = vmatprep.subr.mxu0 0.0
    %916 = vmatpush1.msra.mxu0 %v880
    %917 = vmatprep.subr.mxu0 0.0
    %918 = vmatpush1.msra.mxu0 %v879
    %919 = vmatprep.subr.mxu0 0.0
    %920 = vmatpush1.msra.mxu0 %v878
    %921 = vmatprep.subr.mxu0 0.0
    %922 = vmatpush1.msra.mxu0 %v877
    %923 = vmatprep.subr.mxu0 0.0
    %924 = vmatpush1.msra.mxu0 %v876
    %925 = vmatprep.subr.mxu0 0.0
    %926 = vmatpush1.msra.mxu0 %v875
    %927 = vmatprep.subr.mxu0 0.0
    %928 = vmatpush1.msra.mxu0 %v874
    %929 = vmatprep.subr.mxu0 0.0
    %930 = vmatpush2.msra.mxu0 0.0
    %931 = vmatprep.subr.mxu0 0.0
    %932 = vmatpush2.msra.mxu0 0.0
    %933 = vmatprep.subr.mxu0 0.0
    %934 = vmatpush2.msra.mxu0 0.0
    %935 = vmatprep.subr.mxu0 0.0
    %936 = vmatpush2.msra.mxu0 0.0
    %937 = vmatprep.subr.mxu0 0.0
    %938 = vmatpush2.msra.mxu0 0.0
    %939 = vmatprep.subr.mxu0 0.0
    %940 = vmatpush2.msra.mxu0 0.0
    %941 = vmatprep.subr.mxu0 0.0
    %942 = vmatpush2.msra.mxu0 0.0
    %943 = vmatprep.subr.mxu0 0.0
    %944 = vmatpush2.msra.mxu0 0.0
    %945 = vmatprep.subr.mxu0 0.0
    %946 = vmatpush2.msra.mxu0 0.0
    %947 = vmatprep.subr.mxu0 0.0
    %948 = vmatpush2.msra.mxu0 0.0
    %949 = vmatprep.subr.mxu0 0.0
    %950 = vmatpush2.msra.mxu0 0.0
    %951 = vmatprep.subr.mxu0 0.0
    %952 = vmatpush2.msra.mxu0 0.0
    %953 = vmatprep.subr.mxu0 0.0
    %954 = vmatpush2.msra.mxu0 0.0
    %955 = vmatprep.subr.mxu0 0.0
    %956 = vmatpush2.msra.mxu0 0.0
    %957 = vmatprep.subr.mxu0 0.0
    %958 = vmatpush2.msra.mxu0 0.0
    %959 = vmatprep.subr.mxu0 0.0
    %960 = vmatpush2.msra.mxu0 0.0
    %961 = vmatprep.mubr.f32.mxu0 0.0
    %962 = vmatmul.mubr.f32.gmra.mxu0 %v842
    %v963 = vpop.f32.mrf.mxu0
    %v964 = vadd.f32 %v895, %v963
    %v965 = vpop.f32.mrf.mxu0
    %966 = vmatprep.mubr.f32.mxu0 0.0
    %967 = vmatmul.mubr.f32.gmra.mxu0 %v843
    %v968 = vpop.f32.mrf.mxu0
    %v969 = vadd.f32 %v895, %v968
    %v970 = vpop.f32.mrf.mxu0
    %971 = vmatprep.mubr.f32.mxu0 0.0
    %972 = vmatmul.mubr.f32.gmra.mxu0 %v844
    %v973 = vpop.f32.mrf.mxu0
    %v974 = vadd.f32 %v895, %v973
    %v975 = vpop.f32.mrf.mxu0
    %976 = vmatprep.mubr.f32.mxu0 0.0
    %977 = vmatmul.mubr.f32.gmra.mxu0 %v845
    %v978 = vpop.f32.mrf.mxu0
    %v979 = vadd.f32 %v895, %v978
    %v980 = vpop.f32.mrf.mxu0
    %981 = vmatprep.mubr.f32.mxu0 0.0
    %982 = vmatmul.mubr.f32.gmra.mxu0 %v846
    %v983 = vpop.f32.mrf.mxu0
    %v984 = vadd.f32 %v895, %v983
    %v985 = vpop.f32.mrf.mxu0
    %986 = vmatprep.mubr.f32.mxu0 0.0
    %987 = vmatmul.mubr.f32.gmra.mxu0 %v847
    %v988 = vpop.f32.mrf.mxu0
    %v989 = vadd.f32 %v895, %v988
    %v990 = vpop.f32.mrf.mxu0
    %991 = vmatprep.mubr.f32.mxu0 0.0
    %992 = vmatmul.mubr.f32.gmra.mxu0 %v848
    %v993 = vpop.f32.mrf.mxu0
    %v994 = vadd.f32 %v895, %v993
    %v995 = vpop.f32.mrf.mxu0
    %996 = vmatprep.mubr.f32.mxu0 0.0
    %997 = vmatmul.mubr.f32.gmra.mxu0 %v849
    %v998 = vpop.f32.mrf.mxu0
    %v999 = vadd.f32 %v895, %v998
    %v1000 = vpop.f32.mrf.mxu0
    %1001 = vmatprep.mubr.f32.mxu0 0.0
    %1002 = vmatmul.mubr.f32.gmra.mxu0 %v850
    %v1003 = vpop.f32.mrf.mxu0
    %v1004 = vadd.f32 %v895, %v1003
    %v1005 = vpop.f32.mrf.mxu0
    %1006 = vmatprep.mubr.f32.mxu0 0.0
    %1007 = vmatmul.mubr.f32.gmra.mxu0 %v851
    %v1008 = vpop.f32.mrf.mxu0
    %v1009 = vadd.f32 %v895, %v1008
    %v1010 = vpop.f32.mrf.mxu0
    %1011 = vmatprep.mubr.f32.mxu0 0.0
    %1012 = vmatmul.mubr.f32.gmra.mxu0 %v852
    %v1013 = vpop.f32.mrf.mxu0
    %v1014 = vadd.f32 %v895, %v1013
    %v1015 = vpop.f32.mrf.mxu0
    %1016 = vmatprep.mubr.f32.mxu0 0.0
    %1017 = vmatmul.mubr.f32.gmra.mxu0 %v853
    %v1018 = vpop.f32.mrf.mxu0
    %v1019 = vadd.f32 %v895, %v1018
    %v1020 = vpop.f32.mrf.mxu0
    %1021 = vmatprep.mubr.f32.mxu0 0.0
    %1022 = vmatmul.mubr.f32.gmra.mxu0 %v854
    %v1023 = vpop.f32.mrf.mxu0
    %v1024 = vadd.f32 %v895, %v1023
    %v1025 = vpop.f32.mrf.mxu0
    %1026 = vmatprep.mubr.f32.mxu0 0.0
    %1027 = vmatmul.mubr.f32.gmra.mxu0 %v855
    %v1028 = vpop.f32.mrf.mxu0
    %v1029 = vadd.f32 %v895, %v1028
    %v1030 = vpop.f32.mrf.mxu0
    %1031 = vmatprep.mubr.f32.mxu0 0.0
    %1032 = vmatmul.mubr.f32.gmra.mxu0 %v856
    %v1033 = vpop.f32.mrf.mxu0
    %v1034 = vadd.f32 %v895, %v1033
    %v1035 = vpop.f32.mrf.mxu0
    %1036 = vmatprep.mubr.f32.mxu0 0.0
    %1037 = vmatmul.mubr.f32.gmra.mxu0 %v857
    %v1038 = vpop.f32.mrf.mxu0
    %v1039 = vadd.f32 %v895, %v1038
    %v1040 = vpop.f32.mrf.mxu0
    %1041 = vmatprep.mubr.f32.mxu0 0.0
    %1042 = vmatmul.mubr.f32.gmra.mxu0 %v858
    %v1043 = vpop.f32.mrf.mxu0
    %v1044 = vadd.f32 %v895, %v1043
    %v1045 = vpop.f32.mrf.mxu0
    %1046 = vmatprep.mubr.f32.mxu0 0.0
    %1047 = vmatmul.mubr.f32.gmra.mxu0 %v859
    %v1048 = vpop.f32.mrf.mxu0
    %v1049 = vadd.f32 %v895, %v1048
    %v1050 = vpop.f32.mrf.mxu0
    %1051 = vmatprep.mubr.f32.mxu0 0.0
    %1052 = vmatmul.mubr.f32.gmra.mxu0 %v860
    %v1053 = vpop.f32.mrf.mxu0
    %v1054 = vadd.f32 %v895, %v1053
    %v1055 = vpop.f32.mrf.mxu0
    %1056 = vmatprep.mubr.f32.mxu0 0.0
    %1057 = vmatmul.mubr.f32.gmra.mxu0 %v861
    %v1058 = vpop.f32.mrf.mxu0
    %v1059 = vadd.f32 %v895, %v1058
    %v1060 = vpop.f32.mrf.mxu0
    %1061 = vmatprep.mubr.f32.mxu0 0.0
    %1062 = vmatmul.mubr.f32.gmra.mxu0 %v862
    %v1063 = vpop.f32.mrf.mxu0
    %v1064 = vadd.f32 %v895, %v1063
    %v1065 = vpop.f32.mrf.mxu0
    %1066 = vmatprep.mubr.f32.mxu0 0.0
    %1067 = vmatmul.mubr.f32.gmra.mxu0 %v863
    %v1068 = vpop.f32.mrf.mxu0
    %v1069 = vadd.f32 %v895, %v1068
    %v1070 = vpop.f32.mrf.mxu0
    %1071 = vmatprep.mubr.f32.mxu0 0.0
    %1072 = vmatmul.mubr.f32.gmra.mxu0 %v864
    %v1073 = vpop.f32.mrf.mxu0
    %v1074 = vadd.f32 %v895, %v1073
    %v1075 = vpop.f32.mrf.mxu0
    %1076 = vmatprep.mubr.f32.mxu0 0.0
    %1077 = vmatmul.mubr.f32.gmra.mxu0 %v865
    %v1078 = vpop.f32.mrf.mxu0
    %v1079 = vadd.f32 %v895, %v1078
    %v1080 = vpop.f32.mrf.mxu0
    %1081 = vmatprep.mubr.f32.mxu0 0.0
    %1082 = vmatmul.mubr.f32.gmra.mxu0 %v866
    %v1083 = vpop.f32.mrf.mxu0
    %v1084 = vadd.f32 %v895, %v1083
    %v1085 = vpop.f32.mrf.mxu0
    %1086 = vmatprep.mubr.f32.mxu0 0.0
    %1087 = vmatmul.mubr.f32.gmra.mxu0 %v867
    %v1088 = vpop.f32.mrf.mxu0
    %v1089 = vadd.f32 %v895, %v1088
    %v1090 = vpop.f32.mrf.mxu0
    %1091 = vmatprep.mubr.f32.mxu0 0.0
    %1092 = vmatmul.mubr.f32.gmra.mxu0 %v868
    %v1093 = vpop.f32.mrf.mxu0
    %v1094 = vadd.f32 %v895, %v1093
    %v1095 = vpop.f32.mrf.mxu0
    %1096 = vmatprep.mubr.f32.mxu0 0.0
    %1097 = vmatmul.mubr.f32.gmra.mxu0 %v869
    %v1098 = vpop.f32.mrf.mxu0
    %v1099 = vadd.f32 %v895, %v1098
    %v1100 = vpop.f32.mrf.mxu0
    %1101 = vmatprep.mubr.f32.mxu0 0.0
    %1102 = vmatmul.mubr.f32.gmra.mxu0 %v870
    %v1103 = vpop.f32.mrf.mxu0
    %v1104 = vadd.f32 %v895, %v1103
    %v1105 = vpop.f32.mrf.mxu0
    %1106 = vmatprep.mubr.f32.mxu0 0.0
    %1107 = vmatmul.mubr.f32.gmra.mxu0 %v871
    %v1108 = vpop.f32.mrf.mxu0
    %v1109 = vadd.f32 %v895, %v1108
    %v1110 = vpop.f32.mrf.mxu0
    %1111 = vmatprep.mubr.f32.mxu0 0.0
    %1112 = vmatmul.mubr.f32.gmra.mxu0 %v872
    %v1113 = vpop.f32.mrf.mxu0
    %v1114 = vadd.f32 %v895, %v1113
    %v1115 = vpop.f32.mrf.mxu0
    %1116 = vmatprep.mubr.f32.mxu0 0.0
    %1117 = vmatmul.mubr.f32.gmra.mxu0 %v873
    %v1118 = vpop.f32.mrf.mxu0
    %v1119 = vadd.f32 %v895, %v1118
    %v1120 = vpop.f32.mrf.mxu0
    %1121 = vdwg.mxu0
    %v1122 = vmax.f32 %v964, 0.0
    %v1123 = vmax.f32 %v969, 0.0
    %v1124 = vmax.f32 %v974, 0.0
    %v1125 = vmax.f32 %v979, 0.0
    %v1126 = vmax.f32 %v984, 0.0
    %v1127 = vmax.f32 %v989, 0.0
    %v1128 = vmax.f32 %v994, 0.0
    %v1129 = vmax.f32 %v999, 0.0
    %v1130 = vmax.f32 %v1004, 0.0
    %v1131 = vmax.f32 %v1009, 0.0
    %v1132 = vmax.f32 %v1014, 0.0
    %v1133 = vmax.f32 %v1019, 0.0
    %v1134 = vmax.f32 %v1024, 0.0
    %v1135 = vmax.f32 %v1029, 0.0
    %v1136 = vmax.f32 %v1034, 0.0
    %v1137 = vmax.f32 %v1039, 0.0
    %v1138 = vmax.f32 %v1044, 0.0
    %v1139 = vmax.f32 %v1049, 0.0
    %v1140 = vmax.f32 %v1054, 0.0
    %v1141 = vmax.f32 %v1059, 0.0
    %v1142 = vmax.f32 %v1064, 0.0
    %v1143 = vmax.f32 %v1069, 0.0
    %v1144 = vmax.f32 %v1074, 0.0
    %v1145 = vmax.f32 %v1079, 0.0
    %v1146 = vmax.f32 %v1084, 0.0
    %v1147 = vmax.f32 %v1089, 0.0
    %v1148 = vmax.f32 %v1094, 0.0
    %v1149 = vmax.f32 %v1099, 0.0
    %v1150 = vmax.f32 %v1104, 0.0
    %v1151 = vmax.f32 %v1109, 0.0
    %v1152 = vmax.f32 %v1114, 0.0
    %v1153 = vmax.f32 %v1119, 0.0
    %1154 = vmatprep.subr.mxu0 0.0
    %1155 = vmatpush1.msra.mxu0 %v1137
    %1156 = vmatprep.subr.mxu0 0.0
    %1157 = vmatpush1.msra.mxu0 %v1136
    %1158 = vmatprep.subr.mxu0 0.0
    %1159 = vmatpush1.msra.mxu0 %v1135
    %1160 = vmatprep.subr.mxu0 0.0
    %1161 = vmatpush1.msra.mxu0 %v1134
    %1162 = vmatprep.subr.mxu0 0.0
    %1163 = vmatpush1.msra.mxu0 %v1133
    %1164 = vmatprep.subr.mxu0 0.0
    %1165 = vmatpush1.msra.mxu0 %v1132
    %1166 = vmatprep.subr.mxu0 0.0
    %1167 = vmatpush1.msra.mxu0 %v1131
    %1168 = vmatprep.subr.mxu0 0.0
    %1169 = vmatpush1.msra.mxu0 %v1130
    %1170 = vmatprep.subr.mxu0 0.0
    %1171 = vmatpush1.msra.mxu0 %v1129
    %1172 = vmatprep.subr.mxu0 0.0
    %1173 = vmatpush1.msra.mxu0 %v1128
    %1174 = vmatprep.subr.mxu0 0.0
    %1175 = vmatpush1.msra.mxu0 %v1127
    %1176 = vmatprep.subr.mxu0 0.0
    %1177 = vmatpush1.msra.mxu0 %v1126
    %1178 = vmatprep.subr.mxu0 0.0
    %1179 = vmatpush1.msra.mxu0 %v1125
    %1180 = vmatprep.subr.mxu0 0.0
    %1181 = vmatpush1.msra.mxu0 %v1124
    %1182 = vmatprep.subr.mxu0 0.0
    %1183 = vmatpush1.msra.mxu0 %v1123
    %1184 = vmatprep.subr.mxu0 0.0
    %1185 = vmatpush1.msra.mxu0 %v1122
    %1186 = vmatprep.subr.mxu0 0.0
    %1187 = vmatpush2.msra.mxu0 %v1153
    %1188 = vmatprep.subr.mxu0 0.0
    %1189 = vmatpush2.msra.mxu0 %v1152
    %1190 = vmatprep.subr.mxu0 0.0
    %1191 = vmatpush2.msra.mxu0 %v1151
    %1192 = vmatprep.subr.mxu0 0.0
    %1193 = vmatpush2.msra.mxu0 %v1150
    %1194 = vmatprep.subr.mxu0 0.0
    %1195 = vmatpush2.msra.mxu0 %v1149
    %1196 = vmatprep.subr.mxu0 0.0
    %1197 = vmatpush2.msra.mxu0 %v1148
    %1198 = vmatprep.subr.mxu0 0.0
    %1199 = vmatpush2.msra.mxu0 %v1147
    %1200 = vmatprep.subr.mxu0 0.0
    %1201 = vmatpush2.msra.mxu0 %v1146
    %1202 = vmatprep.subr.mxu0 0.0
    %1203 = vmatpush2.msra.mxu0 %v1145
    %1204 = vmatprep.subr.mxu0 0.0
    %1205 = vmatpush2.msra.mxu0 %v1144
    %1206 = vmatprep.subr.mxu0 0.0
    %1207 = vmatpush2.msra.mxu0 %v1143
    %1208 = vmatprep.subr.mxu0 0.0
    %1209 = vmatpush2.msra.mxu0 %v1142
    %1210 = vmatprep.subr.mxu0 0.0
    %1211 = vmatpush2.msra.mxu0 %v1141
    %1212 = vmatprep.subr.mxu0 0.0
    %1213 = vmatpush2.msra.mxu0 %v1140
    %1214 = vmatprep.subr.mxu0 0.0
    %1215 = vmatpush2.msra.mxu0 %v1139
    %1216 = vmatprep.subr.mxu0 0.0
    %1217 = vmatpush2.msra.mxu0 %v1138
    %1218 = vmatprep.mubr.f32.mxu0 %v274
    %1219 = vmatmul.mubr.f32.gmra.mxu0 %v273
    %v1220 = vpop.f32.mrf.mxu0
    %v1221 = vadd.f32 0.0, %v1220
    %v1222 = vpop.f32.mrf.mxu0
    %1223 = vmatprep.mubr.f32.mxu0 %v276
    %1224 = vmatmul.mubr.f32.gmra.mxu0 %v275
    %v1225 = vpop.f32.mrf.mxu0
    %v1226 = vadd.f32 0.0, %v1225
    %v1227 = vpop.f32.mrf.mxu0
    %1228 = vmatprep.mubr.f32.mxu0 %v278
    %1229 = vmatmul.mubr.f32.gmra.mxu0 %v277
    %v1230 = vpop.f32.mrf.mxu0
    %v1231 = vadd.f32 0.0, %v1230
    %v1232 = vpop.f32.mrf.mxu0
    %1233 = vmatprep.mubr.f32.mxu0 %v280
    %1234 = vmatmul.mubr.f32.gmra.mxu0 %v279
    %v1235 = vpop.f32.mrf.mxu0
    %v1236 = vadd.f32 0.0, %v1235
    %v1237 = vpop.f32.mrf.mxu0
    %1238 = vmatprep.mubr.f32.mxu0 %v282
    %1239 = vmatmul.mubr.f32.gmra.mxu0 %v281
    %v1240 = vpop.f32.mrf.mxu0
    %v1241 = vadd.f32 0.0, %v1240
    %v1242 = vpop.f32.mrf.mxu0
    %1243 = vmatprep.mubr.f32.mxu0 %v284
    %1244 = vmatmul.mubr.f32.gmra.mxu0 %v283
    %v1245 = vpop.f32.mrf.mxu0
    %v1246 = vadd.f32 0.0, %v1245
    %v1247 = vpop.f32.mrf.mxu0
    %1248 = vmatprep.mubr.f32.mxu0 %v286
    %1249 = vmatmul.mubr.f32.gmra.mxu0 %v285
    %v1250 = vpop.f32.mrf.mxu0
    %v1251 = vadd.f32 0.0, %v1250
    %v1252 = vpop.f32.mrf.mxu0
    %1253 = vmatprep.mubr.f32.mxu0 %v288
    %1254 = vmatmul.mubr.f32.gmra.mxu0 %v287
    %v1255 = vpop.f32.mrf.mxu0
    %v1256 = vadd.f32 0.0, %v1255
    %v1257 = vpop.f32.mrf.mxu0
    %1258 = vmatprep.mubr.f32.mxu0 %v290
    %1259 = vmatmul.mubr.f32.gmra.mxu0 %v289
    %v1260 = vpop.f32.mrf.mxu0
    %v1261 = vadd.f32 0.0, %v1260
    %v1262 = vpop.f32.mrf.mxu0
    %1263 = vmatprep.mubr.f32.mxu0 %v292
    %1264 = vmatmul.mubr.f32.gmra.mxu0 %v291
    %v1265 = vpop.f32.mrf.mxu0
    %v1266 = vadd.f32 0.0, %v1265
    %v1267 = vpop.f32.mrf.mxu0
    %1268 = vmatprep.mubr.f32.mxu0 %v294
    %1269 = vmatmul.mubr.f32.gmra.mxu0 %v293
    %v1270 = vpop.f32.mrf.mxu0
    %v1271 = vadd.f32 0.0, %v1270
    %v1272 = vpop.f32.mrf.mxu0
    %1273 = vmatprep.mubr.f32.mxu0 %v296
    %1274 = vmatmul.mubr.f32.gmra.mxu0 %v295
    %v1275 = vpop.f32.mrf.mxu0
    %v1276 = vadd.f32 0.0, %v1275
    %v1277 = vpop.f32.mrf.mxu0
    %1278 = vmatprep.mubr.f32.mxu0 %v298
    %1279 = vmatmul.mubr.f32.gmra.mxu0 %v297
    %v1280 = vpop.f32.mrf.mxu0
    %v1281 = vadd.f32 0.0, %v1280
    %v1282 = vpop.f32.mrf.mxu0
    %1283 = vmatprep.mubr.f32.mxu0 %v300
    %1284 = vmatmul.mubr.f32.gmra.mxu0 %v299
    %v1285 = vpop.f32.mrf.mxu0
    %v1286 = vadd.f32 0.0, %v1285
    %v1287 = vpop.f32.mrf.mxu0
    %1288 = vmatprep.mubr.f32.mxu0 %v302
    %1289 = vmatmul.mubr.f32.gmra.mxu0 %v301
    %v1290 = vpop.f32.mrf.mxu0
    %v1291 = vadd.f32 0.0, %v1290
    %v1292 = vpop.f32.mrf.mxu0
    %1293 = vmatprep.mubr.f32.mxu0 %v304
    %1294 = vmatmul.mubr.f32.gmra.mxu0 %v303
    %v1295 = vpop.f32.mrf.mxu0
    %v1296 = vadd.f32 0.0, %v1295
    %v1297 = vpop.f32.mrf.mxu0
    %1298 = vmatprep.mubr.f32.mxu0 %v306
    %1299 = vmatmul.mubr.f32.gmra.mxu0 %v305
    %v1300 = vpop.f32.mrf.mxu0
    %v1301 = vadd.f32 0.0, %v1300
    %v1302 = vpop.f32.mrf.mxu0
    %1303 = vmatprep.mubr.f32.mxu0 %v308
    %1304 = vmatmul.mubr.f32.gmra.mxu0 %v307
    %v1305 = vpop.f32.mrf.mxu0
    %v1306 = vadd.f32 0.0, %v1305
    %v1307 = vpop.f32.mrf.mxu0
    %1308 = vmatprep.mubr.f32.mxu0 %v310
    %1309 = vmatmul.mubr.f32.gmra.mxu0 %v309
    %v1310 = vpop.f32.mrf.mxu0
    %v1311 = vadd.f32 0.0, %v1310
    %v1312 = vpop.f32.mrf.mxu0
    %1313 = vmatprep.mubr.f32.mxu0 %v312
    %1314 = vmatmul.mubr.f32.gmra.mxu0 %v311
    %v1315 = vpop.f32.mrf.mxu0
    %v1316 = vadd.f32 0.0, %v1315
    %v1317 = vpop.f32.mrf.mxu0
    %1318 = vmatprep.mubr.f32.mxu0 %v314
    %1319 = vmatmul.mubr.f32.gmra.mxu0 %v313
    %v1320 = vpop.f32.mrf.mxu0
    %v1321 = vadd.f32 0.0, %v1320
    %v1322 = vpop.f32.mrf.mxu0
    %1323 = vmatprep.mubr.f32.mxu0 %v316
    %1324 = vmatmul.mubr.f32.gmra.mxu0 %v315
    %v1325 = vpop.f32.mrf.mxu0
    %v1326 = vadd.f32 0.0, %v1325
    %v1327 = vpop.f32.mrf.mxu0
    %1328 = vmatprep.mubr.f32.mxu0 %v318
    %1329 = vmatmul.mubr.f32.gmra.mxu0 %v317
    %v1330 = vpop.f32.mrf.mxu0
    %v1331 = vadd.f32 0.0, %v1330
    %v1332 = vpop.f32.mrf.mxu0
    %1333 = vmatprep.mubr.f32.mxu0 %v320
    %1334 = vmatmul.mubr.f32.gmra.mxu0 %v319
    %v1335 = vpop.f32.mrf.mxu0
    %v1336 = vadd.f32 0.0, %v1335
    %v1337 = vpop.f32.mrf.mxu0
    %1338 = vmatprep.mubr.f32.mxu0 %v322
    %1339 = vmatmul.mubr.f32.gmra.mxu0 %v321
    %v1340 = vpop.f32.mrf.mxu0
    %v1341 = vadd.f32 0.0, %v1340
    %v1342 = vpop.f32.mrf.mxu0
    %1343 = vmatprep.mubr.f32.mxu0 %v324
    %1344 = vmatmul.mubr.f32.gmra.mxu0 %v323
    %v1345 = vpop.f32.mrf.mxu0
    %v1346 = vadd.f32 0.0, %v1345
    %v1347 = vpop.f32.mrf.mxu0
    %1348 = vmatprep.mubr.f32.mxu0 %v326
    %1349 = vmatmul.mubr.f32.gmra.mxu0 %v325
    %v1350 = vpop.f32.mrf.mxu0
    %v1351 = vadd.f32 0.0, %v1350
    %v1352 = vpop.f32.mrf.mxu0
    %1353 = vmatprep.mubr.f32.mxu0 %v328
    %1354 = vmatmul.mubr.f32.gmra.mxu0 %v327
    %v1355 = vpop.f32.mrf.mxu0
    %v1356 = vadd.f32 0.0, %v1355
    %v1357 = vpop.f32.mrf.mxu0
    %1358 = vmatprep.mubr.f32.mxu0 %v330
    %1359 = vmatmul.mubr.f32.gmra.mxu0 %v329
    %v1360 = vpop.f32.mrf.mxu0
    %v1361 = vadd.f32 0.0, %v1360
    %v1362 = vpop.f32.mrf.mxu0
    %1363 = vmatprep.mubr.f32.mxu0 %v332
    %1364 = vmatmul.mubr.f32.gmra.mxu0 %v331
    %v1365 = vpop.f32.mrf.mxu0
    %v1366 = vadd.f32 0.0, %v1365
    %v1367 = vpop.f32.mrf.mxu0
    %1368 = vmatprep.mubr.f32.mxu0 %v334
    %1369 = vmatmul.mubr.f32.gmra.mxu0 %v333
    %v1370 = vpop.f32.mrf.mxu0
    %v1371 = vadd.f32 0.0, %v1370
    %v1372 = vpop.f32.mrf.mxu0
    %1373 = vmatprep.mubr.f32.mxu0 %v336
    %1374 = vmatmul.mubr.f32.gmra.mxu0 %v335
    %v1375 = vpop.f32.mrf.mxu0
    %v1376 = vadd.f32 0.0, %v1375
    %v1377 = vpop.f32.mrf.mxu0
    %1378 = vdwg.mxu0
    %v1379 = vld [vmem:[#allocation10] sm:$0xff]
    %v1380 = vld [vmem:[#allocation10 + $0x8] sm:$0xff]
    %v1381 = vld [vmem:[#allocation10 + $0x10] sm:$0xff]
    %v1382 = vld [vmem:[#allocation10 + $0x18] sm:$0xff]
    %v1383 = vld [vmem:[#allocation10 + $0x20] sm:$0xff]
    %v1384 = vld [vmem:[#allocation10 + $0x28] sm:$0xff]
    %v1385 = vld [vmem:[#allocation10 + $0x30] sm:$0xff]
    %v1386 = vld [vmem:[#allocation10 + $0x38] sm:$0xff]
    %v1387 = vld [vmem:[#allocation10 + $0x40] sm:$0xff]
    %v1388 = vld [vmem:[#allocation10 + $0x48] sm:$0xff]
    %v1389 = vld [vmem:[#allocation10 + $0x50] sm:$0xff]
    %v1390 = vld [vmem:[#allocation10 + $0x58] sm:$0xff]
    %v1391 = vld [vmem:[#allocation10 + $0x60] sm:$0xff]
    %v1392 = vld [vmem:[#allocation10 + $0x68] sm:$0xff]
    %v1393 = vld [vmem:[#allocation10 + $0x70] sm:$0xff]
    %v1394 = vld [vmem:[#allocation10 + $0x78] sm:$0xff]
    %v1395 = vld [vmem:[%s7] sm:$0x1]
    %v1397 = vlaneseq
    %v1398 = vshrl.u32 %v1397, 7
    %v1399 = vsub.s32 0, %v1398
    %v1400 = vrot.slane %v1395, %v1399
    %1402 = vmatprep.subr.mxu0 0.0
    %1403 = vmatpush1.msra.mxu0 %v1394
    %1404 = vmatprep.subr.mxu0 0.0
    %1405 = vmatpush1.msra.mxu0 %v1393
    %1406 = vmatprep.subr.mxu0 0.0
    %1407 = vmatpush1.msra.mxu0 %v1392
    %1408 = vmatprep.subr.mxu0 0.0
    %1409 = vmatpush1.msra.mxu0 %v1391
    %1410 = vmatprep.subr.mxu0 0.0
    %1411 = vmatpush1.msra.mxu0 %v1390
    %1412 = vmatprep.subr.mxu0 0.0
    %1413 = vmatpush1.msra.mxu0 %v1389
    %1414 = vmatprep.subr.mxu0 0.0
    %1415 = vmatpush1.msra.mxu0 %v1388
    %1416 = vmatprep.subr.mxu0 0.0
    %1417 = vmatpush1.msra.mxu0 %v1387
    %1418 = vmatprep.subr.mxu0 0.0
    %1419 = vmatpush1.msra.mxu0 %v1386
    %1420 = vmatprep.subr.mxu0 0.0
    %1421 = vmatpush1.msra.mxu0 %v1385
    %1422 = vmatprep.subr.mxu0 0.0
    %1423 = vmatpush1.msra.mxu0 %v1384
    %1424 = vmatprep.subr.mxu0 0.0
    %1425 = vmatpush1.msra.mxu0 %v1383
    %1426 = vmatprep.subr.mxu0 0.0
    %1427 = vmatpush1.msra.mxu0 %v1382
    %1428 = vmatprep.subr.mxu0 0.0
    %1429 = vmatpush1.msra.mxu0 %v1381
    %1430 = vmatprep.subr.mxu0 0.0
    %1431 = vmatpush1.msra.mxu0 %v1380
    %1432 = vmatprep.subr.mxu0 0.0
    %1433 = vmatpush1.msra.mxu0 %v1379
    %1434 = vmatprep.subr.mxu0 0.0
    %1435 = vmatpush2.msra.mxu0 0.0
    %1436 = vmatprep.subr.mxu0 0.0
    %1437 = vmatpush2.msra.mxu0 0.0
    %1438 = vmatprep.subr.mxu0 0.0
    %1439 = vmatpush2.msra.mxu0 0.0
    %1440 = vmatprep.subr.mxu0 0.0
    %1441 = vmatpush2.msra.mxu0 0.0
    %1442 = vmatprep.subr.mxu0 0.0
    %1443 = vmatpush2.msra.mxu0 0.0
    %1444 = vmatprep.subr.mxu0 0.0
    %1445 = vmatpush2.msra.mxu0 0.0
    %1446 = vmatprep.subr.mxu0 0.0
    %1447 = vmatpush2.msra.mxu0 0.0
    %1448 = vmatprep.subr.mxu0 0.0
    %1449 = vmatpush2.msra.mxu0 0.0
    %1450 = vmatprep.subr.mxu0 0.0
    %1451 = vmatpush2.msra.mxu0 0.0
    %1452 = vmatprep.subr.mxu0 0.0
    %1453 = vmatpush2.msra.mxu0 0.0
    %1454 = vmatprep.subr.mxu0 0.0
    %1455 = vmatpush2.msra.mxu0 0.0
    %1456 = vmatprep.subr.mxu0 0.0
    %1457 = vmatpush2.msra.mxu0 0.0
    %1458 = vmatprep.subr.mxu0 0.0
    %1459 = vmatpush2.msra.mxu0 0.0
    %1460 = vmatprep.subr.mxu0 0.0
    %1461 = vmatpush2.msra.mxu0 0.0
    %1462 = vmatprep.subr.mxu0 0.0
    %1463 = vmatpush2.msra.mxu0 0.0
    %1464 = vmatprep.subr.mxu0 0.0
    %1465 = vmatpush2.msra.mxu0 0.0
    %1466 = vmatprep.mubr.f32.mxu0 0.0
    %1467 = vmatmul.mubr.f32.gmra.mxu0 %v1221
    %v1468 = vpop.f32.mrf.mxu0
    %v1469 = vadd.f32 %v1400, %v1468
    %v1470 = vpop.f32.mrf.mxu0
    %1471 = vmatprep.mubr.f32.mxu0 0.0
    %1472 = vmatmul.mubr.f32.gmra.mxu0 %v1226
    %v1473 = vpop.f32.mrf.mxu0
    %v1474 = vadd.f32 %v1400, %v1473
    %v1475 = vpop.f32.mrf.mxu0
    %1476 = vmatprep.mubr.f32.mxu0 0.0
    %1477 = vmatmul.mubr.f32.gmra.mxu0 %v1231
    %v1478 = vpop.f32.mrf.mxu0
    %v1479 = vadd.f32 %v1400, %v1478
    %v1480 = vpop.f32.mrf.mxu0
    %1481 = vmatprep.mubr.f32.mxu0 0.0
    %1482 = vmatmul.mubr.f32.gmra.mxu0 %v1236
    %v1483 = vpop.f32.mrf.mxu0
    %v1484 = vadd.f32 %v1400, %v1483
    %v1485 = vpop.f32.mrf.mxu0
    %1486 = vmatprep.mubr.f32.mxu0 0.0
    %1487 = vmatmul.mubr.f32.gmra.mxu0 %v1241
    %v1488 = vpop.f32.mrf.mxu0
    %v1489 = vadd.f32 %v1400, %v1488
    %v1490 = vpop.f32.mrf.mxu0
    %1491 = vmatprep.mubr.f32.mxu0 0.0
    %1492 = vmatmul.mubr.f32.gmra.mxu0 %v1246
    %v1493 = vpop.f32.mrf.mxu0
    %v1494 = vadd.f32 %v1400, %v1493
    %v1495 = vpop.f32.mrf.mxu0
    %1496 = vmatprep.mubr.f32.mxu0 0.0
    %1497 = vmatmul.mubr.f32.gmra.mxu0 %v1251
    %v1498 = vpop.f32.mrf.mxu0
    %v1499 = vadd.f32 %v1400, %v1498
    %v1500 = vpop.f32.mrf.mxu0
    %1501 = vmatprep.mubr.f32.mxu0 0.0
    %1502 = vmatmul.mubr.f32.gmra.mxu0 %v1256
    %v1503 = vpop.f32.mrf.mxu0
    %v1504 = vadd.f32 %v1400, %v1503
    %v1505 = vpop.f32.mrf.mxu0
    %1506 = vmatprep.mubr.f32.mxu0 0.0
    %1507 = vmatmul.mubr.f32.gmra.mxu0 %v1261
    %v1508 = vpop.f32.mrf.mxu0
    %v1509 = vadd.f32 %v1400, %v1508
    %v1510 = vpop.f32.mrf.mxu0
    %1511 = vmatprep.mubr.f32.mxu0 0.0
    %1512 = vmatmul.mubr.f32.gmra.mxu0 %v1266
    %v1513 = vpop.f32.mrf.mxu0
    %v1514 = vadd.f32 %v1400, %v1513
    %v1515 = vpop.f32.mrf.mxu0
    %1516 = vmatprep.mubr.f32.mxu0 0.0
    %1517 = vmatmul.mubr.f32.gmra.mxu0 %v1271
    %v1518 = vpop.f32.mrf.mxu0
    %v1519 = vadd.f32 %v1400, %v1518
    %v1520 = vpop.f32.mrf.mxu0
    %1521 = vmatprep.mubr.f32.mxu0 0.0
    %1522 = vmatmul.mubr.f32.gmra.mxu0 %v1276
    %v1523 = vpop.f32.mrf.mxu0
    %v1524 = vadd.f32 %v1400, %v1523
    %v1525 = vpop.f32.mrf.mxu0
    %1526 = vmatprep.mubr.f32.mxu0 0.0
    %1527 = vmatmul.mubr.f32.gmra.mxu0 %v1281
    %v1528 = vpop.f32.mrf.mxu0
    %v1529 = vadd.f32 %v1400, %v1528
    %v1530 = vpop.f32.mrf.mxu0
    %1531 = vmatprep.mubr.f32.mxu0 0.0
    %1532 = vmatmul.mubr.f32.gmra.mxu0 %v1286
    %v1533 = vpop.f32.mrf.mxu0
    %v1534 = vadd.f32 %v1400, %v1533
    %v1535 = vpop.f32.mrf.mxu0
    %1536 = vmatprep.mubr.f32.mxu0 0.0
    %1537 = vmatmul.mubr.f32.gmra.mxu0 %v1291
    %v1538 = vpop.f32.mrf.mxu0
    %v1539 = vadd.f32 %v1400, %v1538
    %v1540 = vpop.f32.mrf.mxu0
    %1541 = vmatprep.mubr.f32.mxu0 0.0
    %1542 = vmatmul.mubr.f32.gmra.mxu0 %v1296
    %v1543 = vpop.f32.mrf.mxu0
    %v1544 = vadd.f32 %v1400, %v1543
    %v1545 = vpop.f32.mrf.mxu0
    %1546 = vmatprep.mubr.f32.mxu0 0.0
    %1547 = vmatmul.mubr.f32.gmra.mxu0 %v1301
    %v1548 = vpop.f32.mrf.mxu0
    %v1549 = vadd.f32 %v1400, %v1548
    %v1550 = vpop.f32.mrf.mxu0
    %1551 = vmatprep.mubr.f32.mxu0 0.0
    %1552 = vmatmul.mubr.f32.gmra.mxu0 %v1306
    %v1553 = vpop.f32.mrf.mxu0
    %v1554 = vadd.f32 %v1400, %v1553
    %v1555 = vpop.f32.mrf.mxu0
    %1556 = vmatprep.mubr.f32.mxu0 0.0
    %1557 = vmatmul.mubr.f32.gmra.mxu0 %v1311
    %v1558 = vpop.f32.mrf.mxu0
    %v1559 = vadd.f32 %v1400, %v1558
    %v1560 = vpop.f32.mrf.mxu0
    %1561 = vmatprep.mubr.f32.mxu0 0.0
    %1562 = vmatmul.mubr.f32.gmra.mxu0 %v1316
    %v1563 = vpop.f32.mrf.mxu0
    %v1564 = vadd.f32 %v1400, %v1563
    %v1565 = vpop.f32.mrf.mxu0
    %1566 = vmatprep.mubr.f32.mxu0 0.0
    %1567 = vmatmul.mubr.f32.gmra.mxu0 %v1321
    %v1568 = vpop.f32.mrf.mxu0
    %v1569 = vadd.f32 %v1400, %v1568
    %v1570 = vpop.f32.mrf.mxu0
    %1571 = vmatprep.mubr.f32.mxu0 0.0
    %1572 = vmatmul.mubr.f32.gmra.mxu0 %v1326
    %v1573 = vpop.f32.mrf.mxu0
    %v1574 = vadd.f32 %v1400, %v1573
    %v1575 = vpop.f32.mrf.mxu0
    %1576 = vmatprep.mubr.f32.mxu0 0.0
    %1577 = vmatmul.mubr.f32.gmra.mxu0 %v1331
    %v1578 = vpop.f32.mrf.mxu0
    %v1579 = vadd.f32 %v1400, %v1578
    %v1580 = vpop.f32.mrf.mxu0
    %1581 = vmatprep.mubr.f32.mxu0 0.0
    %1582 = vmatmul.mubr.f32.gmra.mxu0 %v1336
    %v1583 = vpop.f32.mrf.mxu0
    %v1584 = vadd.f32 %v1400, %v1583
    %v1585 = vpop.f32.mrf.mxu0
    %1586 = vmatprep.mubr.f32.mxu0 0.0
    %1587 = vmatmul.mubr.f32.gmra.mxu0 %v1341
    %v1588 = vpop.f32.mrf.mxu0
    %v1589 = vadd.f32 %v1400, %v1588
    %v1590 = vpop.f32.mrf.mxu0
    %1591 = vmatprep.mubr.f32.mxu0 0.0
    %1592 = vmatmul.mubr.f32.gmra.mxu0 %v1346
    %v1593 = vpop.f32.mrf.mxu0
    %v1594 = vadd.f32 %v1400, %v1593
    %v1595 = vpop.f32.mrf.mxu0
    %1596 = vmatprep.mubr.f32.mxu0 0.0
    %1597 = vmatmul.mubr.f32.gmra.mxu0 %v1351
    %v1598 = vpop.f32.mrf.mxu0
    %v1599 = vadd.f32 %v1400, %v1598
    %v1600 = vpop.f32.mrf.mxu0
    %1601 = vmatprep.mubr.f32.mxu0 0.0
    %1602 = vmatmul.mubr.f32.gmra.mxu0 %v1356
    %v1603 = vpop.f32.mrf.mxu0
    %v1604 = vadd.f32 %v1400, %v1603
    %v1605 = vpop.f32.mrf.mxu0
    %1606 = vmatprep.mubr.f32.mxu0 0.0
    %1607 = vmatmul.mubr.f32.gmra.mxu0 %v1361
    %v1608 = vpop.f32.mrf.mxu0
    %v1609 = vadd.f32 %v1400, %v1608
    %v1610 = vpop.f32.mrf.mxu0
    %1611 = vmatprep.mubr.f32.mxu0 0.0
    %1612 = vmatmul.mubr.f32.gmra.mxu0 %v1366
    %v1613 = vpop.f32.mrf.mxu0
    %v1614 = vadd.f32 %v1400, %v1613
    %v1615 = vpop.f32.mrf.mxu0
    %1616 = vmatprep.mubr.f32.mxu0 0.0
    %1617 = vmatmul.mubr.f32.gmra.mxu0 %v1371
    %v1618 = vpop.f32.mrf.mxu0
    %v1619 = vadd.f32 %v1400, %v1618
    %v1620 = vpop.f32.mrf.mxu0
    %1621 = vmatprep.mubr.f32.mxu0 0.0
    %1622 = vmatmul.mubr.f32.gmra.mxu0 %v1376
    %v1623 = vpop.f32.mrf.mxu0
    %v1624 = vadd.f32 %v1400, %v1623
    %v1625 = vpop.f32.mrf.mxu0
    %1626 = vdwg.mxu0
    %v1627 = vmax.f32 %v1469, 0.0
    %v1628 = vmax.f32 %v1474, 0.0
    %v1629 = vmax.f32 %v1479, 0.0
    %v1630 = vmax.f32 %v1484, 0.0
    %v1631 = vmax.f32 %v1489, 0.0
    %v1632 = vmax.f32 %v1494, 0.0
    %v1633 = vmax.f32 %v1499, 0.0
    %v1634 = vmax.f32 %v1504, 0.0
    %v1635 = vmax.f32 %v1509, 0.0
    %v1636 = vmax.f32 %v1514, 0.0
    %v1637 = vmax.f32 %v1519, 0.0
    %v1638 = vmax.f32 %v1524, 0.0
    %v1639 = vmax.f32 %v1529, 0.0
    %v1640 = vmax.f32 %v1534, 0.0
    %v1641 = vmax.f32 %v1539, 0.0
    %v1642 = vmax.f32 %v1544, 0.0
    %v1643 = vmax.f32 %v1549, 0.0
    %v1644 = vmax.f32 %v1554, 0.0
    %v1645 = vmax.f32 %v1559, 0.0
    %v1646 = vmax.f32 %v1564, 0.0
    %v1647 = vmax.f32 %v1569, 0.0
    %v1648 = vmax.f32 %v1574, 0.0
    %v1649 = vmax.f32 %v1579, 0.0
    %v1650 = vmax.f32 %v1584, 0.0
    %v1651 = vmax.f32 %v1589, 0.0
    %v1652 = vmax.f32 %v1594, 0.0
    %v1653 = vmax.f32 %v1599, 0.0
    %v1654 = vmax.f32 %v1604, 0.0
    %v1655 = vmax.f32 %v1609, 0.0
    %v1656 = vmax.f32 %v1614, 0.0
    %v1657 = vmax.f32 %v1619, 0.0
    %v1658 = vmax.f32 %v1624, 0.0
    %v1659 = vld [vmem:[#allocation11] sm:$0xff]
    %v1660 = vld [vmem:[#allocation11 + $0x8] sm:$0xff]
    %v1661 = vld [vmem:[#allocation11 + $0x10] sm:$0xff]
    %v1662 = vld [vmem:[#allocation11 + $0x18] sm:$0xff]
    %v1663 = vld [vmem:[#allocation11 + $0x20] sm:$0xff]
    %v1664 = vld [vmem:[#allocation11 + $0x28] sm:$0xff]
    %v1665 = vld [vmem:[#allocation11 + $0x30] sm:$0xff]
    %v1666 = vld [vmem:[#allocation11 + $0x38] sm:$0xff]
    %v1667 = vld [vmem:[#allocation11 + $0x40] sm:$0xff]
    %v1668 = vld [vmem:[#allocation11 + $0x48] sm:$0xff]
    %v1669 = vld [vmem:[#allocation11 + $0x50] sm:$0xff]
    %v1670 = vld [vmem:[#allocation11 + $0x58] sm:$0xff]
    %v1671 = vld [vmem:[#allocation11 + $0x60] sm:$0xff]
    %v1672 = vld [vmem:[#allocation11 + $0x68] sm:$0xff]
    %v1673 = vld [vmem:[#allocation11 + $0x70] sm:$0xff]
    %v1674 = vld [vmem:[#allocation11 + $0x78] sm:$0xff]
    %v1675 = vld [vmem:[%s9] sm:$0x1]
    %v1677 = vlaneseq
    %v1678 = vshrl.u32 %v1677, 7
    %v1679 = vsub.s32 0, %v1678
    %v1680 = vrot.slane %v1675, %v1679
    %1682 = vmatprep.subr.mxu0 0.0
    %1683 = vmatpush1.msra.mxu0 %v1674
    %1684 = vmatprep.subr.mxu0 0.0
    %1685 = vmatpush1.msra.mxu0 %v1673
    %1686 = vmatprep.subr.mxu0 0.0
    %1687 = vmatpush1.msra.mxu0 %v1672
    %1688 = vmatprep.subr.mxu0 0.0
    %1689 = vmatpush1.msra.mxu0 %v1671
    %1690 = vmatprep.subr.mxu0 0.0
    %1691 = vmatpush1.msra.mxu0 %v1670
    %1692 = vmatprep.subr.mxu0 0.0
    %1693 = vmatpush1.msra.mxu0 %v1669
    %1694 = vmatprep.subr.mxu0 0.0
    %1695 = vmatpush1.msra.mxu0 %v1668
    %1696 = vmatprep.subr.mxu0 0.0
    %1697 = vmatpush1.msra.mxu0 %v1667
    %1698 = vmatprep.subr.mxu0 0.0
    %1699 = vmatpush1.msra.mxu0 %v1666
    %1700 = vmatprep.subr.mxu0 0.0
    %1701 = vmatpush1.msra.mxu0 %v1665
    %1702 = vmatprep.subr.mxu0 0.0
    %1703 = vmatpush1.msra.mxu0 %v1664
    %1704 = vmatprep.subr.mxu0 0.0
    %1705 = vmatpush1.msra.mxu0 %v1663
    %1706 = vmatprep.subr.mxu0 0.0
    %1707 = vmatpush1.msra.mxu0 %v1662
    %1708 = vmatprep.subr.mxu0 0.0
    %1709 = vmatpush1.msra.mxu0 %v1661
    %1710 = vmatprep.subr.mxu0 0.0
    %1711 = vmatpush1.msra.mxu0 %v1660
    %1712 = vmatprep.subr.mxu0 0.0
    %1713 = vmatpush1.msra.mxu0 %v1659
    %1714 = vmatprep.subr.mxu0 0.0
    %1715 = vmatpush2.msra.mxu0 0.0
    %1716 = vmatprep.subr.mxu0 0.0
    %1717 = vmatpush2.msra.mxu0 0.0
    %1718 = vmatprep.subr.mxu0 0.0
    %1719 = vmatpush2.msra.mxu0 0.0
    %1720 = vmatprep.subr.mxu0 0.0
    %1721 = vmatpush2.msra.mxu0 0.0
    %1722 = vmatprep.subr.mxu0 0.0
    %1723 = vmatpush2.msra.mxu0 0.0
    %1724 = vmatprep.subr.mxu0 0.0
    %1725 = vmatpush2.msra.mxu0 0.0
    %1726 = vmatprep.subr.mxu0 0.0
    %1727 = vmatpush2.msra.mxu0 0.0
    %1728 = vmatprep.subr.mxu0 0.0
    %1729 = vmatpush2.msra.mxu0 0.0
    %1730 = vmatprep.subr.mxu0 0.0
    %1731 = vmatpush2.msra.mxu0 0.0
    %1732 = vmatprep.subr.mxu0 0.0
    %1733 = vmatpush2.msra.mxu0 0.0
    %1734 = vmatprep.subr.mxu0 0.0
    %1735 = vmatpush2.msra.mxu0 0.0
    %1736 = vmatprep.subr.mxu0 0.0
    %1737 = vmatpush2.msra.mxu0 0.0
    %1738 = vmatprep.subr.mxu0 0.0
    %1739 = vmatpush2.msra.mxu0 0.0
    %1740 = vmatprep.subr.mxu0 0.0
    %1741 = vmatpush2.msra.mxu0 0.0
    %1742 = vmatprep.subr.mxu0 0.0
    %1743 = vmatpush2.msra.mxu0 0.0
    %1744 = vmatprep.subr.mxu0 0.0
    %1745 = vmatpush2.msra.mxu0 0.0
    %1746 = vmatprep.mubr.f32.mxu0 0.0
    %1747 = vmatmul.mubr.f32.gmra.mxu0 %v1627
    %v1748 = vpop.f32.mrf.mxu0
    %v1749 = vadd.f32 %v1680, %v1748
    %v1750 = vpop.f32.mrf.mxu0
    %1751 = vmatprep.mubr.f32.mxu0 0.0
    %1752 = vmatmul.mubr.f32.gmra.mxu0 %v1628
    %v1753 = vpop.f32.mrf.mxu0
    %v1754 = vadd.f32 %v1680, %v1753
    %v1755 = vpop.f32.mrf.mxu0
    %1756 = vmatprep.mubr.f32.mxu0 0.0
    %1757 = vmatmul.mubr.f32.gmra.mxu0 %v1629
    %v1758 = vpop.f32.mrf.mxu0
    %v1759 = vadd.f32 %v1680, %v1758
    %v1760 = vpop.f32.mrf.mxu0
    %1761 = vmatprep.mubr.f32.mxu0 0.0
    %1762 = vmatmul.mubr.f32.gmra.mxu0 %v1630
    %v1763 = vpop.f32.mrf.mxu0
    %v1764 = vadd.f32 %v1680, %v1763
    %v1765 = vpop.f32.mrf.mxu0
    %1766 = vmatprep.mubr.f32.mxu0 0.0
    %1767 = vmatmul.mubr.f32.gmra.mxu0 %v1631
    %v1768 = vpop.f32.mrf.mxu0
    %v1769 = vadd.f32 %v1680, %v1768
    %v1770 = vpop.f32.mrf.mxu0
    %1771 = vmatprep.mubr.f32.mxu0 0.0
    %1772 = vmatmul.mubr.f32.gmra.mxu0 %v1632
    %v1773 = vpop.f32.mrf.mxu0
    %v1774 = vadd.f32 %v1680, %v1773
    %v1775 = vpop.f32.mrf.mxu0
    %1776 = vmatprep.mubr.f32.mxu0 0.0
    %1777 = vmatmul.mubr.f32.gmra.mxu0 %v1633
    %v1778 = vpop.f32.mrf.mxu0
    %v1779 = vadd.f32 %v1680, %v1778
    %v1780 = vpop.f32.mrf.mxu0
    %1781 = vmatprep.mubr.f32.mxu0 0.0
    %1782 = vmatmul.mubr.f32.gmra.mxu0 %v1634
    %v1783 = vpop.f32.mrf.mxu0
    %v1784 = vadd.f32 %v1680, %v1783
    %v1785 = vpop.f32.mrf.mxu0
    %1786 = vmatprep.mubr.f32.mxu0 0.0
    %1787 = vmatmul.mubr.f32.gmra.mxu0 %v1635
    %v1788 = vpop.f32.mrf.mxu0
    %v1789 = vadd.f32 %v1680, %v1788
    %v1790 = vpop.f32.mrf.mxu0
    %1791 = vmatprep.mubr.f32.mxu0 0.0
    %1792 = vmatmul.mubr.f32.gmra.mxu0 %v1636
    %v1793 = vpop.f32.mrf.mxu0
    %v1794 = vadd.f32 %v1680, %v1793
    %v1795 = vpop.f32.mrf.mxu0
    %1796 = vmatprep.mubr.f32.mxu0 0.0
    %1797 = vmatmul.mubr.f32.gmra.mxu0 %v1637
    %v1798 = vpop.f32.mrf.mxu0
    %v1799 = vadd.f32 %v1680, %v1798
    %v1800 = vpop.f32.mrf.mxu0
    %1801 = vmatprep.mubr.f32.mxu0 0.0
    %1802 = vmatmul.mubr.f32.gmra.mxu0 %v1638
    %v1803 = vpop.f32.mrf.mxu0
    %v1804 = vadd.f32 %v1680, %v1803
    %v1805 = vpop.f32.mrf.mxu0
    %1806 = vmatprep.mubr.f32.mxu0 0.0
    %1807 = vmatmul.mubr.f32.gmra.mxu0 %v1639
    %v1808 = vpop.f32.mrf.mxu0
    %v1809 = vadd.f32 %v1680, %v1808
    %v1810 = vpop.f32.mrf.mxu0
    %1811 = vmatprep.mubr.f32.mxu0 0.0
    %1812 = vmatmul.mubr.f32.gmra.mxu0 %v1640
    %v1813 = vpop.f32.mrf.mxu0
    %v1814 = vadd.f32 %v1680, %v1813
    %v1815 = vpop.f32.mrf.mxu0
    %1816 = vmatprep.mubr.f32.mxu0 0.0
    %1817 = vmatmul.mubr.f32.gmra.mxu0 %v1641
    %v1818 = vpop.f32.mrf.mxu0
    %v1819 = vadd.f32 %v1680, %v1818
    %v1820 = vpop.f32.mrf.mxu0
    %1821 = vmatprep.mubr.f32.mxu0 0.0
    %1822 = vmatmul.mubr.f32.gmra.mxu0 %v1642
    %v1823 = vpop.f32.mrf.mxu0
    %v1824 = vadd.f32 %v1680, %v1823
    %v1825 = vpop.f32.mrf.mxu0
    %1826 = vmatprep.mubr.f32.mxu0 0.0
    %1827 = vmatmul.mubr.f32.gmra.mxu0 %v1643
    %v1828 = vpop.f32.mrf.mxu0
    %v1829 = vadd.f32 %v1680, %v1828
    %v1830 = vpop.f32.mrf.mxu0
    %1831 = vmatprep.mubr.f32.mxu0 0.0
    %1832 = vmatmul.mubr.f32.gmra.mxu0 %v1644
    %v1833 = vpop.f32.mrf.mxu0
    %v1834 = vadd.f32 %v1680, %v1833
    %v1835 = vpop.f32.mrf.mxu0
    %1836 = vmatprep.mubr.f32.mxu0 0.0
    %1837 = vmatmul.mubr.f32.gmra.mxu0 %v1645
    %v1838 = vpop.f32.mrf.mxu0
    %v1839 = vadd.f32 %v1680, %v1838
    %v1840 = vpop.f32.mrf.mxu0
    %1841 = vmatprep.mubr.f32.mxu0 0.0
    %1842 = vmatmul.mubr.f32.gmra.mxu0 %v1646
    %v1843 = vpop.f32.mrf.mxu0
    %v1844 = vadd.f32 %v1680, %v1843
    %v1845 = vpop.f32.mrf.mxu0
    %1846 = vmatprep.mubr.f32.mxu0 0.0
    %1847 = vmatmul.mubr.f32.gmra.mxu0 %v1647
    %v1848 = vpop.f32.mrf.mxu0
    %v1849 = vadd.f32 %v1680, %v1848
    %v1850 = vpop.f32.mrf.mxu0
    %1851 = vmatprep.mubr.f32.mxu0 0.0
    %1852 = vmatmul.mubr.f32.gmra.mxu0 %v1648
    %v1853 = vpop.f32.mrf.mxu0
    %v1854 = vadd.f32 %v1680, %v1853
    %v1855 = vpop.f32.mrf.mxu0
    %1856 = vmatprep.mubr.f32.mxu0 0.0
    %1857 = vmatmul.mubr.f32.gmra.mxu0 %v1649
    %v1858 = vpop.f32.mrf.mxu0
    %v1859 = vadd.f32 %v1680, %v1858
    %v1860 = vpop.f32.mrf.mxu0
    %1861 = vmatprep.mubr.f32.mxu0 0.0
    %1862 = vmatmul.mubr.f32.gmra.mxu0 %v1650
    %v1863 = vpop.f32.mrf.mxu0
    %v1864 = vadd.f32 %v1680, %v1863
    %v1865 = vpop.f32.mrf.mxu0
    %1866 = vmatprep.mubr.f32.mxu0 0.0
    %1867 = vmatmul.mubr.f32.gmra.mxu0 %v1651
    %v1868 = vpop.f32.mrf.mxu0
    %v1869 = vadd.f32 %v1680, %v1868
    %v1870 = vpop.f32.mrf.mxu0
    %1871 = vmatprep.mubr.f32.mxu0 0.0
    %1872 = vmatmul.mubr.f32.gmra.mxu0 %v1652
    %v1873 = vpop.f32.mrf.mxu0
    %v1874 = vadd.f32 %v1680, %v1873
    %v1875 = vpop.f32.mrf.mxu0
    %1876 = vmatprep.mubr.f32.mxu0 0.0
    %1877 = vmatmul.mubr.f32.gmra.mxu0 %v1653
    %v1878 = vpop.f32.mrf.mxu0
    %v1879 = vadd.f32 %v1680, %v1878
    %v1880 = vpop.f32.mrf.mxu0
    %1881 = vmatprep.mubr.f32.mxu0 0.0
    %1882 = vmatmul.mubr.f32.gmra.mxu0 %v1654
    %v1883 = vpop.f32.mrf.mxu0
    %v1884 = vadd.f32 %v1680, %v1883
    %v1885 = vpop.f32.mrf.mxu0
    %1886 = vmatprep.mubr.f32.mxu0 0.0
    %1887 = vmatmul.mubr.f32.gmra.mxu0 %v1655
    %v1888 = vpop.f32.mrf.mxu0
    %v1889 = vadd.f32 %v1680, %v1888
    %v1890 = vpop.f32.mrf.mxu0
    %1891 = vmatprep.mubr.f32.mxu0 0.0
    %1892 = vmatmul.mubr.f32.gmra.mxu0 %v1656
    %v1893 = vpop.f32.mrf.mxu0
    %v1894 = vadd.f32 %v1680, %v1893
    %v1895 = vpop.f32.mrf.mxu0
    %1896 = vmatprep.mubr.f32.mxu0 0.0
    %1897 = vmatmul.mubr.f32.gmra.mxu0 %v1657
    %v1898 = vpop.f32.mrf.mxu0
    %v1899 = vadd.f32 %v1680, %v1898
    %v1900 = vpop.f32.mrf.mxu0
    %1901 = vmatprep.mubr.f32.mxu0 0.0
    %1902 = vmatmul.mubr.f32.gmra.mxu0 %v1658
    %v1903 = vpop.f32.mrf.mxu0
    %v1904 = vadd.f32 %v1680, %v1903
    %v1905 = vpop.f32.mrf.mxu0
    %1906 = vdwg.mxu0
    %v1907 = vmax.f32 %v1749, 0.0
    %v1908 = vmax.f32 %v1754, 0.0
    %v1909 = vmax.f32 %v1759, 0.0
    %v1910 = vmax.f32 %v1764, 0.0
    %v1911 = vmax.f32 %v1769, 0.0
    %v1912 = vmax.f32 %v1774, 0.0
    %v1913 = vmax.f32 %v1779, 0.0
    %v1914 = vmax.f32 %v1784, 0.0
    %v1915 = vmax.f32 %v1789, 0.0
    %v1916 = vmax.f32 %v1794, 0.0
    %v1917 = vmax.f32 %v1799, 0.0
    %v1918 = vmax.f32 %v1804, 0.0
    %v1919 = vmax.f32 %v1809, 0.0
    %v1920 = vmax.f32 %v1814, 0.0
    %v1921 = vmax.f32 %v1819, 0.0
    %v1922 = vmax.f32 %v1824, 0.0
    %v1923 = vmax.f32 %v1829, 0.0
    %v1924 = vmax.f32 %v1834, 0.0
    %v1925 = vmax.f32 %v1839, 0.0
    %v1926 = vmax.f32 %v1844, 0.0
    %v1927 = vmax.f32 %v1849, 0.0
    %v1928 = vmax.f32 %v1854, 0.0
    %v1929 = vmax.f32 %v1859, 0.0
    %v1930 = vmax.f32 %v1864, 0.0
    %v1931 = vmax.f32 %v1869, 0.0
    %v1932 = vmax.f32 %v1874, 0.0
    %v1933 = vmax.f32 %v1879, 0.0
    %v1934 = vmax.f32 %v1884, 0.0
    %v1935 = vmax.f32 %v1889, 0.0
    %v1936 = vmax.f32 %v1894, 0.0
    %v1937 = vmax.f32 %v1899, 0.0
    %v1938 = vmax.f32 %v1904, 0.0
    %1939 = vmatprep.subr.mxu0 0.0
    %1940 = vmatpush1.msra.mxu0 %v1922
    %1941 = vmatprep.subr.mxu0 0.0
    %1942 = vmatpush1.msra.mxu0 %v1921
    %1943 = vmatprep.subr.mxu0 0.0
    %1944 = vmatpush1.msra.mxu0 %v1920
    %1945 = vmatprep.subr.mxu0 0.0
    %1946 = vmatpush1.msra.mxu0 %v1919
    %1947 = vmatprep.subr.mxu0 0.0
    %1948 = vmatpush1.msra.mxu0 %v1918
    %1949 = vmatprep.subr.mxu0 0.0
    %1950 = vmatpush1.msra.mxu0 %v1917
    %1951 = vmatprep.subr.mxu0 0.0
    %1952 = vmatpush1.msra.mxu0 %v1916
    %1953 = vmatprep.subr.mxu0 0.0
    %1954 = vmatpush1.msra.mxu0 %v1915
    %1955 = vmatprep.subr.mxu0 0.0
    %1956 = vmatpush1.msra.mxu0 %v1914
    %1957 = vmatprep.subr.mxu0 0.0
    %1958 = vmatpush1.msra.mxu0 %v1913
    %1959 = vmatprep.subr.mxu0 0.0
    %1960 = vmatpush1.msra.mxu0 %v1912
    %1961 = vmatprep.subr.mxu0 0.0
    %1962 = vmatpush1.msra.mxu0 %v1911
    %1963 = vmatprep.subr.mxu0 0.0
    %1964 = vmatpush1.msra.mxu0 %v1910
    %1965 = vmatprep.subr.mxu0 0.0
    %1966 = vmatpush1.msra.mxu0 %v1909
    %1967 = vmatprep.subr.mxu0 0.0
    %1968 = vmatpush1.msra.mxu0 %v1908
    %1969 = vmatprep.subr.mxu0 0.0
    %1970 = vmatpush1.msra.mxu0 %v1907
    %1971 = vmatprep.subr.mxu0 0.0
    %1972 = vmatpush2.msra.mxu0 %v1938
    %1973 = vmatprep.subr.mxu0 0.0
    %1974 = vmatpush2.msra.mxu0 %v1937
    %1975 = vmatprep.subr.mxu0 0.0
    %1976 = vmatpush2.msra.mxu0 %v1936
    %1977 = vmatprep.subr.mxu0 0.0
    %1978 = vmatpush2.msra.mxu0 %v1935
    %1979 = vmatprep.subr.mxu0 0.0
    %1980 = vmatpush2.msra.mxu0 %v1934
    %1981 = vmatprep.subr.mxu0 0.0
    %1982 = vmatpush2.msra.mxu0 %v1933
    %1983 = vmatprep.subr.mxu0 0.0
    %1984 = vmatpush2.msra.mxu0 %v1932
    %1985 = vmatprep.subr.mxu0 0.0
    %1986 = vmatpush2.msra.mxu0 %v1931
    %1987 = vmatprep.subr.mxu0 0.0
    %1988 = vmatpush2.msra.mxu0 %v1930
    %1989 = vmatprep.subr.mxu0 0.0
    %1990 = vmatpush2.msra.mxu0 %v1929
    %1991 = vmatprep.subr.mxu0 0.0
    %1992 = vmatpush2.msra.mxu0 %v1928
    %1993 = vmatprep.subr.mxu0 0.0
    %1994 = vmatpush2.msra.mxu0 %v1927
    %1995 = vmatprep.subr.mxu0 0.0
    %1996 = vmatpush2.msra.mxu0 %v1926
    %1997 = vmatprep.subr.mxu0 0.0
    %1998 = vmatpush2.msra.mxu0 %v1925
    %1999 = vmatprep.subr.mxu0 0.0
    %2000 = vmatpush2.msra.mxu0 %v1924
    %2001 = vmatprep.subr.mxu0 0.0
    %2002 = vmatpush2.msra.mxu0 %v1923
    %2003 = vmatprep.mubr.f32.mxu0 %v274
    %2004 = vmatmul.mubr.f32.gmra.mxu0 %v273
    %v2005 = vpop.f32.mrf.mxu0
    %v2006 = vadd.f32 0.0, %v2005
    %v2007 = vpop.f32.mrf.mxu0
    %2008 = vmatprep.mubr.f32.mxu0 %v276
    %2009 = vmatmul.mubr.f32.gmra.mxu0 %v275
    %v2010 = vpop.f32.mrf.mxu0
    %v2011 = vadd.f32 0.0, %v2010
    %v2012 = vpop.f32.mrf.mxu0
    %2013 = vmatprep.mubr.f32.mxu0 %v278
    %2014 = vmatmul.mubr.f32.gmra.mxu0 %v277
    %v2015 = vpop.f32.mrf.mxu0
    %v2016 = vadd.f32 0.0, %v2015
    %v2017 = vpop.f32.mrf.mxu0
    %2018 = vmatprep.mubr.f32.mxu0 %v280
    %2019 = vmatmul.mubr.f32.gmra.mxu0 %v279
    %v2020 = vpop.f32.mrf.mxu0
    %v2021 = vadd.f32 0.0, %v2020
    %v2022 = vpop.f32.mrf.mxu0
    %2023 = vmatprep.mubr.f32.mxu0 %v282
    %2024 = vmatmul.mubr.f32.gmra.mxu0 %v281
    %v2025 = vpop.f32.mrf.mxu0
    %v2026 = vadd.f32 0.0, %v2025
    %v2027 = vpop.f32.mrf.mxu0
    %2028 = vmatprep.mubr.f32.mxu0 %v284
    %2029 = vmatmul.mubr.f32.gmra.mxu0 %v283
    %v2030 = vpop.f32.mrf.mxu0
    %v2031 = vadd.f32 0.0, %v2030
    %v2032 = vpop.f32.mrf.mxu0
    %2033 = vmatprep.mubr.f32.mxu0 %v286
    %2034 = vmatmul.mubr.f32.gmra.mxu0 %v285
    %v2035 = vpop.f32.mrf.mxu0
    %v2036 = vadd.f32 0.0, %v2035
    %v2037 = vpop.f32.mrf.mxu0
    %2038 = vmatprep.mubr.f32.mxu0 %v288
    %2039 = vmatmul.mubr.f32.gmra.mxu0 %v287
    %v2040 = vpop.f32.mrf.mxu0
    %v2041 = vadd.f32 0.0, %v2040
    %v2042 = vpop.f32.mrf.mxu0
    %2043 = vmatprep.mubr.f32.mxu0 %v290
    %2044 = vmatmul.mubr.f32.gmra.mxu0 %v289
    %v2045 = vpop.f32.mrf.mxu0
    %v2046 = vadd.f32 0.0, %v2045
    %v2047 = vpop.f32.mrf.mxu0
    %2048 = vmatprep.mubr.f32.mxu0 %v292
    %2049 = vmatmul.mubr.f32.gmra.mxu0 %v291
    %v2050 = vpop.f32.mrf.mxu0
    %v2051 = vadd.f32 0.0, %v2050
    %v2052 = vpop.f32.mrf.mxu0
    %2053 = vmatprep.mubr.f32.mxu0 %v294
    %2054 = vmatmul.mubr.f32.gmra.mxu0 %v293
    %v2055 = vpop.f32.mrf.mxu0
    %v2056 = vadd.f32 0.0, %v2055
    %v2057 = vpop.f32.mrf.mxu0
    %2058 = vmatprep.mubr.f32.mxu0 %v296
    %2059 = vmatmul.mubr.f32.gmra.mxu0 %v295
    %v2060 = vpop.f32.mrf.mxu0
    %v2061 = vadd.f32 0.0, %v2060
    %v2062 = vpop.f32.mrf.mxu0
    %2063 = vmatprep.mubr.f32.mxu0 %v298
    %2064 = vmatmul.mubr.f32.gmra.mxu0 %v297
    %v2065 = vpop.f32.mrf.mxu0
    %v2066 = vadd.f32 0.0, %v2065
    %v2067 = vpop.f32.mrf.mxu0
    %2068 = vmatprep.mubr.f32.mxu0 %v300
    %2069 = vmatmul.mubr.f32.gmra.mxu0 %v299
    %v2070 = vpop.f32.mrf.mxu0
    %v2071 = vadd.f32 0.0, %v2070
    %v2072 = vpop.f32.mrf.mxu0
    %2073 = vmatprep.mubr.f32.mxu0 %v302
    %2074 = vmatmul.mubr.f32.gmra.mxu0 %v301
    %v2075 = vpop.f32.mrf.mxu0
    %v2076 = vadd.f32 0.0, %v2075
    %v2077 = vpop.f32.mrf.mxu0
    %2078 = vmatprep.mubr.f32.mxu0 %v304
    %2079 = vmatmul.mubr.f32.gmra.mxu0 %v303
    %v2080 = vpop.f32.mrf.mxu0
    %v2081 = vadd.f32 0.0, %v2080
    %v2082 = vpop.f32.mrf.mxu0
    %2083 = vmatprep.mubr.f32.mxu0 %v306
    %2084 = vmatmul.mubr.f32.gmra.mxu0 %v305
    %v2085 = vpop.f32.mrf.mxu0
    %v2086 = vadd.f32 0.0, %v2085
    %v2087 = vpop.f32.mrf.mxu0
    %2088 = vmatprep.mubr.f32.mxu0 %v308
    %2089 = vmatmul.mubr.f32.gmra.mxu0 %v307
    %v2090 = vpop.f32.mrf.mxu0
    %v2091 = vadd.f32 0.0, %v2090
    %v2092 = vpop.f32.mrf.mxu0
    %2093 = vmatprep.mubr.f32.mxu0 %v310
    %2094 = vmatmul.mubr.f32.gmra.mxu0 %v309
    %v2095 = vpop.f32.mrf.mxu0
    %v2096 = vadd.f32 0.0, %v2095
    %v2097 = vpop.f32.mrf.mxu0
    %2098 = vmatprep.mubr.f32.mxu0 %v312
    %2099 = vmatmul.mubr.f32.gmra.mxu0 %v311
    %v2100 = vpop.f32.mrf.mxu0
    %v2101 = vadd.f32 0.0, %v2100
    %v2102 = vpop.f32.mrf.mxu0
    %2103 = vmatprep.mubr.f32.mxu0 %v314
    %2104 = vmatmul.mubr.f32.gmra.mxu0 %v313
    %v2105 = vpop.f32.mrf.mxu0
    %v2106 = vadd.f32 0.0, %v2105
    %v2107 = vpop.f32.mrf.mxu0
    %2108 = vmatprep.mubr.f32.mxu0 %v316
    %2109 = vmatmul.mubr.f32.gmra.mxu0 %v315
    %v2110 = vpop.f32.mrf.mxu0
    %v2111 = vadd.f32 0.0, %v2110
    %v2112 = vpop.f32.mrf.mxu0
    %2113 = vmatprep.mubr.f32.mxu0 %v318
    %2114 = vmatmul.mubr.f32.gmra.mxu0 %v317
    %v2115 = vpop.f32.mrf.mxu0
    %v2116 = vadd.f32 0.0, %v2115
    %v2117 = vpop.f32.mrf.mxu0
    %2118 = vmatprep.mubr.f32.mxu0 %v320
    %2119 = vmatmul.mubr.f32.gmra.mxu0 %v319
    %v2120 = vpop.f32.mrf.mxu0
    %v2121 = vadd.f32 0.0, %v2120
    %v2122 = vpop.f32.mrf.mxu0
    %2123 = vmatprep.mubr.f32.mxu0 %v322
    %2124 = vmatmul.mubr.f32.gmra.mxu0 %v321
    %v2125 = vpop.f32.mrf.mxu0
    %v2126 = vadd.f32 0.0, %v2125
    %v2127 = vpop.f32.mrf.mxu0
    %2128 = vmatprep.mubr.f32.mxu0 %v324
    %2129 = vmatmul.mubr.f32.gmra.mxu0 %v323
    %v2130 = vpop.f32.mrf.mxu0
    %v2131 = vadd.f32 0.0, %v2130
    %v2132 = vpop.f32.mrf.mxu0
    %2133 = vmatprep.mubr.f32.mxu0 %v326
    %2134 = vmatmul.mubr.f32.gmra.mxu0 %v325
    %v2135 = vpop.f32.mrf.mxu0
    %v2136 = vadd.f32 0.0, %v2135
    %v2137 = vpop.f32.mrf.mxu0
    %2138 = vmatprep.mubr.f32.mxu0 %v328
    %2139 = vmatmul.mubr.f32.gmra.mxu0 %v327
    %v2140 = vpop.f32.mrf.mxu0
    %v2141 = vadd.f32 0.0, %v2140
    %v2142 = vpop.f32.mrf.mxu0
    %2143 = vmatprep.mubr.f32.mxu0 %v330
    %2144 = vmatmul.mubr.f32.gmra.mxu0 %v329
    %v2145 = vpop.f32.mrf.mxu0
    %v2146 = vadd.f32 0.0, %v2145
    %v2147 = vpop.f32.mrf.mxu0
    %2148 = vmatprep.mubr.f32.mxu0 %v332
    %2149 = vmatmul.mubr.f32.gmra.mxu0 %v331
    %v2150 = vpop.f32.mrf.mxu0
    %v2151 = vadd.f32 0.0, %v2150
    %v2152 = vpop.f32.mrf.mxu0
    %2153 = vmatprep.mubr.f32.mxu0 %v334
    %2154 = vmatmul.mubr.f32.gmra.mxu0 %v333
    %v2155 = vpop.f32.mrf.mxu0
    %v2156 = vadd.f32 0.0, %v2155
    %v2157 = vpop.f32.mrf.mxu0
    %2158 = vmatprep.mubr.f32.mxu0 %v336
    %2159 = vmatmul.mubr.f32.gmra.mxu0 %v335
    %v2160 = vpop.f32.mrf.mxu0
    %v2161 = vadd.f32 0.0, %v2160
    %v2162 = vpop.f32.mrf.mxu0
    %2163 = vdwg.mxu0
    %v2164 = vld [vmem:[#allocation13] sm:$0xff]
    %v2165 = vld [vmem:[#allocation13 + $0x8] sm:$0xff]
    %v2166 = vld [vmem:[#allocation13 + $0x10] sm:$0xff]
    %v2167 = vld [vmem:[#allocation13 + $0x18] sm:$0xff]
    %v2168 = vld [vmem:[#allocation13 + $0x20] sm:$0xff]
    %v2169 = vld [vmem:[#allocation13 + $0x28] sm:$0xff]
    %v2170 = vld [vmem:[#allocation13 + $0x30] sm:$0xff]
    %v2171 = vld [vmem:[#allocation13 + $0x38] sm:$0xff]
    %v2172 = vld [vmem:[#allocation13 + $0x40] sm:$0xff]
    %v2173 = vld [vmem:[#allocation13 + $0x48] sm:$0xff]
    %v2174 = vld [vmem:[#allocation13 + $0x50] sm:$0xff]
    %v2175 = vld [vmem:[#allocation13 + $0x58] sm:$0xff]
    %v2176 = vld [vmem:[#allocation13 + $0x60] sm:$0xff]
    %v2177 = vld [vmem:[#allocation13 + $0x68] sm:$0xff]
    %v2178 = vld [vmem:[#allocation13 + $0x70] sm:$0xff]
    %v2179 = vld [vmem:[#allocation13 + $0x78] sm:$0xff]
    %v2180 = vld [vmem:[%s11] sm:$0x1]
    %v2182 = vlaneseq
    %v2183 = vshrl.u32 %v2182, 7
    %v2184 = vsub.s32 0, %v2183
    %v2185 = vrot.slane %v2180, %v2184
    %2187 = vmatprep.subr.mxu0 0.0
    %2188 = vmatpush1.msra.mxu0 %v2179
    %2189 = vmatprep.subr.mxu0 0.0
    %2190 = vmatpush1.msra.mxu0 %v2178
    %2191 = vmatprep.subr.mxu0 0.0
    %2192 = vmatpush1.msra.mxu0 %v2177
    %2193 = vmatprep.subr.mxu0 0.0
    %2194 = vmatpush1.msra.mxu0 %v2176
    %2195 = vmatprep.subr.mxu0 0.0
    %2196 = vmatpush1.msra.mxu0 %v2175
    %2197 = vmatprep.subr.mxu0 0.0
    %2198 = vmatpush1.msra.mxu0 %v2174
    %2199 = vmatprep.subr.mxu0 0.0
    %2200 = vmatpush1.msra.mxu0 %v2173
    %2201 = vmatprep.subr.mxu0 0.0
    %2202 = vmatpush1.msra.mxu0 %v2172
    %2203 = vmatprep.subr.mxu0 0.0
    %2204 = vmatpush1.msra.mxu0 %v2171
    %2205 = vmatprep.subr.mxu0 0.0
    %2206 = vmatpush1.msra.mxu0 %v2170
    %2207 = vmatprep.subr.mxu0 0.0
    %2208 = vmatpush1.msra.mxu0 %v2169
    %2209 = vmatprep.subr.mxu0 0.0
    %2210 = vmatpush1.msra.mxu0 %v2168
    %2211 = vmatprep.subr.mxu0 0.0
    %2212 = vmatpush1.msra.mxu0 %v2167
    %2213 = vmatprep.subr.mxu0 0.0
    %2214 = vmatpush1.msra.mxu0 %v2166
    %2215 = vmatprep.subr.mxu0 0.0
    %2216 = vmatpush1.msra.mxu0 %v2165
    %2217 = vmatprep.subr.mxu0 0.0
    %2218 = vmatpush1.msra.mxu0 %v2164
    %2219 = vmatprep.subr.mxu0 0.0
    %2220 = vmatpush2.msra.mxu0 0.0
    %2221 = vmatprep.subr.mxu0 0.0
    %2222 = vmatpush2.msra.mxu0 0.0
    %2223 = vmatprep.subr.mxu0 0.0
    %2224 = vmatpush2.msra.mxu0 0.0
    %2225 = vmatprep.subr.mxu0 0.0
    %2226 = vmatpush2.msra.mxu0 0.0
    %2227 = vmatprep.subr.mxu0 0.0
    %2228 = vmatpush2.msra.mxu0 0.0
    %2229 = vmatprep.subr.mxu0 0.0
    %2230 = vmatpush2.msra.mxu0 0.0
    %2231 = vmatprep.subr.mxu0 0.0
    %2232 = vmatpush2.msra.mxu0 0.0
    %2233 = vmatprep.subr.mxu0 0.0
    %2234 = vmatpush2.msra.mxu0 0.0
    %2235 = vmatprep.subr.mxu0 0.0
    %2236 = vmatpush2.msra.mxu0 0.0
    %2237 = vmatprep.subr.mxu0 0.0
    %2238 = vmatpush2.msra.mxu0 0.0
    %2239 = vmatprep.subr.mxu0 0.0
    %2240 = vmatpush2.msra.mxu0 0.0
    %2241 = vmatprep.subr.mxu0 0.0
    %2242 = vmatpush2.msra.mxu0 0.0
    %2243 = vmatprep.subr.mxu0 0.0
    %2244 = vmatpush2.msra.mxu0 0.0
    %2245 = vmatprep.subr.mxu0 0.0
    %2246 = vmatpush2.msra.mxu0 0.0
    %2247 = vmatprep.subr.mxu0 0.0
    %2248 = vmatpush2.msra.mxu0 0.0
    %2249 = vmatprep.subr.mxu0 0.0
    %2250 = vmatpush2.msra.mxu0 0.0
    %2251 = vmatprep.mubr.f32.mxu0 0.0
    %2252 = vmatmul.mubr.f32.gmra.mxu0 %v2006
    %v2253 = vpop.f32.mrf.mxu0
    %v2254 = vadd.f32 %v2185, %v2253
    %v2255 = vpop.f32.mrf.mxu0
    %2256 = vmatprep.mubr.f32.mxu0 0.0
    %2257 = vmatmul.mubr.f32.gmra.mxu0 %v2011
    %v2258 = vpop.f32.mrf.mxu0
    %v2259 = vadd.f32 %v2185, %v2258
    %v2260 = vpop.f32.mrf.mxu0
    %2261 = vmatprep.mubr.f32.mxu0 0.0
    %2262 = vmatmul.mubr.f32.gmra.mxu0 %v2016
    %v2263 = vpop.f32.mrf.mxu0
    %v2264 = vadd.f32 %v2185, %v2263
    %v2265 = vpop.f32.mrf.mxu0
    %2266 = vmatprep.mubr.f32.mxu0 0.0
    %2267 = vmatmul.mubr.f32.gmra.mxu0 %v2021
    %v2268 = vpop.f32.mrf.mxu0
    %v2269 = vadd.f32 %v2185, %v2268
    %v2270 = vpop.f32.mrf.mxu0
    %2271 = vmatprep.mubr.f32.mxu0 0.0
    %2272 = vmatmul.mubr.f32.gmra.mxu0 %v2026
    %v2273 = vpop.f32.mrf.mxu0
    %v2274 = vadd.f32 %v2185, %v2273
    %v2275 = vpop.f32.mrf.mxu0
    %2276 = vmatprep.mubr.f32.mxu0 0.0
    %2277 = vmatmul.mubr.f32.gmra.mxu0 %v2031
    %v2278 = vpop.f32.mrf.mxu0
    %v2279 = vadd.f32 %v2185, %v2278
    %v2280 = vpop.f32.mrf.mxu0
    %2281 = vmatprep.mubr.f32.mxu0 0.0
    %2282 = vmatmul.mubr.f32.gmra.mxu0 %v2036
    %v2283 = vpop.f32.mrf.mxu0
    %v2284 = vadd.f32 %v2185, %v2283
    %v2285 = vpop.f32.mrf.mxu0
    %2286 = vmatprep.mubr.f32.mxu0 0.0
    %2287 = vmatmul.mubr.f32.gmra.mxu0 %v2041
    %v2288 = vpop.f32.mrf.mxu0
    %v2289 = vadd.f32 %v2185, %v2288
    %v2290 = vpop.f32.mrf.mxu0
    %2291 = vmatprep.mubr.f32.mxu0 0.0
    %2292 = vmatmul.mubr.f32.gmra.mxu0 %v2046
    %v2293 = vpop.f32.mrf.mxu0
    %v2294 = vadd.f32 %v2185, %v2293
    %v2295 = vpop.f32.mrf.mxu0
    %2296 = vmatprep.mubr.f32.mxu0 0.0
    %2297 = vmatmul.mubr.f32.gmra.mxu0 %v2051
    %v2298 = vpop.f32.mrf.mxu0
    %v2299 = vadd.f32 %v2185, %v2298
    %v2300 = vpop.f32.mrf.mxu0
    %2301 = vmatprep.mubr.f32.mxu0 0.0
    %2302 = vmatmul.mubr.f32.gmra.mxu0 %v2056
    %v2303 = vpop.f32.mrf.mxu0
    %v2304 = vadd.f32 %v2185, %v2303
    %v2305 = vpop.f32.mrf.mxu0
    %2306 = vmatprep.mubr.f32.mxu0 0.0
    %2307 = vmatmul.mubr.f32.gmra.mxu0 %v2061
    %v2308 = vpop.f32.mrf.mxu0
    %v2309 = vadd.f32 %v2185, %v2308
    %v2310 = vpop.f32.mrf.mxu0
    %2311 = vmatprep.mubr.f32.mxu0 0.0
    %2312 = vmatmul.mubr.f32.gmra.mxu0 %v2066
    %v2313 = vpop.f32.mrf.mxu0
    %v2314 = vadd.f32 %v2185, %v2313
    %v2315 = vpop.f32.mrf.mxu0
    %2316 = vmatprep.mubr.f32.mxu0 0.0
    %2317 = vmatmul.mubr.f32.gmra.mxu0 %v2071
    %v2318 = vpop.f32.mrf.mxu0
    %v2319 = vadd.f32 %v2185, %v2318
    %v2320 = vpop.f32.mrf.mxu0
    %2321 = vmatprep.mubr.f32.mxu0 0.0
    %2322 = vmatmul.mubr.f32.gmra.mxu0 %v2076
    %v2323 = vpop.f32.mrf.mxu0
    %v2324 = vadd.f32 %v2185, %v2323
    %v2325 = vpop.f32.mrf.mxu0
    %2326 = vmatprep.mubr.f32.mxu0 0.0
    %2327 = vmatmul.mubr.f32.gmra.mxu0 %v2081
    %v2328 = vpop.f32.mrf.mxu0
    %v2329 = vadd.f32 %v2185, %v2328
    %v2330 = vpop.f32.mrf.mxu0
    %2331 = vmatprep.mubr.f32.mxu0 0.0
    %2332 = vmatmul.mubr.f32.gmra.mxu0 %v2086
    %v2333 = vpop.f32.mrf.mxu0
    %v2334 = vadd.f32 %v2185, %v2333
    %v2335 = vpop.f32.mrf.mxu0
    %2336 = vmatprep.mubr.f32.mxu0 0.0
    %2337 = vmatmul.mubr.f32.gmra.mxu0 %v2091
    %v2338 = vpop.f32.mrf.mxu0
    %v2339 = vadd.f32 %v2185, %v2338
    %v2340 = vpop.f32.mrf.mxu0
    %2341 = vmatprep.mubr.f32.mxu0 0.0
    %2342 = vmatmul.mubr.f32.gmra.mxu0 %v2096
    %v2343 = vpop.f32.mrf.mxu0
    %v2344 = vadd.f32 %v2185, %v2343
    %v2345 = vpop.f32.mrf.mxu0
    %2346 = vmatprep.mubr.f32.mxu0 0.0
    %2347 = vmatmul.mubr.f32.gmra.mxu0 %v2101
    %v2348 = vpop.f32.mrf.mxu0
    %v2349 = vadd.f32 %v2185, %v2348
    %v2350 = vpop.f32.mrf.mxu0
    %2351 = vmatprep.mubr.f32.mxu0 0.0
    %2352 = vmatmul.mubr.f32.gmra.mxu0 %v2106
    %v2353 = vpop.f32.mrf.mxu0
    %v2354 = vadd.f32 %v2185, %v2353
    %v2355 = vpop.f32.mrf.mxu0
    %2356 = vmatprep.mubr.f32.mxu0 0.0
    %2357 = vmatmul.mubr.f32.gmra.mxu0 %v2111
    %v2358 = vpop.f32.mrf.mxu0
    %v2359 = vadd.f32 %v2185, %v2358
    %v2360 = vpop.f32.mrf.mxu0
    %2361 = vmatprep.mubr.f32.mxu0 0.0
    %2362 = vmatmul.mubr.f32.gmra.mxu0 %v2116
    %v2363 = vpop.f32.mrf.mxu0
    %v2364 = vadd.f32 %v2185, %v2363
    %v2365 = vpop.f32.mrf.mxu0
    %2366 = vmatprep.mubr.f32.mxu0 0.0
    %2367 = vmatmul.mubr.f32.gmra.mxu0 %v2121
    %v2368 = vpop.f32.mrf.mxu0
    %v2369 = vadd.f32 %v2185, %v2368
    %v2370 = vpop.f32.mrf.mxu0
    %2371 = vmatprep.mubr.f32.mxu0 0.0
    %2372 = vmatmul.mubr.f32.gmra.mxu0 %v2126
    %v2373 = vpop.f32.mrf.mxu0
    %v2374 = vadd.f32 %v2185, %v2373
    %v2375 = vpop.f32.mrf.mxu0
    %2376 = vmatprep.mubr.f32.mxu0 0.0
    %2377 = vmatmul.mubr.f32.gmra.mxu0 %v2131
    %v2378 = vpop.f32.mrf.mxu0
    %v2379 = vadd.f32 %v2185, %v2378
    %v2380 = vpop.f32.mrf.mxu0
    %2381 = vmatprep.mubr.f32.mxu0 0.0
    %2382 = vmatmul.mubr.f32.gmra.mxu0 %v2136
    %v2383 = vpop.f32.mrf.mxu0
    %v2384 = vadd.f32 %v2185, %v2383
    %v2385 = vpop.f32.mrf.mxu0
    %2386 = vmatprep.mubr.f32.mxu0 0.0
    %2387 = vmatmul.mubr.f32.gmra.mxu0 %v2141
    %v2388 = vpop.f32.mrf.mxu0
    %v2389 = vadd.f32 %v2185, %v2388
    %v2390 = vpop.f32.mrf.mxu0
    %2391 = vmatprep.mubr.f32.mxu0 0.0
    %2392 = vmatmul.mubr.f32.gmra.mxu0 %v2146
    %v2393 = vpop.f32.mrf.mxu0
    %v2394 = vadd.f32 %v2185, %v2393
    %v2395 = vpop.f32.mrf.mxu0
    %2396 = vmatprep.mubr.f32.mxu0 0.0
    %2397 = vmatmul.mubr.f32.gmra.mxu0 %v2151
    %v2398 = vpop.f32.mrf.mxu0
    %v2399 = vadd.f32 %v2185, %v2398
    %v2400 = vpop.f32.mrf.mxu0
    %2401 = vmatprep.mubr.f32.mxu0 0.0
    %2402 = vmatmul.mubr.f32.gmra.mxu0 %v2156
    %v2403 = vpop.f32.mrf.mxu0
    %v2404 = vadd.f32 %v2185, %v2403
    %v2405 = vpop.f32.mrf.mxu0
    %2406 = vmatprep.mubr.f32.mxu0 0.0
    %2407 = vmatmul.mubr.f32.gmra.mxu0 %v2161
    %v2408 = vpop.f32.mrf.mxu0
    %v2409 = vadd.f32 %v2185, %v2408
    %v2410 = vpop.f32.mrf.mxu0
    %2411 = vdwg.mxu0
    %v2412 = vmax.f32 %v2254, 0.0
    %v2413 = vmax.f32 %v2259, 0.0
    %v2414 = vmax.f32 %v2264, 0.0
    %v2415 = vmax.f32 %v2269, 0.0
    %v2416 = vmax.f32 %v2274, 0.0
    %v2417 = vmax.f32 %v2279, 0.0
    %v2418 = vmax.f32 %v2284, 0.0
    %v2419 = vmax.f32 %v2289, 0.0
    %v2420 = vmax.f32 %v2294, 0.0
    %v2421 = vmax.f32 %v2299, 0.0
    %v2422 = vmax.f32 %v2304, 0.0
    %v2423 = vmax.f32 %v2309, 0.0
    %v2424 = vmax.f32 %v2314, 0.0
    %v2425 = vmax.f32 %v2319, 0.0
    %v2426 = vmax.f32 %v2324, 0.0
    %v2427 = vmax.f32 %v2329, 0.0
    %v2428 = vmax.f32 %v2334, 0.0
    %v2429 = vmax.f32 %v2339, 0.0
    %v2430 = vmax.f32 %v2344, 0.0
    %v2431 = vmax.f32 %v2349, 0.0
    %v2432 = vmax.f32 %v2354, 0.0
    %v2433 = vmax.f32 %v2359, 0.0
    %v2434 = vmax.f32 %v2364, 0.0
    %v2435 = vmax.f32 %v2369, 0.0
    %v2436 = vmax.f32 %v2374, 0.0
    %v2437 = vmax.f32 %v2379, 0.0
    %v2438 = vmax.f32 %v2384, 0.0
    %v2439 = vmax.f32 %v2389, 0.0
    %v2440 = vmax.f32 %v2394, 0.0
    %v2441 = vmax.f32 %v2399, 0.0
    %v2442 = vmax.f32 %v2404, 0.0
    %v2443 = vmax.f32 %v2409, 0.0
    %v2444 = vld [vmem:[#allocation14] sm:$0xff]
    %v2445 = vld [vmem:[#allocation14 + $0x8] sm:$0xff]
    %v2446 = vld [vmem:[#allocation14 + $0x10] sm:$0xff]
    %v2447 = vld [vmem:[#allocation14 + $0x18] sm:$0xff]
    %v2448 = vld [vmem:[#allocation14 + $0x20] sm:$0xff]
    %v2449 = vld [vmem:[#allocation14 + $0x28] sm:$0xff]
    %v2450 = vld [vmem:[#allocation14 + $0x30] sm:$0xff]
    %v2451 = vld [vmem:[#allocation14 + $0x38] sm:$0xff]
    %v2452 = vld [vmem:[#allocation14 + $0x40] sm:$0xff]
    %v2453 = vld [vmem:[#allocation14 + $0x48] sm:$0xff]
    %v2454 = vld [vmem:[#allocation14 + $0x50] sm:$0xff]
    %v2455 = vld [vmem:[#allocation14 + $0x58] sm:$0xff]
    %v2456 = vld [vmem:[#allocation14 + $0x60] sm:$0xff]
    %v2457 = vld [vmem:[#allocation14 + $0x68] sm:$0xff]
    %v2458 = vld [vmem:[#allocation14 + $0x70] sm:$0xff]
    %v2459 = vld [vmem:[#allocation14 + $0x78] sm:$0xff]
    %v2460 = vld [vmem:[%s13] sm:$0x1]
    %v2462 = vlaneseq
    %v2463 = vshrl.u32 %v2462, 7
    %v2464 = vsub.s32 0, %v2463
    %v2465 = vrot.slane %v2460, %v2464
    %2467 = vmatprep.subr.mxu0 0.0
    %2468 = vmatpush1.msra.mxu0 %v2459
    %2469 = vmatprep.subr.mxu0 0.0
    %2470 = vmatpush1.msra.mxu0 %v2458
    %2471 = vmatprep.subr.mxu0 0.0
    %2472 = vmatpush1.msra.mxu0 %v2457
    %2473 = vmatprep.subr.mxu0 0.0
    %2474 = vmatpush1.msra.mxu0 %v2456
    %2475 = vmatprep.subr.mxu0 0.0
    %2476 = vmatpush1.msra.mxu0 %v2455
    %2477 = vmatprep.subr.mxu0 0.0
    %2478 = vmatpush1.msra.mxu0 %v2454
    %2479 = vmatprep.subr.mxu0 0.0
    %2480 = vmatpush1.msra.mxu0 %v2453
    %2481 = vmatprep.subr.mxu0 0.0
    %2482 = vmatpush1.msra.mxu0 %v2452
    %2483 = vmatprep.subr.mxu0 0.0
    %2484 = vmatpush1.msra.mxu0 %v2451
    %2485 = vmatprep.subr.mxu0 0.0
    %2486 = vmatpush1.msra.mxu0 %v2450
    %2487 = vmatprep.subr.mxu0 0.0
    %2488 = vmatpush1.msra.mxu0 %v2449
    %2489 = vmatprep.subr.mxu0 0.0
    %2490 = vmatpush1.msra.mxu0 %v2448
    %2491 = vmatprep.subr.mxu0 0.0
    %2492 = vmatpush1.msra.mxu0 %v2447
    %2493 = vmatprep.subr.mxu0 0.0
    %2494 = vmatpush1.msra.mxu0 %v2446
    %2495 = vmatprep.subr.mxu0 0.0
    %2496 = vmatpush1.msra.mxu0 %v2445
    %2497 = vmatprep.subr.mxu0 0.0
    %2498 = vmatpush1.msra.mxu0 %v2444
    %2499 = vmatprep.subr.mxu0 0.0
    %2500 = vmatpush2.msra.mxu0 0.0
    %2501 = vmatprep.subr.mxu0 0.0
    %2502 = vmatpush2.msra.mxu0 0.0
    %2503 = vmatprep.subr.mxu0 0.0
    %2504 = vmatpush2.msra.mxu0 0.0
    %2505 = vmatprep.subr.mxu0 0.0
    %2506 = vmatpush2.msra.mxu0 0.0
    %2507 = vmatprep.subr.mxu0 0.0
    %2508 = vmatpush2.msra.mxu0 0.0
    %2509 = vmatprep.subr.mxu0 0.0
    %2510 = vmatpush2.msra.mxu0 0.0
    %2511 = vmatprep.subr.mxu0 0.0
    %2512 = vmatpush2.msra.mxu0 0.0
    %2513 = vmatprep.subr.mxu0 0.0
    %2514 = vmatpush2.msra.mxu0 0.0
    %2515 = vmatprep.subr.mxu0 0.0
    %2516 = vmatpush2.msra.mxu0 0.0
    %2517 = vmatprep.subr.mxu0 0.0
    %2518 = vmatpush2.msra.mxu0 0.0
    %2519 = vmatprep.subr.mxu0 0.0
    %2520 = vmatpush2.msra.mxu0 0.0
    %2521 = vmatprep.subr.mxu0 0.0
    %2522 = vmatpush2.msra.mxu0 0.0
    %2523 = vmatprep.subr.mxu0 0.0
    %2524 = vmatpush2.msra.mxu0 0.0
    %2525 = vmatprep.subr.mxu0 0.0
    %2526 = vmatpush2.msra.mxu0 0.0
    %2527 = vmatprep.subr.mxu0 0.0
    %2528 = vmatpush2.msra.mxu0 0.0
    %2529 = vmatprep.subr.mxu0 0.0
    %2530 = vmatpush2.msra.mxu0 0.0
    %2531 = vmatprep.mubr.f32.mxu0 0.0
    %2532 = vmatmul.mubr.f32.gmra.mxu0 %v2412
    %v2533 = vpop.f32.mrf.mxu0
    %v2534 = vadd.f32 %v2465, %v2533
    %v2535 = vpop.f32.mrf.mxu0
    %2536 = vmatprep.mubr.f32.mxu0 0.0
    %2537 = vmatmul.mubr.f32.gmra.mxu0 %v2413
    %v2538 = vpop.f32.mrf.mxu0
    %v2539 = vadd.f32 %v2465, %v2538
    %v2540 = vpop.f32.mrf.mxu0
    %2541 = vmatprep.mubr.f32.mxu0 0.0
    %2542 = vmatmul.mubr.f32.gmra.mxu0 %v2414
    %v2543 = vpop.f32.mrf.mxu0
    %v2544 = vadd.f32 %v2465, %v2543
    %v2545 = vpop.f32.mrf.mxu0
    %2546 = vmatprep.mubr.f32.mxu0 0.0
    %2547 = vmatmul.mubr.f32.gmra.mxu0 %v2415
    %v2548 = vpop.f32.mrf.mxu0
    %v2549 = vadd.f32 %v2465, %v2548
    %v2550 = vpop.f32.mrf.mxu0
    %2551 = vmatprep.mubr.f32.mxu0 0.0
    %2552 = vmatmul.mubr.f32.gmra.mxu0 %v2416
    %v2553 = vpop.f32.mrf.mxu0
    %v2554 = vadd.f32 %v2465, %v2553
    %v2555 = vpop.f32.mrf.mxu0
    %2556 = vmatprep.mubr.f32.mxu0 0.0
    %2557 = vmatmul.mubr.f32.gmra.mxu0 %v2417
    %v2558 = vpop.f32.mrf.mxu0
    %v2559 = vadd.f32 %v2465, %v2558
    %v2560 = vpop.f32.mrf.mxu0
    %2561 = vmatprep.mubr.f32.mxu0 0.0
    %2562 = vmatmul.mubr.f32.gmra.mxu0 %v2418
    %v2563 = vpop.f32.mrf.mxu0
    %v2564 = vadd.f32 %v2465, %v2563
    %v2565 = vpop.f32.mrf.mxu0
    %2566 = vmatprep.mubr.f32.mxu0 0.0
    %2567 = vmatmul.mubr.f32.gmra.mxu0 %v2419
    %v2568 = vpop.f32.mrf.mxu0
    %v2569 = vadd.f32 %v2465, %v2568
    %v2570 = vpop.f32.mrf.mxu0
    %2571 = vmatprep.mubr.f32.mxu0 0.0
    %2572 = vmatmul.mubr.f32.gmra.mxu0 %v2420
    %v2573 = vpop.f32.mrf.mxu0
    %v2574 = vadd.f32 %v2465, %v2573
    %v2575 = vpop.f32.mrf.mxu0
    %2576 = vmatprep.mubr.f32.mxu0 0.0
    %2577 = vmatmul.mubr.f32.gmra.mxu0 %v2421
    %v2578 = vpop.f32.mrf.mxu0
    %v2579 = vadd.f32 %v2465, %v2578
    %v2580 = vpop.f32.mrf.mxu0
    %2581 = vmatprep.mubr.f32.mxu0 0.0
    %2582 = vmatmul.mubr.f32.gmra.mxu0 %v2422
    %v2583 = vpop.f32.mrf.mxu0
    %v2584 = vadd.f32 %v2465, %v2583
    %v2585 = vpop.f32.mrf.mxu0
    %2586 = vmatprep.mubr.f32.mxu0 0.0
    %2587 = vmatmul.mubr.f32.gmra.mxu0 %v2423
    %v2588 = vpop.f32.mrf.mxu0
    %v2589 = vadd.f32 %v2465, %v2588
    %v2590 = vpop.f32.mrf.mxu0
    %2591 = vmatprep.mubr.f32.mxu0 0.0
    %2592 = vmatmul.mubr.f32.gmra.mxu0 %v2424
    %v2593 = vpop.f32.mrf.mxu0
    %v2594 = vadd.f32 %v2465, %v2593
    %v2595 = vpop.f32.mrf.mxu0
    %2596 = vmatprep.mubr.f32.mxu0 0.0
    %2597 = vmatmul.mubr.f32.gmra.mxu0 %v2425
    %v2598 = vpop.f32.mrf.mxu0
    %v2599 = vadd.f32 %v2465, %v2598
    %v2600 = vpop.f32.mrf.mxu0
    %2601 = vmatprep.mubr.f32.mxu0 0.0
    %2602 = vmatmul.mubr.f32.gmra.mxu0 %v2426
    %v2603 = vpop.f32.mrf.mxu0
    %v2604 = vadd.f32 %v2465, %v2603
    %v2605 = vpop.f32.mrf.mxu0
    %2606 = vmatprep.mubr.f32.mxu0 0.0
    %2607 = vmatmul.mubr.f32.gmra.mxu0 %v2427
    %v2608 = vpop.f32.mrf.mxu0
    %v2609 = vadd.f32 %v2465, %v2608
    %v2610 = vpop.f32.mrf.mxu0
    %2611 = vmatprep.mubr.f32.mxu0 0.0
    %2612 = vmatmul.mubr.f32.gmra.mxu0 %v2428
    %v2613 = vpop.f32.mrf.mxu0
    %v2614 = vadd.f32 %v2465, %v2613
    %v2615 = vpop.f32.mrf.mxu0
    %2616 = vmatprep.mubr.f32.mxu0 0.0
    %2617 = vmatmul.mubr.f32.gmra.mxu0 %v2429
    %v2618 = vpop.f32.mrf.mxu0
    %v2619 = vadd.f32 %v2465, %v2618
    %v2620 = vpop.f32.mrf.mxu0
    %2621 = vmatprep.mubr.f32.mxu0 0.0
    %2622 = vmatmul.mubr.f32.gmra.mxu0 %v2430
    %v2623 = vpop.f32.mrf.mxu0
    %v2624 = vadd.f32 %v2465, %v2623
    %v2625 = vpop.f32.mrf.mxu0
    %2626 = vmatprep.mubr.f32.mxu0 0.0
    %2627 = vmatmul.mubr.f32.gmra.mxu0 %v2431
    %v2628 = vpop.f32.mrf.mxu0
    %v2629 = vadd.f32 %v2465, %v2628
    %v2630 = vpop.f32.mrf.mxu0
    %2631 = vmatprep.mubr.f32.mxu0 0.0
    %2632 = vmatmul.mubr.f32.gmra.mxu0 %v2432
    %v2633 = vpop.f32.mrf.mxu0
    %v2634 = vadd.f32 %v2465, %v2633
    %v2635 = vpop.f32.mrf.mxu0
    %2636 = vmatprep.mubr.f32.mxu0 0.0
    %2637 = vmatmul.mubr.f32.gmra.mxu0 %v2433
    %v2638 = vpop.f32.mrf.mxu0
    %v2639 = vadd.f32 %v2465, %v2638
    %v2640 = vpop.f32.mrf.mxu0
    %2641 = vmatprep.mubr.f32.mxu0 0.0
    %2642 = vmatmul.mubr.f32.gmra.mxu0 %v2434
    %v2643 = vpop.f32.mrf.mxu0
    %v2644 = vadd.f32 %v2465, %v2643
    %v2645 = vpop.f32.mrf.mxu0
    %2646 = vmatprep.mubr.f32.mxu0 0.0
    %2647 = vmatmul.mubr.f32.gmra.mxu0 %v2435
    %v2648 = vpop.f32.mrf.mxu0
    %v2649 = vadd.f32 %v2465, %v2648
    %v2650 = vpop.f32.mrf.mxu0
    %2651 = vmatprep.mubr.f32.mxu0 0.0
    %2652 = vmatmul.mubr.f32.gmra.mxu0 %v2436
    %v2653 = vpop.f32.mrf.mxu0
    %v2654 = vadd.f32 %v2465, %v2653
    %v2655 = vpop.f32.mrf.mxu0
    %2656 = vmatprep.mubr.f32.mxu0 0.0
    %2657 = vmatmul.mubr.f32.gmra.mxu0 %v2437
    %v2658 = vpop.f32.mrf.mxu0
    %v2659 = vadd.f32 %v2465, %v2658
    %v2660 = vpop.f32.mrf.mxu0
    %2661 = vmatprep.mubr.f32.mxu0 0.0
    %2662 = vmatmul.mubr.f32.gmra.mxu0 %v2438
    %v2663 = vpop.f32.mrf.mxu0
    %v2664 = vadd.f32 %v2465, %v2663
    %v2665 = vpop.f32.mrf.mxu0
    %2666 = vmatprep.mubr.f32.mxu0 0.0
    %2667 = vmatmul.mubr.f32.gmra.mxu0 %v2439
    %v2668 = vpop.f32.mrf.mxu0
    %v2669 = vadd.f32 %v2465, %v2668
    %v2670 = vpop.f32.mrf.mxu0
    %2671 = vmatprep.mubr.f32.mxu0 0.0
    %2672 = vmatmul.mubr.f32.gmra.mxu0 %v2440
    %v2673 = vpop.f32.mrf.mxu0
    %v2674 = vadd.f32 %v2465, %v2673
    %v2675 = vpop.f32.mrf.mxu0
    %2676 = vmatprep.mubr.f32.mxu0 0.0
    %2677 = vmatmul.mubr.f32.gmra.mxu0 %v2441
    %v2678 = vpop.f32.mrf.mxu0
    %v2679 = vadd.f32 %v2465, %v2678
    %v2680 = vpop.f32.mrf.mxu0
    %2681 = vmatprep.mubr.f32.mxu0 0.0
    %2682 = vmatmul.mubr.f32.gmra.mxu0 %v2442
    %v2683 = vpop.f32.mrf.mxu0
    %v2684 = vadd.f32 %v2465, %v2683
    %v2685 = vpop.f32.mrf.mxu0
    %2686 = vmatprep.mubr.f32.mxu0 0.0
    %2687 = vmatmul.mubr.f32.gmra.mxu0 %v2443
    %v2688 = vpop.f32.mrf.mxu0
    %v2689 = vadd.f32 %v2465, %v2688
    %v2690 = vpop.f32.mrf.mxu0
    %2691 = vdwg.mxu0
    %v2692 = vld [vmem:[#allocation16] sm:$0xff]
    %v2693 = vld [vmem:[#allocation16 + $0x8] sm:$0xff]
    %v2694 = vld [vmem:[#allocation16 + $0x10] sm:$0xff]
    %v2695 = vld [vmem:[#allocation16 + $0x18] sm:$0xff]
    %2696 = vmatprep.subr.mxu0 0.0
    %2697 = vmatpush1.msra.mxu0 %v2609
    %2698 = vmatprep.subr.mxu0 0.0
    %2699 = vmatpush1.msra.mxu0 %v2604
    %2700 = vmatprep.subr.mxu0 0.0
    %2701 = vmatpush1.msra.mxu0 %v2599
    %2702 = vmatprep.subr.mxu0 0.0
    %2703 = vmatpush1.msra.mxu0 %v2594
    %2704 = vmatprep.subr.mxu0 0.0
    %2705 = vmatpush1.msra.mxu0 %v2589
    %2706 = vmatprep.subr.mxu0 0.0
    %2707 = vmatpush1.msra.mxu0 %v2584
    %2708 = vmatprep.subr.mxu0 0.0
    %2709 = vmatpush1.msra.mxu0 %v2579
    %2710 = vmatprep.subr.mxu0 0.0
    %2711 = vmatpush1.msra.mxu0 %v2574
    %2712 = vmatprep.subr.mxu0 0.0
    %2713 = vmatpush1.msra.mxu0 %v2569
    %2714 = vmatprep.subr.mxu0 0.0
    %2715 = vmatpush1.msra.mxu0 %v2564
    %2716 = vmatprep.subr.mxu0 0.0
    %2717 = vmatpush1.msra.mxu0 %v2559
    %2718 = vmatprep.subr.mxu0 0.0
    %2719 = vmatpush1.msra.mxu0 %v2554
    %2720 = vmatprep.subr.mxu0 0.0
    %2721 = vmatpush1.msra.mxu0 %v2549
    %2722 = vmatprep.subr.mxu0 0.0
    %2723 = vmatpush1.msra.mxu0 %v2544
    %2724 = vmatprep.subr.mxu0 0.0
    %2725 = vmatpush1.msra.mxu0 %v2539
    %2726 = vmatprep.subr.mxu0 0.0
    %2727 = vmatpush1.msra.mxu0 %v2534
    %2728 = vmatprep.subr.mxu0 0.0
    %2729 = vmatpush2.msra.mxu0 %v2689
    %2730 = vmatprep.subr.mxu0 0.0
    %2731 = vmatpush2.msra.mxu0 %v2684
    %2732 = vmatprep.subr.mxu0 0.0
    %2733 = vmatpush2.msra.mxu0 %v2679
    %2734 = vmatprep.subr.mxu0 0.0
    %2735 = vmatpush2.msra.mxu0 %v2674
    %2736 = vmatprep.subr.mxu0 0.0
    %2737 = vmatpush2.msra.mxu0 %v2669
    %2738 = vmatprep.subr.mxu0 0.0
    %2739 = vmatpush2.msra.mxu0 %v2664
    %2740 = vmatprep.subr.mxu0 0.0
    %2741 = vmatpush2.msra.mxu0 %v2659
    %2742 = vmatprep.subr.mxu0 0.0
    %2743 = vmatpush2.msra.mxu0 %v2654
    %2744 = vmatprep.subr.mxu0 0.0
    %2745 = vmatpush2.msra.mxu0 %v2649
    %2746 = vmatprep.subr.mxu0 0.0
    %2747 = vmatpush2.msra.mxu0 %v2644
    %2748 = vmatprep.subr.mxu0 0.0
    %2749 = vmatpush2.msra.mxu0 %v2639
    %2750 = vmatprep.subr.mxu0 0.0
    %2751 = vmatpush2.msra.mxu0 %v2634
    %2752 = vmatprep.subr.mxu0 0.0
    %2753 = vmatpush2.msra.mxu0 %v2629
    %2754 = vmatprep.subr.mxu0 0.0
    %2755 = vmatpush2.msra.mxu0 %v2624
    %2756 = vmatprep.subr.mxu0 0.0
    %2757 = vmatpush2.msra.mxu0 %v2619
    %2758 = vmatprep.subr.mxu0 0.0
    %2759 = vmatpush2.msra.mxu0 %v2614
    %2760 = vmatprep.mubr.f32.mxu0 %v2693
    %2761 = vmatmul.mubr.f32.gmra.mxu0 %v2692
    %v2762 = vpop.f32.mrf.mxu0
    %v2763 = vadd.f32 0.0, %v2762
    %v2764 = vpop.f32.mrf.mxu0
    %2765 = vmatprep.mubr.f32.mxu0 %v2695
    %2766 = vmatmul.mubr.f32.gmra.mxu0 %v2694
    %v2767 = vpop.f32.mrf.mxu0
    %v2768 = vadd.f32 0.0, %v2767
    %v2769 = vpop.f32.mrf.mxu0
    %2770 = vdwg.mxu0
    %v2771 = vld [vmem:[#allocation17] sm:$0xff]
    %v2772 = vld [vmem:[#allocation17 + $0x8] sm:$0xff]
    %v2773 = vld [vmem:[#allocation17 + $0x10] sm:$0xff]
    %v2774 = vld [vmem:[#allocation17 + $0x18] sm:$0xff]
    %v2775 = vld [vmem:[#allocation17 + $0x20] sm:$0xff]
    %v2776 = vld [vmem:[#allocation17 + $0x28] sm:$0xff]
    %v2777 = vld [vmem:[#allocation17 + $0x30] sm:$0xff]
    %v2778 = vld [vmem:[#allocation17 + $0x38] sm:$0xff]
    %v2779 = vld [vmem:[#allocation17 + $0x40] sm:$0xff]
    %v2780 = vld [vmem:[#allocation17 + $0x48] sm:$0xff]
    %v2781 = vld [vmem:[#allocation17 + $0x50] sm:$0xff]
    %v2782 = vld [vmem:[#allocation17 + $0x58] sm:$0xff]
    %v2783 = vld [vmem:[#allocation17 + $0x60] sm:$0xff]
    %v2784 = vld [vmem:[#allocation17 + $0x68] sm:$0xff]
    %v2785 = vld [vmem:[#allocation17 + $0x70] sm:$0xff]
    %v2786 = vld [vmem:[#allocation17 + $0x78] sm:$0xff]
    %v2787 = vld [vmem:[%s16] sm:$0x1]
    %v2789 = vlaneseq
    %v2790 = vshrl.u32 %v2789, 7
    %v2791 = vsub.s32 0, %v2790
    %v2792 = vrot.slane %v2787, %v2791
    %2794 = vmatprep.subr.mxu0 0.0
    %2795 = vmatpush1.msra.mxu0 %v2786
    %2796 = vmatprep.subr.mxu0 0.0
    %2797 = vmatpush1.msra.mxu0 %v2785
    %2798 = vmatprep.subr.mxu0 0.0
    %2799 = vmatpush1.msra.mxu0 %v2784
    %2800 = vmatprep.subr.mxu0 0.0
    %2801 = vmatpush1.msra.mxu0 %v2783
    %2802 = vmatprep.subr.mxu0 0.0
    %2803 = vmatpush1.msra.mxu0 %v2782
    %2804 = vmatprep.subr.mxu0 0.0
    %2805 = vmatpush1.msra.mxu0 %v2781
    %2806 = vmatprep.subr.mxu0 0.0
    %2807 = vmatpush1.msra.mxu0 %v2780
    %2808 = vmatprep.subr.mxu0 0.0
    %2809 = vmatpush1.msra.mxu0 %v2779
    %2810 = vmatprep.subr.mxu0 0.0
    %2811 = vmatpush1.msra.mxu0 %v2778
    %2812 = vmatprep.subr.mxu0 0.0
    %2813 = vmatpush1.msra.mxu0 %v2777
    %2814 = vmatprep.subr.mxu0 0.0
    %2815 = vmatpush1.msra.mxu0 %v2776
    %2816 = vmatprep.subr.mxu0 0.0
    %2817 = vmatpush1.msra.mxu0 %v2775
    %2818 = vmatprep.subr.mxu0 0.0
    %2819 = vmatpush1.msra.mxu0 %v2774
    %2820 = vmatprep.subr.mxu0 0.0
    %2821 = vmatpush1.msra.mxu0 %v2773
    %2822 = vmatprep.subr.mxu0 0.0
    %2823 = vmatpush1.msra.mxu0 %v2772
    %2824 = vmatprep.subr.mxu0 0.0
    %2825 = vmatpush1.msra.mxu0 %v2771
    %2826 = vmatprep.subr.mxu0 0.0
    %2827 = vmatpush2.msra.mxu0 0.0
    %2828 = vmatprep.subr.mxu0 0.0
    %2829 = vmatpush2.msra.mxu0 0.0
    %2830 = vmatprep.subr.mxu0 0.0
    %2831 = vmatpush2.msra.mxu0 0.0
    %2832 = vmatprep.subr.mxu0 0.0
    %2833 = vmatpush2.msra.mxu0 0.0
    %2834 = vmatprep.subr.mxu0 0.0
    %2835 = vmatpush2.msra.mxu0 0.0
    %2836 = vmatprep.subr.mxu0 0.0
    %2837 = vmatpush2.msra.mxu0 0.0
    %2838 = vmatprep.subr.mxu0 0.0
    %2839 = vmatpush2.msra.mxu0 0.0
    %2840 = vmatprep.subr.mxu0 0.0
    %2841 = vmatpush2.msra.mxu0 0.0
    %2842 = vmatprep.subr.mxu0 0.0
    %2843 = vmatpush2.msra.mxu0 0.0
    %2844 = vmatprep.subr.mxu0 0.0
    %2845 = vmatpush2.msra.mxu0 0.0
    %2846 = vmatprep.subr.mxu0 0.0
    %2847 = vmatpush2.msra.mxu0 0.0
    %2848 = vmatprep.subr.mxu0 0.0
    %2849 = vmatpush2.msra.mxu0 0.0
    %2850 = vmatprep.subr.mxu0 0.0
    %2851 = vmatpush2.msra.mxu0 0.0
    %2852 = vmatprep.subr.mxu0 0.0
    %2853 = vmatpush2.msra.mxu0 0.0
    %2854 = vmatprep.subr.mxu0 0.0
    %2855 = vmatpush2.msra.mxu0 0.0
    %2856 = vmatprep.subr.mxu0 0.0
    %2857 = vmatpush2.msra.mxu0 0.0
    %2858 = vmatprep.mubr.f32.mxu0 0.0
    %2859 = vmatmul.mubr.f32.gmra.mxu0 %v2763
    %v2860 = vpop.f32.mrf.mxu0
    %v2861 = vadd.f32 %v2792, %v2860
    %v2862 = vpop.f32.mrf.mxu0
    %2863 = vmatprep.mubr.f32.mxu0 0.0
    %2864 = vmatmul.mubr.f32.gmra.mxu0 %v2768
    %v2865 = vpop.f32.mrf.mxu0
    %v2866 = vadd.f32 %v2792, %v2865
    %v2867 = vpop.f32.mrf.mxu0
    %2868 = vdwg.mxu0
    %2869 = vst [vmem:[#allocation19] sm:$0xff] %v2861
    %2870 = vst [vmem:[#allocation19 + $0x8] sm:$0xff] %v2866
    // Predicated region
    $region110: #{tpu_custom_call.1} parent=1 // pred_check
      _
    $region111: #{tpu_custom_call.1} parent=1 // pred_check_branch
      %2872 = sbr.rel (0) target = $region113
    $region112: #{tpu_custom_call.1} parent=1 // pred_region
      %s2874 = ssub.s32 256, 256
      %2875 = vsyncadd [#allocation4], %s2874
      %s2876 = sshll.u32 [#allocation19], 4
      %s2877 = int_to_ptr.vmem [resolvable:$true] %s2876
      %2882 = dma.vmem_to_hbm [thread:$0]  %s2877, 256, %s17, [#allocation4], 128, 128, 8
    $region113: #{tpu_custom_call.1} parent=1 // pred_fallthru
      _
    // Predicated region
    $region114: #{tpu_custom_call.1} parent=1 // pred_check
      _
    $region115: #{tpu_custom_call.1} parent=1 // pred_check_branch
      %2884 = sbr.rel (0) target = $region117
    $region116: #{tpu_custom_call.1} parent=1 // pred_region
      %2885 = dma.done [#allocation4], 256
    $region117: #{tpu_custom_call.1} parent=1 // pred_fallthru
      _
    %2886 = vsyncpa [#allocation3], 1
    %2887 = vsyncpa [#allocation6], 1
    %2888 = vsyncpa [#allocation9], 1
    %2889 = vsyncpa [#allocation12], 1
    %2890 = vsyncpa [#allocation15], 1
    %2891 = vsyncpa [#allocation18], 1
    %2892 = vsyncpa [#allocation4], 1

</llo_original>
